<compile_context>
chip_gen: v7x
topology: tpu7x:2x2x1
jax: 0.10.0
libtpu: 0.0.40
codegen_flags: <defaults>
</compile_context>

<pallas_src>
import functools
import math

import jax
import jax.numpy as jnp
from jax.experimental import pallas as pl
from jax.experimental.pallas import tpu as pltpu

F32 = jnp.float32
VMEM = pltpu.MemorySpace.VMEM
SMEM = pltpu.MemorySpace.SMEM
NEG_INF = -1e9


def _round_up(x, m):
    return -(-x // m) * m


def _ln(x, g, b, eps=1e-5):
    mu = jnp.mean(x, axis=-1, keepdims=True)
    xc = x - mu
    var = jnp.mean(xc * xc, axis=-1, keepdims=True)
    return xc * jax.lax.rsqrt(var + eps) * g + b


# ------------------- image stem: patch embed + CLS + pos + pre-LN -------------------

def _image_stem_kernel(patches_ref, pw_ref, pb_ref, cls_ref, pos_ref, g_ref, b_ref,
                       o_ref, *, batch, n_patches, seq_pad):
    emb = jnp.dot(patches_ref[...], pw_ref[...],
                  preferred_element_type=jnp.float32) + pb_ref[...]      # (B*np, D)
    pos = pos_ref[...]                                                    # (np+1, D)
    cls = cls_ref[...]                                                    # (1, D)
    g = g_ref[...]
    bb = b_ref[...]
    d = emb.shape[-1]
    s0 = n_patches + 1
    pieces = []
    for bi in range(batch):
        rows = jnp.concatenate(
            [cls, emb[bi * n_patches:(bi + 1) * n_patches, :]], axis=0) + pos
        pieces.append(_ln(rows, g, bb))
        if seq_pad > s0:
            # zero rows for sublane padding; they are key-masked downstream
            pieces.append(jnp.zeros((seq_pad - s0, d), jnp.float32))
    o_ref[...] = jnp.concatenate(pieces, axis=0)


def image_stem(patches, p, *, batch, n_patches, seq_pad, dim):
    vspec = pl.BlockSpec(memory_space=VMEM)
    return pl.pallas_call(
        functools.partial(_image_stem_kernel, batch=batch,
                          n_patches=n_patches, seq_pad=seq_pad),
        out_shape=jax.ShapeDtypeStruct((batch * seq_pad, dim), F32),
        in_specs=[vspec] * 7,
        out_specs=vspec,
    )(patches, p["patch_w"], p["patch_b"], p["cls"], p["pos"], p["pre_g"], p["pre_b"])


# ------------------- fused transformer encoder (all layers, one call) -------------------

def _encoder_kernel(lens_ref, x0_ref,
                    ln1g_ref, ln1b_ref, wqkv_ref, bqkv_ref, wo_ref, bo_ref,
                    ln2g_ref, ln2b_ref, w1_ref, b1_ref, w2_ref, b2_ref,
                    out_ref, x_sc, *, n_heads):
    bidx = pl.program_id(0)
    lidx = pl.program_id(1)
    n_layers = pl.num_programs(1)

    @pl.when(lidx == 0)
    def _():
        x_sc[...] = x0_ref[...]

    x = x_sc[...]                                     # (S, D) f32
    s, d = x.shape
    dh = d // n_heads
    scale = 1.0 / math.sqrt(dh)

    # additive key-padding bias (prefix mask) built from the SMEM per-example length
    kv_len = lens_ref[bidx]
    key_bias = jnp.where(
        jax.lax.broadcasted_iota(jnp.int32, (1, s), 1) < kv_len, 0.0, NEG_INF
    ).astype(jnp.float32)                             # (1, S)

    # ---- multi-head self-attention (all heads; fused QKV matmul) ----
    h = _ln(x, ln1g_ref[0], ln1b_ref[0])
    qkv = jnp.dot(h, wqkv_ref[0], preferred_element_type=jnp.float32) + bqkv_ref[0]
    head_outs = []
    for hi in range(n_heads):
        q = qkv[:, hi * dh:(hi + 1) * dh]
        k = qkv[:, d + hi * dh:d + (hi + 1) * dh]
        v = qkv[:, 2 * d + hi * dh:2 * d + (hi + 1) * dh]
        sc = jax.lax.dot_general(q, k, (((1,), (1,)), ((), ())),
                                 preferred_element_type=jnp.float32) * scale + key_bias
        m = jnp.max(sc, axis=-1, keepdims=True)
        p = jnp.exp(sc - m)
        p = p * pl.reciprocal(jnp.sum(p, axis=-1, keepdims=True), approx=True)
        head_outs.append(jnp.dot(p, v, preferred_element_type=jnp.float32))
    attn = jnp.concatenate(head_outs, axis=-1)        # (S, D)
    x = x + jnp.dot(attn, wo_ref[0], preferred_element_type=jnp.float32) + bo_ref[0]

    # ---- MLP ----
    h2 = _ln(x, ln2g_ref[0], ln2b_ref[0])
    m1 = jnp.dot(h2, w1_ref[0], preferred_element_type=jnp.float32) + b1_ref[0]
    # TODO(synk): PyTorch nn.GELU default is exact erf; tanh approximation used here.
    m1 = jax.nn.gelu(m1, approximate=True)
    m2 = jnp.dot(m1, w2_ref[0], preferred_element_type=jnp.float32) + b2_ref[0]
    x_new = x + m2

    x_sc[...] = x_new

    @pl.when(lidx == n_layers - 1)
    def _():
        out_ref[...] = x_new.astype(out_ref.dtype)


def run_encoder(x0, lens, blocks, n_heads, *, seq, dim):
    rows = x0.shape[0]
    batch = rows // seq
    n_layers = blocks["wqkv"].shape[0]

    def wspec(arr):
        shp = arr.shape
        return pl.BlockSpec((1, shp[1], shp[2]), lambda b, l, lens_ref: (l, 0, 0))

    x_spec = pl.BlockSpec((seq, dim), lambda b, l, lens_ref: (b, 0))

    order = ("ln1_g", "ln1_b", "wqkv", "bqkv", "wo", "bo",
             "ln2_g", "ln2_b", "w1", "b1", "w2", "b2")
    grid_spec = pltpu.PrefetchScalarGridSpec(
        num_scalar_prefetch=1,
        grid=(batch, n_layers),
        in_specs=[x_spec] + [wspec(blocks[k]) for k in order],
        out_specs=x_spec,
        scratch_shapes=[pltpu.VMEM((seq, dim), F32)],
    )
    return pl.pallas_call(
        functools.partial(_encoder_kernel, n_heads=n_heads),
        out_shape=jax.ShapeDtypeStruct((rows, dim), F32),
        grid_spec=grid_spec,
        compiler_params=pltpu.CompilerParams(
            dimension_semantics=("parallel", "arbitrary")),
    )(lens, x0, *[blocks[k] for k in order])


# ------------------- fused heads (final LN + gather + projection) + CLIP loss -------------------

def _head_loss_kernel(idx_t_ref, temp_ref, xi_ref, xt_ref,
                      gi_ref, bi_ref, pi_ref, gt_ref, bt_ref, pt_ref,
                      o_ref, *, batch, seq_img):
    # image CLS rows sit at static offsets k*seq_img; text last-valid rows are dynamic
    img_rows = jnp.concatenate(
        [xi_ref[pl.ds(k * seq_img, 1), :] for k in range(batch)], axis=0)     # (B, Dv)
    txt_rows = jnp.concatenate(
        [xt_ref[pl.ds(idx_t_ref[k], 1), :] for k in range(batch)], axis=0)    # (B, Dt)

    ie = jnp.dot(_ln(img_rows, gi_ref[...], bi_ref[...]), pi_ref[...],
                 preferred_element_type=jnp.float32)                          # (B, L)
    te = jnp.dot(_ln(txt_rows, gt_ref[...], bt_ref[...]), pt_ref[...],
                 preferred_element_type=jnp.float32)                          # (B, L)

    # F.normalize (eps folded into rsqrt)
    ien = ie * jax.lax.rsqrt(jnp.sum(ie * ie, axis=-1, keepdims=True) + 1e-24)
    ten = te * jax.lax.rsqrt(jnp.sum(te * te, axis=-1, keepdims=True) + 1e-24)

    logits = jax.lax.dot_general(ien, ten, (((1,), (1,)), ((), ())),
                                 preferred_element_type=jnp.float32)          # (B, B)
    logits = logits * jnp.exp(jnp.full((1, 1), temp_ref[0], jnp.float32))

    nb = logits.shape[0]
    rid = jax.lax.broadcasted_iota(jnp.int32, (nb, nb), 0)
    cid = jax.lax.broadcasted_iota(jnp.int32, (nb, nb), 1)
    eye = rid == cid
    diag_r = jnp.sum(jnp.where(eye, logits, 0.0), axis=1, keepdims=True)      # (B,1)
    diag_c = jnp.sum(jnp.where(eye, logits, 0.0), axis=0, keepdims=True)      # (1,B)
    m_r = jnp.max(logits, axis=1, keepdims=True)
    lse_r = m_r + jnp.log(jnp.sum(jnp.exp(logits - m_r), axis=1, keepdims=True))
    m_c = jnp.max(logits, axis=0, keepdims=True)
    lse_c = m_c + jnp.log(jnp.sum(jnp.exp(logits - m_c), axis=0, keepdims=True))
    loss_t = jnp.sum(lse_r - diag_r, axis=0, keepdims=True) / nb              # (1,1)
    loss_i = jnp.sum(lse_c - diag_c, axis=1, keepdims=True) / nb              # (1,1)
    o_ref[...] = 0.5 * (loss_i + loss_t)


def head_and_loss(xi, xt, idx_t, temperature, hp, *, batch, seq_img):
    sspec = pl.BlockSpec(memory_space=SMEM)
    vspec = pl.BlockSpec(memory_space=VMEM)
    out = pl.pallas_call(
        functools.partial(_head_loss_kernel, batch=batch, seq_img=seq_img),
        out_shape=jax.ShapeDtypeStruct((1, 1), F32),
        in_specs=[sspec, sspec] + [vspec] * 8,
        out_specs=vspec,
    )(idx_t, temperature, xi, xt,
      hp["img_g"], hp["img_b"], hp["img_proj"],
      hp["txt_g"], hp["txt_b"], hp["txt_proj"])
    return out[0, 0]


# ----------------------------- model glue -----------------------------

def clip_forward(params, image, text, mask, cfg):
    B, C, H, W = image.shape
    ph, pw = cfg["patch_size"]
    nph, npw = H // ph, W // pw
    n_patches = nph * npw
    dv = cfg["vit_width"]
    dt = cfg["text_width"]
    s_img = _round_up(n_patches + 1, 8)

    # ---- image tower ----
    patches = image.reshape(B, C, nph, ph, npw, pw).transpose(0, 2, 4, 1, 3, 5)
    patches = patches.reshape(B * n_patches, C * ph * pw).astype(F32)
    xi0 = image_stem(patches, params["image"], batch=B, n_patches=n_patches,
                     seq_pad=s_img, dim=dv)
    lens_img = jnp.full((B,), n_patches + 1, jnp.int32)
    xi = run_encoder(xi0, lens_img, params["image"]["blocks"], cfg["vit_heads"],
                     seq=s_img, dim=dv)

    # ---- text tower ----
    st = text.shape[1]
    s_txt = _round_up(st, 8)
    xt0 = jnp.take(params["text"]["emb"], text, axis=0) + params["text"]["pos"]   # (B,S,Dt)
    if s_txt != st:
        xt0 = jnp.pad(xt0, ((0, 0), (0, s_txt - st), (0, 0)))
    xt0 = xt0.reshape(B * s_txt, dt).astype(F32)
    lens_txt = jnp.sum(mask, axis=1).astype(jnp.int32)
    xt = run_encoder(xt0, lens_txt, params["text"]["blocks"], cfg["text_heads"],
                     seq=s_txt, dim=dt)

    # ---- heads + contrastive loss ----
    idx_t = (jnp.arange(B, dtype=jnp.int32) * s_txt + lens_txt - 1).astype(jnp.int32)
    hp = dict(img_g=params["image"]["final_g"], img_b=params["image"]["final_b"],
              img_proj=params["image"]["proj"],
              txt_g=params["text"]["final_g"], txt_b=params["text"]["final_b"],
              txt_proj=params["text"]["proj"])
    return head_and_loss(xi, xt, idx_t, params["temperature"], hp,
                         batch=B, seq_img=s_img)


# ----------------------------- parameter init -----------------------------

def init_params(key, cfg):
    dv, dt = cfg["vit_width"], cfg["text_width"]
    ld, r = cfg["latent_dim"], cfg["r_mlp"]
    keys = iter(jax.random.split(key, 64))

    def nrm(shape, std):
        return std * jax.random.normal(next(keys), shape, dtype=F32)

    def stacked_blocks(d, n_layers):
        return dict(
            ln1_g=jnp.ones((n_layers, 1, d), F32), ln1_b=jnp.zeros((n_layers, 1, d), F32),
            wqkv=nrm((n_layers, d, 3 * d), 0.02), bqkv=jnp.zeros((n_layers, 1, 3 * d), F32),
            wo=nrm((n_layers, d, d), 0.02), bo=jnp.zeros((n_layers, 1, d), F32),
            ln2_g=jnp.ones((n_layers, 1, d), F32), ln2_b=jnp.zeros((n_layers, 1, d), F32),
            w1=nrm((n_layers, d, r * d), 0.02), b1=jnp.zeros((n_layers, 1, r * d), F32),
            w2=nrm((n_layers, r * d, d), 0.02), b2=jnp.zeros((n_layers, 1, d), F32),
        )

    ph, pw = cfg["patch_size"]
    C = cfg["img_channels"]
    n_patches = cfg["img_size"][0] * cfg["img_size"][1] // (ph * pw)
    std_v, std_t = dv ** -0.5, dt ** -0.5

    image = dict(
        patch_w=nrm((C * ph * pw, dv), (C * ph * pw) ** -0.5),
        patch_b=jnp.zeros((1, dv), F32),
        cls=nrm((1, dv), std_v),
        pos=nrm((n_patches + 1, dv), std_v),
        pre_g=jnp.ones((1, dv), F32), pre_b=jnp.zeros((1, dv), F32),
        blocks=stacked_blocks(dv, cfg["vit_layers"]),
        final_g=jnp.ones((1, dv), F32), final_b=jnp.zeros((1, dv), F32),
        proj=nrm((dv, ld), std_v),
    )
    text = dict(
        emb=nrm((cfg["vocab_size"], dt), std_t),
        pos=nrm((cfg["text_seq_length"], dt), std_t),
        blocks=stacked_blocks(dt, cfg["text_layers"]),
        final_g=jnp.ones((1, dt), F32), final_b=jnp.zeros((1, dt), F32),
        proj=nrm((dt, ld), std_t),
    )
    return dict(image=image, text=text,
                temperature=jnp.full((1,), math.log(1.0 / 0.07), F32))


# ----------------------------- main -----------------------------

if __name__ == "__main__":
    cfg = dict(
        img_size=(16, 16), patch_size=(8, 8), img_channels=4,
        vit_width=32, vit_heads=4, vit_layers=2,
        text_width=32, text_heads=4, text_layers=2,
        vocab_size=64, text_seq_length=8,
        latent_dim=16, r_mlp=4,
    )
    key = jax.random.PRNGKey(0)
    k_params, k_img, k_txt = jax.random.split(key, 3)
    params = init_params(k_params, cfg)

    image = jax.random.normal(k_img, (2, cfg["img_channels"],
                                      cfg["img_size"][0], cfg["img_size"][1]), dtype=F32)
    text = jax.random.randint(k_txt, (2, cfg["text_seq_length"]), 0, cfg["vocab_size"])
    mask = jnp.array([[1, 1, 1, 1, 1, 0, 0, 0],
                      [1, 1, 1, 1, 1, 1, 1, 1]], dtype=jnp.int32)

    fwd = jax.jit(functools.partial(clip_forward, cfg=cfg))
    loss = fwd(params, image, text, mask)
    jax.block_until_ready(loss)
    assert loss.shape == () and bool(jnp.isfinite(loss))
    print("KERNEL_OK")
</pallas_src>

<mosaic_0001>
module attributes {stable_mosaic.version = 11 : i64} {
  func.func @_image_stem_kernel(%arg0: memref<8x256xf32, #tpu.memory_space<vmem>>, %arg1: memref<256x32xf32, #tpu.memory_space<vmem>>, %arg2: memref<1x32xf32, #tpu.memory_space<vmem>>, %arg3: memref<1x32xf32, #tpu.memory_space<vmem>>, %arg4: memref<5x32xf32, #tpu.memory_space<vmem>>, %arg5: memref<1x32xf32, #tpu.memory_space<vmem>>, %arg6: memref<1x32xf32, #tpu.memory_space<vmem>>, %arg7: memref<16x32xf32, #tpu.memory_space<vmem>>) attributes {dimension_semantics = [], scalar_prefetch = 0 : i64, scratch_operands = 0 : i64, tpu.core_type = #tpu.core_type<tc>} {
    %c0 = arith.constant 0 : index
    %c0_0 = arith.constant 0 : index
    %0 = vector.load %arg0[%c0, %c0_0] : memref<8x256xf32, #tpu.memory_space<vmem>>, vector<8x256xf32>
    %c0_1 = arith.constant 0 : index
    %c0_2 = arith.constant 0 : index
    %1 = vector.load %arg1[%c0_1, %c0_2] : memref<256x32xf32, #tpu.memory_space<vmem>>, vector<256x32xf32>
    %cst = arith.constant dense<0.000000e+00> : vector<8x32xf32>
    %2 = tpu.matmul %0, %1, %cst {dimension_numbers = #tpu.dot_dimension_numbers<[1], [0], [0], [1], [0, 0, 1, 1], [], []>} : vector<8x256xf32>, vector<256x32xf32>, vector<8x32xf32> -> vector<8x32xf32>
    %c0_3 = arith.constant 0 : index
    %c0_4 = arith.constant 0 : index
    %3 = vector.load %arg2[%c0_3, %c0_4] : memref<1x32xf32, #tpu.memory_space<vmem>>, vector<1x32xf32>
    %4 = vector.broadcast %3 : vector<1x32xf32> to vector<8x32xf32>
    %5 = arith.addf %2, %4 : vector<8x32xf32>
    %c0_5 = arith.constant 0 : index
    %c0_6 = arith.constant 0 : index
    %6 = vector.load %arg4[%c0_5, %c0_6] : memref<5x32xf32, #tpu.memory_space<vmem>>, vector<5x32xf32>
    %c0_7 = arith.constant 0 : index
    %c0_8 = arith.constant 0 : index
    %7 = vector.load %arg3[%c0_7, %c0_8] : memref<1x32xf32, #tpu.memory_space<vmem>>, vector<1x32xf32>
    %c0_9 = arith.constant 0 : index
    %c0_10 = arith.constant 0 : index
    %8 = vector.load %arg5[%c0_9, %c0_10] : memref<1x32xf32, #tpu.memory_space<vmem>>, vector<1x32xf32>
    %c0_11 = arith.constant 0 : index
    %c0_12 = arith.constant 0 : index
    %9 = vector.load %arg6[%c0_11, %c0_12] : memref<1x32xf32, #tpu.memory_space<vmem>>, vector<1x32xf32>
    %10 = vector.extract_strided_slice %5 {offsets = [0, 0], sizes = [4, 32], strides = [1, 1]} : vector<8x32xf32> to vector<4x32xf32>
    %11 = tpu.concatenate %7, %10 in 0 : vector<1x32xf32>, vector<4x32xf32> -> vector<5x32xf32>
    %12 = arith.addf %11, %6 : vector<5x32xf32>
    %cst_13 = arith.constant dense<0.000000e+00> : vector<5xf32>
    %13 = vector.multi_reduction <add>, %12, %cst_13 [1] : vector<5x32xf32> to vector<5xf32>
    %14 = vector.shape_cast %13 : vector<5xf32> to vector<5x1xf32>
    %cst_14 = arith.constant 3.200000e+01 : f32
    %15 = vector.broadcast %cst_14 : f32 to vector<5x1xf32>
    %16 = arith.divf %14, %15 : vector<5x1xf32>
    %17 = vector.broadcast %16 : vector<5x1xf32> to vector<5x32xf32>
    %18 = arith.subf %12, %17 : vector<5x32xf32>
    %19 = arith.mulf %18, %18 : vector<5x32xf32>
    %cst_15 = arith.constant dense<0.000000e+00> : vector<5xf32>
    %20 = vector.multi_reduction <add>, %19, %cst_15 [1] : vector<5x32xf32> to vector<5xf32>
    %21 = vector.shape_cast %20 : vector<5xf32> to vector<5x1xf32>
    %cst_16 = arith.constant 3.200000e+01 : f32
    %22 = vector.broadcast %cst_16 : f32 to vector<5x1xf32>
    %23 = arith.divf %21, %22 : vector<5x1xf32>
    %cst_17 = arith.constant 9.99999974E-6 : f32
    %24 = vector.broadcast %cst_17 : f32 to vector<5x1xf32>
    %25 = arith.addf %23, %24 : vector<5x1xf32>
    %26 = math.rsqrt %25 : vector<5x1xf32>
    %27 = vector.broadcast %26 : vector<5x1xf32> to vector<5x32xf32>
    %28 = arith.mulf %18, %27 : vector<5x32xf32>
    %29 = vector.broadcast %8 : vector<1x32xf32> to vector<5x32xf32>
    %30 = arith.mulf %28, %29 : vector<5x32xf32>
    %31 = vector.broadcast %9 : vector<1x32xf32> to vector<5x32xf32>
    %32 = arith.addf %30, %31 : vector<5x32xf32>
    %cst_18 = arith.constant 0.000000e+00 : f32
    %33 = vector.broadcast %cst_18 : f32 to vector<3x32xf32>
    %34 = vector.extract_strided_slice %5 {offsets = [4, 0], sizes = [4, 32], strides = [1, 1]} : vector<8x32xf32> to vector<4x32xf32>
    %35 = tpu.concatenate %7, %34 in 0 : vector<1x32xf32>, vector<4x32xf32> -> vector<5x32xf32>
    %36 = arith.addf %35, %6 : vector<5x32xf32>
    %cst_19 = arith.constant dense<0.000000e+00> : vector<5xf32>
    %37 = vector.multi_reduction <add>, %36, %cst_19 [1] : vector<5x32xf32> to vector<5xf32>
    %38 = vector.shape_cast %37 : vector<5xf32> to vector<5x1xf32>
    %cst_20 = arith.constant 3.200000e+01 : f32
    %39 = vector.broadcast %cst_20 : f32 to vector<5x1xf32>
    %40 = arith.divf %38, %39 : vector<5x1xf32>
    %41 = vector.broadcast %40 : vector<5x1xf32> to vector<5x32xf32>
    %42 = arith.subf %36, %41 : vector<5x32xf32>
    %43 = arith.mulf %42, %42 : vector<5x32xf32>
    %cst_21 = arith.constant dense<0.000000e+00> : vector<5xf32>
    %44 = vector.multi_reduction <add>, %43, %cst_21 [1] : vector<5x32xf32> to vector<5xf32>
    %45 = vector.shape_cast %44 : vector<5xf32> to vector<5x1xf32>
    %cst_22 = arith.constant 3.200000e+01 : f32
    %46 = vector.broadcast %cst_22 : f32 to vector<5x1xf32>
    %47 = arith.divf %45, %46 : vector<5x1xf32>
    %cst_23 = arith.constant 9.99999974E-6 : f32
    %48 = vector.broadcast %cst_23 : f32 to vector<5x1xf32>
    %49 = arith.addf %47, %48 : vector<5x1xf32>
    %50 = math.rsqrt %49 : vector<5x1xf32>
    %51 = vector.broadcast %50 : vector<5x1xf32> to vector<5x32xf32>
    %52 = arith.mulf %42, %51 : vector<5x32xf32>
    %53 = vector.broadcast %8 : vector<1x32xf32> to vector<5x32xf32>
    %54 = arith.mulf %52, %53 : vector<5x32xf32>
    %55 = vector.broadcast %9 : vector<1x32xf32> to vector<5x32xf32>
    %56 = arith.addf %54, %55 : vector<5x32xf32>
    %cst_24 = arith.constant 0.000000e+00 : f32
    %57 = vector.broadcast %cst_24 : f32 to vector<3x32xf32>
    %58 = tpu.concatenate %32, %33, %56, %57 in 0 : vector<5x32xf32>, vector<3x32xf32>, vector<5x32xf32>, vector<3x32xf32> -> vector<16x32xf32>
    %c0_25 = arith.constant 0 : index
    %c0_26 = arith.constant 0 : index
    %59 = vector.load %arg7[%c0_25, %c0_26] : memref<16x32xf32, #tpu.memory_space<vmem>>, vector<16x32xf32>
    tpu.vector_store %arg7[%c0_25, %c0_26], %58 {strides = array<i32>} : memref<16x32xf32, #tpu.memory_space<vmem>>, vector<16x32xf32>,
    return
  }
}

module attributes {stable_mosaic.version = 11 : i64} {
  func.func @_encoder_kernel(%arg0: i32, %arg1: i32, %arg2: memref<2xi32, #tpu.memory_space<smem>>, %arg3: memref<8x32xf32, #tpu.memory_space<vmem>>, %arg4: memref<1x1x32xf32, #tpu.memory_space<vmem>>, %arg5: memref<1x1x32xf32, #tpu.memory_space<vmem>>, %arg6: memref<1x32x96xf32, #tpu.memory_space<vmem>>, %arg7: memref<1x1x96xf32, #tpu.memory_space<vmem>>, %arg8: memref<1x32x32xf32, #tpu.memory_space<vmem>>, %arg9: memref<1x1x32xf32, #tpu.memory_space<vmem>>, %arg10: memref<1x1x32xf32, #tpu.memory_space<vmem>>, %arg11: memref<1x1x32xf32, #tpu.memory_space<vmem>>, %arg12: memref<1x32x128xf32, #tpu.memory_space<vmem>>, %arg13: memref<1x1x128xf32, #tpu.memory_space<vmem>>, %arg14: memref<1x128x32xf32, #tpu.memory_space<vmem>>, %arg15: memref<1x1x32xf32, #tpu.memory_space<vmem>>, %arg16: memref<8x32xf32, #tpu.memory_space<vmem>>, %arg17: memref<8x32xf32, #tpu.memory_space<vmem>>) attributes {dimension_semantics = [#tpu.dimension_semantics<parallel>, #tpu.dimension_semantics<arbitrary>], iteration_bounds = array<i64: 2, 2>, scalar_prefetch = 1 : i64, scratch_operands = 1 : i64, tpu.core_type = #tpu.core_type<tc>, window_params = [{transform_indices = @transform_0, window_bounds = array<i64: 8, 32>}, {transform_indices = @transform_1, window_bounds = array<i64: 1, 1, 32>}, {transform_indices = @transform_2, window_bounds = array<i64: 1, 1, 32>}, {transform_indices = @transform_3, window_bounds = array<i64: 1, 32, 96>}, {transform_indices = @transform_4, window_bounds = array<i64: 1, 1, 96>}, {transform_indices = @transform_5, window_bounds = array<i64: 1, 32, 32>}, {transform_indices = @transform_6, window_bounds = array<i64: 1, 1, 32>}, {transform_indices = @transform_7, window_bounds = array<i64: 1, 1, 32>}, {transform_indices = @transform_8, window_bounds = array<i64: 1, 1, 32>}, {transform_indices = @transform_9, window_bounds = array<i64: 1, 32, 128>}, {transform_indices = @transform_10, window_bounds = array<i64: 1, 1, 128>}, {transform_indices = @transform_11, window_bounds = array<i64: 1, 128, 32>}, {transform_indices = @transform_12, window_bounds = array<i64: 1, 1, 32>}, {transform_indices = @transform_13, window_bounds = array<i64: 8, 32>}]} {
    %c0_i32 = arith.constant 0 : i32
    %0 = arith.cmpi eq, %arg1, %c0_i32 : i32
    %1 = arith.extui %0 : i1 to i32
    %c0_i32_0 = arith.constant 0 : i32
    %2 = arith.cmpi ne, %1, %c0_i32_0 : i32
    scf.if %2 {
      %c0_80 = arith.constant 0 : index
      %c0_81 = arith.constant 0 : index
      %184 = vector.load %arg3[%c0_80, %c0_81] : memref<8x32xf32, #tpu.memory_space<vmem>>, vector<8x32xf32>
      %c0_82 = arith.constant 0 : index
      %c0_83 = arith.constant 0 : index
      %185 = vector.load %arg17[%c0_82, %c0_83] : memref<8x32xf32, #tpu.memory_space<vmem>>, vector<8x32xf32>
      tpu.vector_store %arg17[%c0_82, %c0_83], %184 {strides = array<i32>} : memref<8x32xf32, #tpu.memory_space<vmem>>, vector<8x32xf32>,
    } else {
    }
    %c0 = arith.constant 0 : index
    %c0_1 = arith.constant 0 : index
    %3 = vector.load %arg17[%c0, %c0_1] : memref<8x32xf32, #tpu.memory_space<vmem>>, vector<8x32xf32>
    %4 = arith.index_cast %arg0 : i32 to index
    %5 = memref.load %arg2[%4] : memref<2xi32, #tpu.memory_space<smem>>
    %6 = tpu.iota {dimensions = array<i32: 1>} : vector<1x8xi32>
    %7 = vector.broadcast %5 : i32 to vector<1x8xi32>
    %8 = arith.cmpi slt, %6, %7 : vector<1x8xi32>
    %cst = arith.constant 0.000000e+00 : f32
    %cst_2 = arith.constant -1.000000e+09 : f32
    %9 = vector.broadcast %cst : f32 to vector<1x8xf32>
    %10 = vector.broadcast %cst_2 : f32 to vector<1x8xf32>
    %11 = arith.select %8, %9, %10 : vector<1x8xi1>, vector<1x8xf32>
    %c0_3 = arith.constant 0 : index
    %c0_4 = arith.constant 0 : index
    %c0_5 = arith.constant 0 : index
    %12 = vector.load %arg4[%c0_3, %c0_4, %c0_5] : memref<1x1x32xf32, #tpu.memory_space<vmem>>, vector<1x1x32xf32>
    %13 = vector.shape_cast %12 : vector<1x1x32xf32> to vector<1x32xf32>
    %c0_6 = arith.constant 0 : index
    %c0_7 = arith.constant 0 : index
    %c0_8 = arith.constant 0 : index
    %14 = vector.load %arg5[%c0_6, %c0_7, %c0_8] : memref<1x1x32xf32, #tpu.memory_space<vmem>>, vector<1x1x32xf32>
    %15 = vector.shape_cast %14 : vector<1x1x32xf32> to vector<1x32xf32>
    %cst_9 = arith.constant dense<0.000000e+00> : vector<8xf32>
    %16 = vector.multi_reduction <add>, %3, %cst_9 [1] : vector<8x32xf32> to vector<8xf32>
    %17 = vector.shape_cast %16 : vector<8xf32> to vector<8x1xf32>
    %cst_10 = arith.constant 3.200000e+01 : f32
    %18 = vector.broadcast %cst_10 : f32 to vector<8x1xf32>
    %19 = arith.divf %17, %18 : vector<8x1xf32>
    %20 = vector.broadcast %19 : vector<8x1xf32> to vector<8x32xf32>
    %21 = arith.subf %3, %20 : vector<8x32xf32>
    %22 = arith.mulf %21, %21 : vector<8x32xf32>
    %cst_11 = arith.constant dense<0.000000e+00> : vector<8xf32>
    %23 = vector.multi_reduction <add>, %22, %cst_11 [1] : vector<8x32xf32> to vector<8xf32>
    %24 = vector.shape_cast %23 : vector<8xf32> to vector<8x1xf32>
    %cst_12 = arith.constant 3.200000e+01 : f32
    %25 = vector.broadcast %cst_12 : f32 to vector<8x1xf32>
    %26 = arith.divf %24, %25 : vector<8x1xf32>
    %cst_13 = arith.constant 9.99999974E-6 : f32
    %27 = vector.broadcast %cst_13 : f32 to vector<8x1xf32>
    %28 = arith.addf %26, %27 : vector<8x1xf32>
    %29 = math.rsqrt %28 : vector<8x1xf32>
    %30 = vector.broadcast %29 : vector<8x1xf32> to vector<8x32xf32>
    %31 = arith.mulf %21, %30 : vector<8x32xf32>
    %32 = vector.broadcast %13 : vector<1x32xf32> to vector<8x32xf32>
    %33 = arith.mulf %31, %32 : vector<8x32xf32>
    %34 = vector.broadcast %15 : vector<1x32xf32> to vector<8x32xf32>
    %35 = arith.addf %33, %34 : vector<8x32xf32>
    %c0_14 = arith.constant 0 : index
    %c0_15 = arith.constant 0 : index
    %c0_16 = arith.constant 0 : index
    %36 = vector.load %arg6[%c0_14, %c0_15, %c0_16] : memref<1x32x96xf32, #tpu.memory_space<vmem>>, vector<1x32x96xf32>
    %37 = vector.shape_cast %36 : vector<1x32x96xf32> to vector<32x96xf32>
    %cst_17 = arith.constant dense<0.000000e+00> : vector<8x96xf32>
    %38 = tpu.matmul %35, %37, %cst_17 {dimension_numbers = #tpu.dot_dimension_numbers<[1], [0], [0], [1], [0, 0, 1, 1], [], []>} : vector<8x32xf32>, vector<32x96xf32>, vector<8x96xf32> -> vector<8x96xf32>
    %c0_18 = arith.constant 0 : index
    %c0_19 = arith.constant 0 : index
    %c0_20 = arith.constant 0 : index
    %39 = vector.load %arg7[%c0_18, %c0_19, %c0_20] : memref<1x1x96xf32, #tpu.memory_space<vmem>>, vector<1x1x96xf32>
    %40 = vector.shape_cast %39 : vector<1x1x96xf32> to vector<1x96xf32>
    %41 = vector.broadcast %40 : vector<1x96xf32> to vector<8x96xf32>
    %42 = arith.addf %38, %41 : vector<8x96xf32>
    %43 = vector.extract_strided_slice %42 {offsets = [0, 0], sizes = [8, 8], strides = [1, 1]} : vector<8x96xf32> to vector<8x8xf32>
    %44 = vector.extract_strided_slice %42 {offsets = [0, 32], sizes = [8, 8], strides = [1, 1]} : vector<8x96xf32> to vector<8x8xf32>
    %45 = vector.extract_strided_slice %42 {offsets = [0, 64], sizes = [8, 8], strides = [1, 1]} : vector<8x96xf32> to vector<8x8xf32>
    %cst_21 = arith.constant dense<0.000000e+00> : vector<8x8xf32>
    %46 = tpu.matmul %43, %44, %cst_21 {dimension_numbers = #tpu.dot_dimension_numbers<[1], [1], [0], [0], [0, 0, 1, 0], [], []>} : vector<8x8xf32>, vector<8x8xf32>, vector<8x8xf32> -> vector<8x8xf32>
    %cst_22 = arith.constant 0.353553385 : f32
    %47 = vector.broadcast %cst_22 : f32 to vector<8x8xf32>
    %48 = arith.mulf %46, %47 : vector<8x8xf32>
    %49 = vector.broadcast %11 : vector<1x8xf32> to vector<8x8xf32>
    %50 = arith.addf %48, %49 : vector<8x8xf32>
    %cst_23 = arith.constant dense<0xFF800000> : vector<8xf32>
    %51 = vector.multi_reduction <maximumf>, %50, %cst_23 [1] : vector<8x8xf32> to vector<8xf32>
    %52 = vector.shape_cast %51 : vector<8xf32> to vector<8x1xf32>
    %53 = vector.broadcast %52 : vector<8x1xf32> to vector<8x8xf32>
    %54 = arith.subf %50, %53 : vector<8x8xf32>
    %55 = math.exp %54 : vector<8x8xf32>
    %cst_24 = arith.constant dense<0.000000e+00> : vector<8xf32>
    %56 = vector.multi_reduction <add>, %55, %cst_24 [1] : vector<8x8xf32> to vector<8xf32>
    %57 = vector.shape_cast %56 : vector<8xf32> to vector<8x1xf32>
    %58 = tpu.reciprocal %57 {approx = true} : vector<8x1xf32> -> vector<8x1xf32>
    %59 = vector.broadcast %58 : vector<8x1xf32> to vector<8x8xf32>
    %60 = arith.mulf %55, %59 : vector<8x8xf32>
    %cst_25 = arith.constant dense<0.000000e+00> : vector<8x8xf32>
    %61 = tpu.matmul %60, %45, %cst_25 {dimension_numbers = #tpu.dot_dimension_numbers<[1], [0], [0], [1], [0, 0, 1, 1], [], []>} : vector<8x8xf32>, vector<8x8xf32>, vector<8x8xf32> -> vector<8x8xf32>
    %62 = vector.extract_strided_slice %42 {offsets = [0, 8], sizes = [8, 8], strides = [1, 1]} : vector<8x96xf32> to vector<8x8xf32>
    %63 = vector.extract_strided_slice %42 {offsets = [0, 40], sizes = [8, 8], strides = [1, 1]} : vector<8x96xf32> to vector<8x8xf32>
    %64 = vector.extract_strided_slice %42 {offsets = [0, 72], sizes = [8, 8], strides = [1, 1]} : vector<8x96xf32> to vector<8x8xf32>
    %cst_26 = arith.constant dense<0.000000e+00> : vector<8x8xf32>
    %65 = tpu.matmul %62, %63, %cst_26 {dimension_numbers = #tpu.dot_dimension_numbers<[1], [1], [0], [0], [0, 0, 1, 0], [], []>} : vector<8x8xf32>, vector<8x8xf32>, vector<8x8xf32> -> vector<8x8xf32>
    %cst_27 = arith.constant 0.353553385 : f32
    %66 = vector.broadcast %cst_27 : f32 to vector<8x8xf32>
    %67 = arith.mulf %65, %66 : vector<8x8xf32>
    %68 = vector.broadcast %11 : vector<1x8xf32> to vector<8x8xf32>
    %69 = arith.addf %67, %68 : vector<8x8xf32>
    %cst_28 = arith.constant dense<0xFF800000> : vector<8xf32>
    %70 = vector.multi_reduction <maximumf>, %69, %cst_28 [1] : vector<8x8xf32> to vector<8xf32>
    %71 = vector.shape_cast %70 : vector<8xf32> to vector<8x1xf32>
    %72 = vector.broadcast %71 : vector<8x1xf32> to vector<8x8xf32>
    %73 = arith.subf %69, %72 : vector<8x8xf32>
    %74 = math.exp %73 : vector<8x8xf32>
    %cst_29 = arith.constant dense<0.000000e+00> : vector<8xf32>
    %75 = vector.multi_reduction <add>, %74, %cst_29 [1] : vector<8x8xf32> to vector<8xf32>
    %76 = vector.shape_cast %75 : vector<8xf32> to vector<8x1xf32>
    %77 = tpu.reciprocal %76 {approx = true} : vector<8x1xf32> -> vector<8x1xf32>
    %78 = vector.broadcast %77 : vector<8x1xf32> to vector<8x8xf32>
    %79 = arith.mulf %74, %78 : vector<8x8xf32>
    %cst_30 = arith.constant dense<0.000000e+00> : vector<8x8xf32>
    %80 = tpu.matmul %79, %64, %cst_30 {dimension_numbers = #tpu.dot_dimension_numbers<[1], [0], [0], [1], [0, 0, 1, 1], [], []>} : vector<8x8xf32>, vector<8x8xf32>, vector<8x8xf32> -> vector<8x8xf32>
    %81 = vector.extract_strided_slice %42 {offsets = [0, 16], sizes = [8, 8], strides = [1, 1]} : vector<8x96xf32> to vector<8x8xf32>
    %82 = vector.extract_strided_slice %42 {offsets = [0, 48], sizes = [8, 8], strides = [1, 1]} : vector<8x96xf32> to vector<8x8xf32>
    %83 = vector.extract_strided_slice %42 {offsets = [0, 80], sizes = [8, 8], strides = [1, 1]} : vector<8x96xf32> to vector<8x8xf32>
    %cst_31 = arith.constant dense<0.000000e+00> : vector<8x8xf32>
    %84 = tpu.matmul %81, %82, %cst_31 {dimension_numbers = #tpu.dot_dimension_numbers<[1], [1], [0], [0], [0, 0, 1, 0], [], []>} : vector<8x8xf32>, vector<8x8xf32>, vector<8x8xf32> -> vector<8x8xf32>
    %cst_32 = arith.constant 0.353553385 : f32
    %85 = vector.broadcast %cst_32 : f32 to vector<8x8xf32>
    %86 = arith.mulf %84, %85 : vector<8x8xf32>
    %87 = vector.broadcast %11 : vector<1x8xf32> to vector<8x8xf32>
    %88 = arith.addf %86, %87 : vector<8x8xf32>
    %cst_33 = arith.constant dense<0xFF800000> : vector<8xf32>
    %89 = vector.multi_reduction <maximumf>, %88, %cst_33 [1] : vector<8x8xf32> to vector<8xf32>
    %90 = vector.shape_cast %89 : vector<8xf32> to vector<8x1xf32>
    %91 = vector.broadcast %90 : vector<8x1xf32> to vector<8x8xf32>
    %92 = arith.subf %88, %91 : vector<8x8xf32>
    %93 = math.exp %92 : vector<8x8xf32>
    %cst_34 = arith.constant dense<0.000000e+00> : vector<8xf32>
    %94 = vector.multi_reduction <add>, %93, %cst_34 [1] : vector<8x8xf32> to vector<8xf32>
    %95 = vector.shape_cast %94 : vector<8xf32> to vector<8x1xf32>
    %96 = tpu.reciprocal %95 {approx = true} : vector<8x1xf32> -> vector<8x1xf32>
    %97 = vector.broadcast %96 : vector<8x1xf32> to vector<8x8xf32>
    %98 = arith.mulf %93, %97 : vector<8x8xf32>
    %cst_35 = arith.constant dense<0.000000e+00> : vector<8x8xf32>
    %99 = tpu.matmul %98, %83, %cst_35 {dimension_numbers = #tpu.dot_dimension_numbers<[1], [0], [0], [1], [0, 0, 1, 1], [], []>} : vector<8x8xf32>, vector<8x8xf32>, vector<8x8xf32> -> vector<8x8xf32>
    %100 = vector.extract_strided_slice %42 {offsets = [0, 24], sizes = [8, 8], strides = [1, 1]} : vector<8x96xf32> to vector<8x8xf32>
    %101 = vector.extract_strided_slice %42 {offsets = [0, 56], sizes = [8, 8], strides = [1, 1]} : vector<8x96xf32> to vector<8x8xf32>
    %102 = vector.extract_strided_slice %42 {offsets = [0, 88], sizes = [8, 8], strides = [1, 1]} : vector<8x96xf32> to vector<8x8xf32>
    %cst_36 = arith.constant dense<0.000000e+00> : vector<8x8xf32>
    %103 = tpu.matmul %100, %101, %cst_36 {dimension_numbers = #tpu.dot_dimension_numbers<[1], [1], [0], [0], [0, 0, 1, 0], [], []>} : vector<8x8xf32>, vector<8x8xf32>, vector<8x8xf32> -> vector<8x8xf32>
    %cst_37 = arith.constant 0.353553385 : f32
    %104 = vector.broadcast %cst_37 : f32 to vector<8x8xf32>
    %105 = arith.mulf %103, %104 : vector<8x8xf32>
    %106 = vector.broadcast %11 : vector<1x8xf32> to vector<8x8xf32>
    %107 = arith.addf %105, %106 : vector<8x8xf32>
    %cst_38 = arith.constant dense<0xFF800000> : vector<8xf32>
    %108 = vector.multi_reduction <maximumf>, %107, %cst_38 [1] : vector<8x8xf32> to vector<8xf32>
    %109 = vector.shape_cast %108 : vector<8xf32> to vector<8x1xf32>
    %110 = vector.broadcast %109 : vector<8x1xf32> to vector<8x8xf32>
    %111 = arith.subf %107, %110 : vector<8x8xf32>
    %112 = math.exp %111 : vector<8x8xf32>
    %cst_39 = arith.constant dense<0.000000e+00> : vector<8xf32>
    %113 = vector.multi_reduction <add>, %112, %cst_39 [1] : vector<8x8xf32> to vector<8xf32>
    %114 = vector.shape_cast %113 : vector<8xf32> to vector<8x1xf32>
    %115 = tpu.reciprocal %114 {approx = true} : vector<8x1xf32> -> vector<8x1xf32>
    %116 = vector.broadcast %115 : vector<8x1xf32> to vector<8x8xf32>
    %117 = arith.mulf %112, %116 : vector<8x8xf32>
    %cst_40 = arith.constant dense<0.000000e+00> : vector<8x8xf32>
    %118 = tpu.matmul %117, %102, %cst_40 {dimension_numbers = #tpu.dot_dimension_numbers<[1], [0], [0], [1], [0, 0, 1, 1], [], []>} : vector<8x8xf32>, vector<8x8xf32>, vector<8x8xf32> -> vector<8x8xf32>
    %119 = tpu.concatenate %61, %80, %99, %118 in 1 : vector<8x8xf32>, vector<8x8xf32>, vector<8x8xf32>, vector<8x8xf32> -> vector<8x32xf32>
    %c0_41 = arith.constant 0 : index
    %c0_42 = arith.constant 0 : index
    %c0_43 = arith.constant 0 : index
    %120 = vector.load %arg8[%c0_41, %c0_42, %c0_43] : memref<1x32x32xf32, #tpu.memory_space<vmem>>, vector<1x32x32xf32>
    %121 = vector.shape_cast %120 : vector<1x32x32xf32> to vector<32x32xf32>
    %cst_44 = arith.constant dense<0.000000e+00> : vector<8x32xf32>
    %122 = tpu.matmul %119, %121, %cst_44 {dimension_numbers = #tpu.dot_dimension_numbers<[1], [0], [0], [1], [0, 0, 1, 1], [], []>} : vector<8x32xf32>, vector<32x32xf32>, vector<8x32xf32> -> vector<8x32xf32>
    %123 = arith.addf %3, %122 : vector<8x32xf32>
    %c0_45 = arith.constant 0 : index
    %c0_46 = arith.constant 0 : index
    %c0_47 = arith.constant 0 : index
    %124 = vector.load %arg9[%c0_45, %c0_46, %c0_47] : memref<1x1x32xf32, #tpu.memory_space<vmem>>, vector<1x1x32xf32>
    %125 = vector.shape_cast %124 : vector<1x1x32xf32> to vector<1x32xf32>
    %126 = vector.broadcast %125 : vector<1x32xf32> to vector<8x32xf32>
    %127 = arith.addf %123, %126 : vector<8x32xf32>
    %c0_48 = arith.constant 0 : index
    %c0_49 = arith.constant 0 : index
    %c0_50 = arith.constant 0 : index
    %128 = vector.load %arg10[%c0_48, %c0_49, %c0_50] : memref<1x1x32xf32, #tpu.memory_space<vmem>>, vector<1x1x32xf32>
    %129 = vector.shape_cast %128 : vector<1x1x32xf32> to vector<1x32xf32>
    %c0_51 = arith.constant 0 : index
    %c0_52 = arith.constant 0 : index
    %c0_53 = arith.constant 0 : index
    %130 = vector.load %arg11[%c0_51, %c0_52, %c0_53] : memref<1x1x32xf32, #tpu.memory_space<vmem>>, vector<1x1x32xf32>
    %131 = vector.shape_cast %130 : vector<1x1x32xf32> to vector<1x32xf32>
    %cst_54 = arith.constant dense<0.000000e+00> : vector<8xf32>
    %132 = vector.multi_reduction <add>, %127, %cst_54 [1] : vector<8x32xf32> to vector<8xf32>
    %133 = vector.shape_cast %132 : vector<8xf32> to vector<8x1xf32>
    %cst_55 = arith.constant 3.200000e+01 : f32
    %134 = vector.broadcast %cst_55 : f32 to vector<8x1xf32>
    %135 = arith.divf %133, %134 : vector<8x1xf32>
    %136 = vector.broadcast %135 : vector<8x1xf32> to vector<8x32xf32>
    %137 = arith.subf %127, %136 : vector<8x32xf32>
    %138 = arith.mulf %137, %137 : vector<8x32xf32>
    %cst_56 = arith.constant dense<0.000000e+00> : vector<8xf32>
    %139 = vector.multi_reduction <add>, %138, %cst_56 [1] : vector<8x32xf32> to vector<8xf32>
    %140 = vector.shape_cast %139 : vector<8xf32> to vector<8x1xf32>
    %cst_57 = arith.constant 3.200000e+01 : f32
    %141 = vector.broadcast %cst_57 : f32 to vector<8x1xf32>
    %142 = arith.divf %140, %141 : vector<8x1xf32>
    %cst_58 = arith.constant 9.99999974E-6 : f32
    %143 = vector.broadcast %cst_58 : f32 to vector<8x1xf32>
    %144 = arith.addf %142, %143 : vector<8x1xf32>
    %145 = math.rsqrt %144 : vector<8x1xf32>
    %146 = vector.broadcast %145 : vector<8x1xf32> to vector<8x32xf32>
    %147 = arith.mulf %137, %146 : vector<8x32xf32>
    %148 = vector.broadcast %129 : vector<1x32xf32> to vector<8x32xf32>
    %149 = arith.mulf %147, %148 : vector<8x32xf32>
    %150 = vector.broadcast %131 : vector<1x32xf32> to vector<8x32xf32>
    %151 = arith.addf %149, %150 : vector<8x32xf32>
    %c0_59 = arith.constant 0 : index
    %c0_60 = arith.constant 0 : index
    %c0_61 = arith.constant 0 : index
    %152 = vector.load %arg12[%c0_59, %c0_60, %c0_61] : memref<1x32x128xf32, #tpu.memory_space<vmem>>, vector<1x32x128xf32>
    %153 = vector.shape_cast %152 : vector<1x32x128xf32> to vector<32x128xf32>
    %cst_62 = arith.constant dense<0.000000e+00> : vector<8x128xf32>
    %154 = tpu.matmul %151, %153, %cst_62 {dimension_numbers = #tpu.dot_dimension_numbers<[1], [0], [0], [1], [0, 0, 1, 1], [], []>} : vector<8x32xf32>, vector<32x128xf32>, vector<8x128xf32> -> vector<8x128xf32>
    %c0_63 = arith.constant 0 : index
    %c0_64 = arith.constant 0 : index
    %c0_65 = arith.constant 0 : index
    %155 = vector.load %arg13[%c0_63, %c0_64, %c0_65] : memref<1x1x128xf32, #tpu.memory_space<vmem>>, vector<1x1x128xf32>
    %156 = vector.shape_cast %155 : vector<1x1x128xf32> to vector<1x128xf32>
    %157 = vector.broadcast %156 : vector<1x128xf32> to vector<8x128xf32>
    %158 = arith.addf %154, %157 : vector<8x128xf32>
    %159 = arith.mulf %158, %158 : vector<8x128xf32>
    %160 = arith.mulf %158, %159 : vector<8x128xf32>
    %cst_66 = arith.constant 4.471500e-02 : f32
    %161 = vector.broadcast %cst_66 : f32 to vector<8x128xf32>
    %162 = arith.mulf %161, %160 : vector<8x128xf32>
    %163 = arith.addf %158, %162 : vector<8x128xf32>
    %cst_67 = arith.constant 0.797884583 : f32
    %164 = vector.broadcast %cst_67 : f32 to vector<8x128xf32>
    %165 = arith.mulf %164, %163 : vector<8x128xf32>
    %166 = math.tanh %165 : vector<8x128xf32>
    %cst_68 = arith.constant 1.000000e+00 : f32
    %167 = vector.broadcast %cst_68 : f32 to vector<8x128xf32>
    %168 = arith.addf %167, %166 : vector<8x128xf32>
    %cst_69 = arith.constant 5.000000e-01 : f32
    %169 = vector.broadcast %cst_69 : f32 to vector<8x128xf32>
    %170 = arith.mulf %169, %168 : vector<8x128xf32>
    %171 = arith.mulf %158, %170 : vector<8x128xf32>
    %c0_70 = arith.constant 0 : index
    %c0_71 = arith.constant 0 : index
    %c0_72 = arith.constant 0 : index
    %172 = vector.load %arg14[%c0_70, %c0_71, %c0_72] : memref<1x128x32xf32, #tpu.memory_space<vmem>>, vector<1x128x32xf32>
    %173 = vector.shape_cast %172 : vector<1x128x32xf32> to vector<128x32xf32>
    %cst_73 = arith.constant dense<0.000000e+00> : vector<8x32xf32>
    %174 = tpu.matmul %171, %173, %cst_73 {dimension_numbers = #tpu.dot_dimension_numbers<[1], [0], [0], [1], [0, 0, 1, 1], [], []>} : vector<8x128xf32>, vector<128x32xf32>, vector<8x32xf32> -> vector<8x32xf32>
    %c0_74 = arith.constant 0 : index
    %c0_75 = arith.constant 0 : index
    %c0_76 = arith.constant 0 : index
    %175 = vector.load %arg15[%c0_74, %c0_75, %c0_76] : memref<1x1x32xf32, #tpu.memory_space<vmem>>, vector<1x1x32xf32>
    %176 = vector.shape_cast %175 : vector<1x1x32xf32> to vector<1x32xf32>
    %177 = vector.broadcast %176 : vector<1x32xf32> to vector<8x32xf32>
    %178 = arith.addf %174, %177 : vector<8x32xf32>
    %179 = arith.addf %127, %178 : vector<8x32xf32>
    %c0_77 = arith.constant 0 : index
    %c0_78 = arith.constant 0 : index
    %180 = vector.load %arg17[%c0_77, %c0_78] : memref<8x32xf32, #tpu.memory_space<vmem>>, vector<8x32xf32>
    tpu.vector_store %arg17[%c0_77, %c0_78], %179 {strides = array<i32>} : memref<8x32xf32, #tpu.memory_space<vmem>>, vector<8x32xf32>,
    %c1_i32 = arith.constant 1 : i32
    %181 = arith.cmpi eq, %arg1, %c1_i32 : i32
    %182 = arith.extui %181 : i1 to i32
    %c0_i32_79 = arith.constant 0 : i32
    %183 = arith.cmpi ne, %182, %c0_i32_79 : i32
    scf.if %183 {
      %c0_80 = arith.constant 0 : index
      %c0_81 = arith.constant 0 : index
      %184 = vector.load %arg16[%c0_80, %c0_81] : memref<8x32xf32, #tpu.memory_space<vmem>>, vector<8x32xf32>
      tpu.vector_store %arg16[%c0_80, %c0_81], %179 {strides = array<i32>} : memref<8x32xf32, #tpu.memory_space<vmem>>, vector<8x32xf32>,
    } else {
    }
    return
  }
  func.func @transform_0(%arg0: i32, %arg1: i32, %arg2: memref<2xi32, #tpu.memory_space<smem>>) -> (i32, i32) {
    %c0_i32 = arith.constant 0 : i32
    %c0_i32_0 = arith.constant 0 : i32
    return %arg0, %c0_i32 : i32, i32
  }
  func.func @transform_1(%arg0: i32, %arg1: i32, %arg2: memref<2xi32, #tpu.memory_space<smem>>) -> (i32, i32, i32) {
    %c0_i32 = arith.constant 0 : i32
    %c0_i32_0 = arith.constant 0 : i32
    %c0_i32_1 = arith.constant 0 : i32
    return %arg1, %c0_i32, %c0_i32_0 : i32, i32, i32
  }
  func.func @transform_2(%arg0: i32, %arg1: i32, %arg2: memref<2xi32, #tpu.memory_space<smem>>) -> (i32, i32, i32) {
    %c0_i32 = arith.constant 0 : i32
    %c0_i32_0 = arith.constant 0 : i32
    %c0_i32_1 = arith.constant 0 : i32
    return %arg1, %c0_i32, %c0_i32_0 : i32, i32, i32
  }
  func.func @transform_3(%arg0: i32, %arg1: i32, %arg2: memref<2xi32, #tpu.memory_space<smem>>) -> (i32, i32, i32) {
    %c0_i32 = arith.constant 0 : i32
    %c0_i32_0 = arith.constant 0 : i32
    %c0_i32_1 = arith.constant 0 : i32
    return %arg1, %c0_i32, %c0_i32_0 : i32, i32, i32
  }
  func.func @transform_4(%arg0: i32, %arg1: i32, %arg2: memref<2xi32, #tpu.memory_space<smem>>) -> (i32, i32, i32) {
    %c0_i32 = arith.constant 0 : i32
    %c0_i32_0 = arith.constant 0 : i32
    %c0_i32_1 = arith.constant 0 : i32
    return %arg1, %c0_i32, %c0_i32_0 : i32, i32, i32
  }
  func.func @transform_5(%arg0: i32, %arg1: i32, %arg2: memref<2xi32, #tpu.memory_space<smem>>) -> (i32, i32, i32) {
    %c0_i32 = arith.constant 0 : i32
    %c0_i32_0 = arith.constant 0 : i32
    %c0_i32_1 = arith.constant 0 : i32
    return %arg1, %c0_i32, %c0_i32_0 : i32, i32, i32
  }
  func.func @transform_6(%arg0: i32, %arg1: i32, %arg2: memref<2xi32, #tpu.memory_space<smem>>) -> (i32, i32, i32) {
    %c0_i32 = arith.constant 0 : i32
    %c0_i32_0 = arith.constant 0 : i32
    %c0_i32_1 = arith.constant 0 : i32
    return %arg1, %c0_i32, %c0_i32_0 : i32, i32, i32
  }
  func.func @transform_7(%arg0: i32, %arg1: i32, %arg2: memref<2xi32, #tpu.memory_space<smem>>) -> (i32, i32, i32) {
    %c0_i32 = arith.constant 0 : i32
    %c0_i32_0 = arith.constant 0 : i32
    %c0_i32_1 = arith.constant 0 : i32
    return %arg1, %c0_i32, %c0_i32_0 : i32, i32, i32
  }
  func.func @transform_8(%arg0: i32, %arg1: i32, %arg2: memref<2xi32, #tpu.memory_space<smem>>) -> (i32, i32, i32) {
    %c0_i32 = arith.constant 0 : i32
    %c0_i32_0 = arith.constant 0 : i32
    %c0_i32_1 = arith.constant 0 : i32
    return %arg1, %c0_i32, %c0_i32_0 : i32, i32, i32
  }
  func.func @transform_9(%arg0: i32, %arg1: i32, %arg2: memref<2xi32, #tpu.memory_space<smem>>) -> (i32, i32, i32) {
    %c0_i32 = arith.constant 0 : i32
    %c0_i32_0 = arith.constant 0 : i32
    %c0_i32_1 = arith.constant 0 : i32
    return %arg1, %c0_i32, %c0_i32_0 : i32, i32, i32
  }
  func.func @transform_10(%arg0: i32, %arg1: i32, %arg2: memref<2xi32, #tpu.memory_space<smem>>) -> (i32, i32, i32) {
    %c0_i32 = arith.constant 0 : i32
    %c0_i32_0 = arith.constant 0 : i32
    %c0_i32_1 = arith.constant 0 : i32
    return %arg1, %c0_i32, %c0_i32_0 : i32, i32, i32
  }
  func.func @transform_11(%arg0: i32, %arg1: i32, %arg2: memref<2xi32, #tpu.memory_space<smem>>) -> (i32, i32, i32) {
    %c0_i32 = arith.constant 0 : i32
    %c0_i32_0 = arith.constant 0 : i32
    %c0_i32_1 = arith.constant 0 : i32
    return %arg1, %c0_i32, %c0_i32_0 : i32, i32, i32
  }
  func.func @transform_12(%arg0: i32, %arg1: i32, %arg2: memref<2xi32, #tpu.memory_space<smem>>) -> (i32, i32, i32) {
    %c0_i32 = arith.constant 0 : i32
    %c0_i32_0 = arith.constant 0 : i32
    %c0_i32_1 = arith.constant 0 : i32
    return %arg1, %c0_i32, %c0_i32_0 : i32, i32, i32
  }
  func.func @transform_13(%arg0: i32, %arg1: i32, %arg2: memref<2xi32, #tpu.memory_space<smem>>) -> (i32, i32) {
    %c0_i32 = arith.constant 0 : i32
    %c0_i32_0 = arith.constant 0 : i32
    return %arg0, %c0_i32 : i32, i32
  }
}

module attributes {stable_mosaic.version = 11 : i64} {
  func.func @_head_loss_kernel(%arg0: memref<2xi32, #tpu.memory_space<smem>>, %arg1: memref<1xf32, #tpu.memory_space<smem>>, %arg2: memref<16x32xf32, #tpu.memory_space<vmem>>, %arg3: memref<16x32xf32, #tpu.memory_space<vmem>>, %arg4: memref<1x32xf32, #tpu.memory_space<vmem>>, %arg5: memref<1x32xf32, #tpu.memory_space<vmem>>, %arg6: memref<32x16xf32, #tpu.memory_space<vmem>>, %arg7: memref<1x32xf32, #tpu.memory_space<vmem>>, %arg8: memref<1x32xf32, #tpu.memory_space<vmem>>, %arg9: memref<32x16xf32, #tpu.memory_space<vmem>>, %arg10: memref<1x1xf32, #tpu.memory_space<vmem>>) attributes {dimension_semantics = [], scalar_prefetch = 0 : i64, scratch_operands = 0 : i64, tpu.core_type = #tpu.core_type<tc>} {
    %c0 = arith.constant 0 : index
    %c0_0 = arith.constant 0 : index
    %0 = vector.load %arg2[%c0, %c0_0] : memref<16x32xf32, #tpu.memory_space<vmem>>, vector<1x32xf32>
    %c8 = arith.constant 8 : index
    %c0_1 = arith.constant 0 : index
    %1 = vector.load %arg2[%c8, %c0_1] : memref<16x32xf32, #tpu.memory_space<vmem>>, vector<1x32xf32>
    %2 = tpu.concatenate %0, %1 in 0 : vector<1x32xf32>, vector<1x32xf32> -> vector<2x32xf32>
    %c0_2 = arith.constant 0 : index
    %3 = memref.load %arg0[%c0_2] : memref<2xi32, #tpu.memory_space<smem>>
    %4 = arith.index_cast %3 : i32 to index
    %c0_3 = arith.constant 0 : index
    %5 = vector.load %arg3[%4, %c0_3] : memref<16x32xf32, #tpu.memory_space<vmem>>, vector<1x32xf32>
    %c1 = arith.constant 1 : index
    %6 = memref.load %arg0[%c1] : memref<2xi32, #tpu.memory_space<smem>>
    %7 = arith.index_cast %6 : i32 to index
    %c0_4 = arith.constant 0 : index
    %8 = vector.load %arg3[%7, %c0_4] : memref<16x32xf32, #tpu.memory_space<vmem>>, vector<1x32xf32>
    %9 = tpu.concatenate %5, %8 in 0 : vector<1x32xf32>, vector<1x32xf32> -> vector<2x32xf32>
    %c0_5 = arith.constant 0 : index
    %c0_6 = arith.constant 0 : index
    %10 = vector.load %arg4[%c0_5, %c0_6] : memref<1x32xf32, #tpu.memory_space<vmem>>, vector<1x32xf32>
    %c0_7 = arith.constant 0 : index
    %c0_8 = arith.constant 0 : index
    %11 = vector.load %arg5[%c0_7, %c0_8] : memref<1x32xf32, #tpu.memory_space<vmem>>, vector<1x32xf32>
    %cst = arith.constant dense<0.000000e+00> : vector<2xf32>
    %12 = vector.multi_reduction <add>, %2, %cst [1] : vector<2x32xf32> to vector<2xf32>
    %13 = vector.shape_cast %12 : vector<2xf32> to vector<2x1xf32>
    %cst_9 = arith.constant 3.200000e+01 : f32
    %14 = vector.broadcast %cst_9 : f32 to vector<2x1xf32>
    %15 = arith.divf %13, %14 : vector<2x1xf32>
    %16 = vector.broadcast %15 : vector<2x1xf32> to vector<2x32xf32>
    %17 = arith.subf %2, %16 : vector<2x32xf32>
    %18 = arith.mulf %17, %17 : vector<2x32xf32>
    %cst_10 = arith.constant dense<0.000000e+00> : vector<2xf32>
    %19 = vector.multi_reduction <add>, %18, %cst_10 [1] : vector<2x32xf32> to vector<2xf32>
    %20 = vector.shape_cast %19 : vector<2xf32> to vector<2x1xf32>
    %cst_11 = arith.constant 3.200000e+01 : f32
    %21 = vector.broadcast %cst_11 : f32 to vector<2x1xf32>
    %22 = arith.divf %20, %21 : vector<2x1xf32>
    %cst_12 = arith.constant 9.99999974E-6 : f32
    %23 = vector.broadcast %cst_12 : f32 to vector<2x1xf32>
    %24 = arith.addf %22, %23 : vector<2x1xf32>
    %25 = math.rsqrt %24 : vector<2x1xf32>
    %26 = vector.broadcast %25 : vector<2x1xf32> to vector<2x32xf32>
    %27 = arith.mulf %17, %26 : vector<2x32xf32>
    %28 = vector.broadcast %10 : vector<1x32xf32> to vector<2x32xf32>
    %29 = arith.mulf %27, %28 : vector<2x32xf32>
    %30 = vector.broadcast %11 : vector<1x32xf32> to vector<2x32xf32>
    %31 = arith.addf %29, %30 : vector<2x32xf32>
    %c0_13 = arith.constant 0 : index
    %c0_14 = arith.constant 0 : index
    %32 = vector.load %arg6[%c0_13, %c0_14] : memref<32x16xf32, #tpu.memory_space<vmem>>, vector<32x16xf32>
    %cst_15 = arith.constant dense<0.000000e+00> : vector<2x16xf32>
    %33 = tpu.matmul %31, %32, %cst_15 {dimension_numbers = #tpu.dot_dimension_numbers<[1], [0], [0], [1], [0, 0, 1, 1], [], []>} : vector<2x32xf32>, vector<32x16xf32>, vector<2x16xf32> -> vector<2x16xf32>
    %c0_16 = arith.constant 0 : index
    %c0_17 = arith.constant 0 : index
    %34 = vector.load %arg7[%c0_16, %c0_17] : memref<1x32xf32, #tpu.memory_space<vmem>>, vector<1x32xf32>
    %c0_18 = arith.constant 0 : index
    %c0_19 = arith.constant 0 : index
    %35 = vector.load %arg8[%c0_18, %c0_19] : memref<1x32xf32, #tpu.memory_space<vmem>>, vector<1x32xf32>
    %cst_20 = arith.constant dense<0.000000e+00> : vector<2xf32>
    %36 = vector.multi_reduction <add>, %9, %cst_20 [1] : vector<2x32xf32> to vector<2xf32>
    %37 = vector.shape_cast %36 : vector<2xf32> to vector<2x1xf32>
    %cst_21 = arith.constant 3.200000e+01 : f32
    %38 = vector.broadcast %cst_21 : f32 to vector<2x1xf32>
    %39 = arith.divf %37, %38 : vector<2x1xf32>
    %40 = vector.broadcast %39 : vector<2x1xf32> to vector<2x32xf32>
    %41 = arith.subf %9, %40 : vector<2x32xf32>
    %42 = arith.mulf %41, %41 : vector<2x32xf32>
    %cst_22 = arith.constant dense<0.000000e+00> : vector<2xf32>
    %43 = vector.multi_reduction <add>, %42, %cst_22 [1] : vector<2x32xf32> to vector<2xf32>
    %44 = vector.shape_cast %43 : vector<2xf32> to vector<2x1xf32>
    %cst_23 = arith.constant 3.200000e+01 : f32
    %45 = vector.broadcast %cst_23 : f32 to vector<2x1xf32>
    %46 = arith.divf %44, %45 : vector<2x1xf32>
    %cst_24 = arith.constant 9.99999974E-6 : f32
    %47 = vector.broadcast %cst_24 : f32 to vector<2x1xf32>
    %48 = arith.addf %46, %47 : vector<2x1xf32>
    %49 = math.rsqrt %48 : vector<2x1xf32>
    %50 = vector.broadcast %49 : vector<2x1xf32> to vector<2x32xf32>
    %51 = arith.mulf %41, %50 : vector<2x32xf32>
    %52 = vector.broadcast %34 : vector<1x32xf32> to vector<2x32xf32>
    %53 = arith.mulf %51, %52 : vector<2x32xf32>
    %54 = vector.broadcast %35 : vector<1x32xf32> to vector<2x32xf32>
    %55 = arith.addf %53, %54 : vector<2x32xf32>
    %c0_25 = arith.constant 0 : index
    %c0_26 = arith.constant 0 : index
    %56 = vector.load %arg9[%c0_25, %c0_26] : memref<32x16xf32, #tpu.memory_space<vmem>>, vector<32x16xf32>
    %cst_27 = arith.constant dense<0.000000e+00> : vector<2x16xf32>
    %57 = tpu.matmul %55, %56, %cst_27 {dimension_numbers = #tpu.dot_dimension_numbers<[1], [0], [0], [1], [0, 0, 1, 1], [], []>} : vector<2x32xf32>, vector<32x16xf32>, vector<2x16xf32> -> vector<2x16xf32>
    %58 = arith.mulf %33, %33 : vector<2x16xf32>
    %cst_28 = arith.constant dense<0.000000e+00> : vector<2xf32>
    %59 = vector.multi_reduction <add>, %58, %cst_28 [1] : vector<2x16xf32> to vector<2xf32>
    %60 = vector.shape_cast %59 : vector<2xf32> to vector<2x1xf32>
    %cst_29 = arith.constant 1.000000e-24 : f32
    %61 = vector.broadcast %cst_29 : f32 to vector<2x1xf32>
    %62 = arith.addf %60, %61 : vector<2x1xf32>
    %63 = math.rsqrt %62 : vector<2x1xf32>
    %64 = vector.broadcast %63 : vector<2x1xf32> to vector<2x16xf32>
    %65 = arith.mulf %33, %64 : vector<2x16xf32>
    %66 = arith.mulf %57, %57 : vector<2x16xf32>
    %cst_30 = arith.constant dense<0.000000e+00> : vector<2xf32>
    %67 = vector.multi_reduction <add>, %66, %cst_30 [1] : vector<2x16xf32> to vector<2xf32>
    %68 = vector.shape_cast %67 : vector<2xf32> to vector<2x1xf32>
    %cst_31 = arith.constant 1.000000e-24 : f32
    %69 = vector.broadcast %cst_31 : f32 to vector<2x1xf32>
    %70 = arith.addf %68, %69 : vector<2x1xf32>
    %71 = math.rsqrt %70 : vector<2x1xf32>
    %72 = vector.broadcast %71 : vector<2x1xf32> to vector<2x16xf32>
    %73 = arith.mulf %57, %72 : vector<2x16xf32>
    %cst_32 = arith.constant dense<0.000000e+00> : vector<2x2xf32>
    %74 = tpu.matmul %65, %73, %cst_32 {dimension_numbers = #tpu.dot_dimension_numbers<[1], [1], [0], [0], [0, 0, 1, 0], [], []>} : vector<2x16xf32>, vector<2x16xf32>, vector<2x2xf32> -> vector<2x2xf32>
    %c0_33 = arith.constant 0 : index
    %75 = memref.load %arg1[%c0_33] : memref<1xf32, #tpu.memory_space<smem>>
    %76 = vector.broadcast %75 : f32 to vector<1x1xf32>
    %77 = math.exp %76 : vector<1x1xf32>
    %78 = vector.broadcast %77 : vector<1x1xf32> to vector<2x2xf32>
    %79 = arith.mulf %74, %78 : vector<2x2xf32>
    %80 = tpu.iota {dimensions = array<i32: 0>} : vector<2x2xi32>
    %81 = tpu.iota {dimensions = array<i32: 1>} : vector<2x2xi32>
    %82 = arith.cmpi eq, %80, %81 : vector<2x2xi32>
    %cst_34 = arith.constant 0.000000e+00 : f32
    %83 = vector.broadcast %cst_34 : f32 to vector<2x2xf32>
    %84 = arith.select %82, %79, %83 : vector<2x2xi1>, vector<2x2xf32>
    %cst_35 = arith.constant dense<0.000000e+00> : vector<2xf32>
    %85 = vector.multi_reduction <add>, %84, %cst_35 [1] : vector<2x2xf32> to vector<2xf32>
    %86 = vector.shape_cast %85 : vector<2xf32> to vector<2x1xf32>
    %cst_36 = arith.constant 0.000000e+00 : f32
    %87 = vector.broadcast %cst_36 : f32 to vector<2x2xf32>
    %88 = arith.select %82, %79, %87 : vector<2x2xi1>, vector<2x2xf32>
    %cst_37 = arith.constant dense<0.000000e+00> : vector<2xf32>
    %89 = vector.multi_reduction <add>, %88, %cst_37 [0] : vector<2x2xf32> to vector<2xf32>
    %90 = vector.shape_cast %89 : vector<2xf32> to vector<1x2xf32>
    %cst_38 = arith.constant dense<0xFF800000> : vector<2xf32>
    %91 = vector.multi_reduction <maximumf>, %79, %cst_38 [1] : vector<2x2xf32> to vector<2xf32>
    %92 = vector.shape_cast %91 : vector<2xf32> to vector<2x1xf32>
    %93 = vector.broadcast %92 : vector<2x1xf32> to vector<2x2xf32>
    %94 = arith.subf %79, %93 : vector<2x2xf32>
    %95 = math.exp %94 : vector<2x2xf32>
    %cst_39 = arith.constant dense<0.000000e+00> : vector<2xf32>
    %96 = vector.multi_reduction <add>, %95, %cst_39 [1] : vector<2x2xf32> to vector<2xf32>
    %97 = vector.shape_cast %96 : vector<2xf32> to vector<2x1xf32>
    %98 = math.log %97 : vector<2x1xf32>
    %99 = arith.addf %92, %98 : vector<2x1xf32>
    %cst_40 = arith.constant dense<0xFF800000> : vector<2xf32>
    %100 = vector.multi_reduction <maximumf>, %79, %cst_40 [0] : vector<2x2xf32> to vector<2xf32>
    %101 = vector.shape_cast %100 : vector<2xf32> to vector<1x2xf32>
    %102 = vector.broadcast %101 : vector<1x2xf32> to vector<2x2xf32>
    %103 = arith.subf %79, %102 : vector<2x2xf32>
    %104 = math.exp %103 : vector<2x2xf32>
    %cst_41 = arith.constant dense<0.000000e+00> : vector<2xf32>
    %105 = vector.multi_reduction <add>, %104, %cst_41 [0] : vector<2x2xf32> to vector<2xf32>
    %106 = vector.shape_cast %105 : vector<2xf32> to vector<1x2xf32>
    %107 = math.log %106 : vector<1x2xf32>
    %108 = arith.addf %101, %107 : vector<1x2xf32>
    %109 = arith.subf %99, %86 : vector<2x1xf32>
    %cst_42 = arith.constant dense<0.000000e+00> : vector<1xf32>
    %110 = vector.multi_reduction <add>, %109, %cst_42 [0] : vector<2x1xf32> to vector<1xf32>
    %111 = vector.shape_cast %110 : vector<1xf32> to vector<1x1xf32>
    %cst_43 = arith.constant 2.000000e+00 : f32
    %112 = vector.broadcast %cst_43 : f32 to vector<1x1xf32>
    %113 = arith.divf %111, %112 : vector<1x1xf32>
    %114 = arith.subf %108, %90 : vector<1x2xf32>
    %cst_44 = arith.constant dense<0.000000e+00> : vector<1xf32>
    %115 = vector.multi_reduction <add>, %114, %cst_44 [1] : vector<1x2xf32> to vector<1xf32>
    %116 = vector.shape_cast %115 : vector<1xf32> to vector<1x1xf32>
    %cst_45 = arith.constant 2.000000e+00 : f32
    %117 = vector.broadcast %cst_45 : f32 to vector<1x1xf32>
    %118 = arith.divf %116, %117 : vector<1x1xf32>
    %119 = arith.addf %118, %113 : vector<1x1xf32>
    %cst_46 = arith.constant 5.000000e-01 : f32
    %120 = vector.broadcast %cst_46 : f32 to vector<1x1xf32>
    %121 = arith.mulf %120, %119 : vector<1x1xf32>
    %c0_47 = arith.constant 0 : index
    %c0_48 = arith.constant 0 : index
    %122 = vector.load %arg10[%c0_47, %c0_48] : memref<1x1xf32, #tpu.memory_space<vmem>>, vector<1x1xf32>
    tpu.vector_store %arg10[%c0_47, %c0_48], %121 {strides = array<i32>} : memref<1x1xf32, #tpu.memory_space<vmem>>, vector<1x1xf32>,
    return
  }
}

</mosaic_0001>

<llo_original>
// kernel: clip_forward.4
$region0: #{clip_forward.4}
  #allocation0 [shape = 'u32[]', space=smem, size = 0x4, offset = 0x4, fixed_abs, tag = 'smem constant byte address 0x4 - core index']
  #allocation1 [shape = 'u32[144,128]{1,0:T(1,128)}', space=vmem, size = 0x12000, scoped, tag = 'internal scratch']
  %s0 = inlined_call_operand.vmem [shape: f32[8,256], index: 0, kind: input, shape index: {}]
  %s1 = inlined_call_operand.vmem [shape: f32[256,32], index: 1, kind: input, shape index: {}]
  %s2 = inlined_call_operand.vmem [shape: f32[1,32], index: 2, kind: input, shape index: {}]
  %s3 = inlined_call_operand.vmem [shape: f32[1,32], index: 3, kind: input, shape index: {}]
  %s4 = inlined_call_operand.vmem [shape: f32[5,32], index: 4, kind: input, shape index: {}]
  %s5 = inlined_call_operand.vmem [shape: f32[1,32], index: 5, kind: input, shape index: {}]
  %s6 = inlined_call_operand.vmem [shape: f32[1,32], index: 6, kind: input, shape index: {}]
  %s7 = inlined_call_operand.vmem [shape: f32[16,32], index: 7, kind: output, shape index: {}]
  %s8 = sld [smem:[#allocation0]]
  $region38: #{clip_forward.4} parent=0
    _
  %s10 = ssub.s32 1, %s8
  %s11 = scalar_select 0, %s10, %s8
  // Predicated region
  $region2: #{clip_forward.4} parent=0 // pred_check
    _
  $region3: #{clip_forward.4} parent=0 // pred_check_branch
    %13 = sbr.rel (0) target = $region5
  $region4: #{clip_forward.4} parent=0 // pred_region
    _
  $region5: #{clip_forward.4} parent=0 // pred_fallthru
    _
  // Predicated region
  $region6: #{clip_forward.4} parent=0 // pred_check
    _
  $region7: #{clip_forward.4} parent=0 // pred_check_branch
    %15 = sbr.rel (0) target = $region9
  $region8: #{clip_forward.4} parent=0 // pred_region
    _
  $region9: #{clip_forward.4} parent=0 // pred_fallthru
    _
  // Predicated region
  $region10: #{clip_forward.4} parent=0 // pred_check
    _
  $region11: #{clip_forward.4} parent=0 // pred_check_branch
    %17 = sbr.rel (0) target = $region13
  $region12: #{clip_forward.4} parent=0 // pred_region
    _
  $region13: #{clip_forward.4} parent=0 // pred_fallthru
    _
  // Predicated region
  $region14: #{clip_forward.4} parent=0 // pred_check
    _
  $region15: #{clip_forward.4} parent=0 // pred_check_branch
    %19 = sbr.rel (0) target = $region17
  $region16: #{clip_forward.4} parent=0 // pred_region
    _
  $region17: #{clip_forward.4} parent=0 // pred_fallthru
    _
  // Predicated region
  $region18: #{clip_forward.4} parent=0 // pred_check
    _
  $region19: #{clip_forward.4} parent=0 // pred_check_branch
    %21 = sbr.rel (0) target = $region21
  $region20: #{clip_forward.4} parent=0 // pred_region
    _
  $region21: #{clip_forward.4} parent=0 // pred_fallthru
    _
  // Predicated region
  $region22: #{clip_forward.4} parent=0 // pred_check
    _
  $region23: #{clip_forward.4} parent=0 // pred_check_branch
    %23 = sbr.rel (0) target = $region25
  $region24: #{clip_forward.4} parent=0 // pred_region
    _
  $region25: #{clip_forward.4} parent=0 // pred_fallthru
    _
  // Predicated region
  $region26: #{clip_forward.4} parent=0 // pred_check
    _
  $region27: #{clip_forward.4} parent=0 // pred_check_branch
    %25 = sbr.rel (0) target = $region29
  $region28: #{clip_forward.4} parent=0 // pred_region
    _
  $region29: #{clip_forward.4} parent=0 // pred_fallthru
    _
  %v26 = vld [vmem:[%s0] sm:$0xff]
  %v27 = vld [vmem:[%s0 + $0x8] sm:$0xff]
  %v28 = vld [vmem:[%s1] sm:$0xff]
  %v29 = vld [vmem:[%s1 + $0x8] sm:$0xff]
  %v30 = vld [vmem:[%s1 + $0x10] sm:$0xff]
  %v31 = vld [vmem:[%s1 + $0x18] sm:$0xff]
  %v32 = vld [vmem:[%s1 + $0x20] sm:$0xff]
  %v33 = vld [vmem:[%s1 + $0x28] sm:$0xff]
  %v34 = vld [vmem:[%s1 + $0x30] sm:$0xff]
  %v35 = vld [vmem:[%s1 + $0x38] sm:$0xff]
  %v36 = vld [vmem:[%s1 + $0x40] sm:$0xff]
  %v37 = vld [vmem:[%s1 + $0x48] sm:$0xff]
  %v38 = vld [vmem:[%s1 + $0x50] sm:$0xff]
  %v39 = vld [vmem:[%s1 + $0x58] sm:$0xff]
  %v40 = vld [vmem:[%s1 + $0x60] sm:$0xff]
  %v41 = vld [vmem:[%s1 + $0x68] sm:$0xff]
  %v42 = vld [vmem:[%s1 + $0x70] sm:$0xff]
  %v43 = vld [vmem:[%s1 + $0x78] sm:$0xff]
  %v44 = vld [vmem:[%s1 + $0x80] sm:$0xff]
  %v45 = vld [vmem:[%s1 + $0x88] sm:$0xff]
  %v46 = vld [vmem:[%s1 + $0x90] sm:$0xff]
  %v47 = vld [vmem:[%s1 + $0x98] sm:$0xff]
  %v48 = vld [vmem:[%s1 + $0xa0] sm:$0xff]
  %v49 = vld [vmem:[%s1 + $0xa8] sm:$0xff]
  %v50 = vld [vmem:[%s1 + $0xb0] sm:$0xff]
  %v51 = vld [vmem:[%s1 + $0xb8] sm:$0xff]
  %v52 = vld [vmem:[%s1 + $0xc0] sm:$0xff]
  %v53 = vld [vmem:[%s1 + $0xc8] sm:$0xff]
  %v54 = vld [vmem:[%s1 + $0xd0] sm:$0xff]
  %v55 = vld [vmem:[%s1 + $0xd8] sm:$0xff]
  %v56 = vld [vmem:[%s1 + $0xe0] sm:$0xff]
  %v57 = vld [vmem:[%s1 + $0xe8] sm:$0xff]
  %v58 = vld [vmem:[%s1 + $0xf0] sm:$0xff]
  %v59 = vld [vmem:[%s1 + $0xf8] sm:$0xff]
  %v60 = vld [vmem:[%s2] sm:$0x1]
  %v62 = vlaneseq
  %v63 = vshrl.u32 %v62, 7
  %v64 = vsub.s32 0, %v63
  %v65 = vrot.slane %v60, %v64
  %67 = vmatprep.subr.mxu0 0.0
  %68 = vmatpush1.msra.mxu0 %v28
  %69 = vmatprep.subr.mxu0 0.0
  %70 = vmatpush1.msra.mxu0 %v29
  %71 = vmatprep.subr.mxu0 0.0
  %72 = vmatpush1.msra.mxu0 %v30
  %73 = vmatprep.subr.mxu0 0.0
  %74 = vmatpush1.msra.mxu0 %v31
  %75 = vmatprep.subr.mxu0 0.0
  %76 = vmatpush1.msra.mxu0 %v32
  %77 = vmatprep.subr.mxu0 0.0
  %78 = vmatpush1.msra.mxu0 %v33
  %79 = vmatprep.subr.mxu0 0.0
  %80 = vmatpush1.msra.mxu0 %v34
  %81 = vmatprep.subr.mxu0 0.0
  %82 = vmatpush1.msra.mxu0 %v35
  %83 = vmatprep.subr.mxu0 0.0
  %84 = vmatpush1.msra.mxu0 %v36
  %85 = vmatprep.subr.mxu0 0.0
  %86 = vmatpush1.msra.mxu0 %v37
  %87 = vmatprep.subr.mxu0 0.0
  %88 = vmatpush1.msra.mxu0 %v38
  %89 = vmatprep.subr.mxu0 0.0
  %90 = vmatpush1.msra.mxu0 %v39
  %91 = vmatprep.subr.mxu0 0.0
  %92 = vmatpush1.msra.mxu0 %v40
  %93 = vmatprep.subr.mxu0 0.0
  %94 = vmatpush1.msra.mxu0 %v41
  %95 = vmatprep.subr.mxu0 0.0
  %96 = vmatpush1.msra.mxu0 %v42
  %97 = vmatprep.subr.mxu0 0.0
  %98 = vmatpush1.msra.mxu0 %v43
  %99 = vmatprep.subr.mxu0 0.0
  %100 = vmatpush1.msra.mxu0 %v44
  %101 = vmatprep.subr.mxu0 0.0
  %102 = vmatpush1.msra.mxu0 %v45
  %103 = vmatprep.subr.mxu0 0.0
  %104 = vmatpush1.msra.mxu0 %v46
  %105 = vmatprep.subr.mxu0 0.0
  %106 = vmatpush1.msra.mxu0 %v47
  %107 = vmatprep.subr.mxu0 0.0
  %108 = vmatpush1.msra.mxu0 %v48
  %109 = vmatprep.subr.mxu0 0.0
  %110 = vmatpush1.msra.mxu0 %v49
  %111 = vmatprep.subr.mxu0 0.0
  %112 = vmatpush1.msra.mxu0 %v50
  %113 = vmatprep.subr.mxu0 0.0
  %114 = vmatpush1.msra.mxu0 %v51
  %115 = vmatprep.subr.mxu0 0.0
  %116 = vmatpush1.msra.mxu0 %v52
  %117 = vmatprep.subr.mxu0 0.0
  %118 = vmatpush1.msra.mxu0 %v53
  %119 = vmatprep.subr.mxu0 0.0
  %120 = vmatpush1.msra.mxu0 %v54
  %121 = vmatprep.subr.mxu0 0.0
  %122 = vmatpush1.msra.mxu0 %v55
  %123 = vmatprep.subr.mxu0 0.0
  %124 = vmatpush1.msra.mxu0 %v56
  %125 = vmatprep.subr.mxu0 0.0
  %126 = vmatpush1.msra.mxu0 %v57
  %127 = vmatprep.subr.mxu0 0.0
  %128 = vmatpush1.msra.mxu0 %v58
  %129 = vmatprep.subr.mxu0 0.0
  %130 = vmatpush1.msra.mxu0 %v59
  %131 = vmatprep.mubr.f32.mxu0 %v27
  %132 = vmatmul.mubr.f32.gmra.mrb[0].mxu0 %v26
  %v133 = vpop.f32.mrb[0].mxu0
  %v134 = vadd.f32 %v65, %v133
  %v135 = vpop.f32.mrb[0].mxu0
  %136 = vdwg.mxu0
  %v137 = vld [vmem:[%s4] sm:$0x1f]
  %v138 = vld [vmem:[%s3] sm:$0x1]
  %v139 = vld [vmem:[%s5] sm:$0x1]
  %v140 = vld [vmem:[%s6] sm:$0x1]
  %v142 = vrot.slane %v134, 7
  %vm144 = vcmask 1040384
  %v145 = vsel %vm144, %v138, %v142
  %v146 = vadd.f32 %v145, %v137
  %vm147 = vcmask 258048
  %v148 = vsel %vm147, %v146, 0.0
  %149 = vadd.xlane.f32.xlu0 %v148
  %v150 = vpop.xlane.xlu0 %149
  %v151 = vrcp.pop 32.0
  %v152 = vmul.f32 %v150, %v151
  %v153 = vsub.f32 %v146, %v152
  %v154 = vmul.f32 %v153, %v153
  %v155 = vsel %vm147, %v154, 0.0
  %156 = vadd.xlane.f32.xlu0 %v155
  %v157 = vpop.xlane.xlu0 %156
  %v158 = vmul.f32 %v157, %v151
  %v159 = vadd.f32 %v158, 1e-05
  %v160 = vrsqrt.pop %v159
  %v161 = vmul.f32 %v153, %v160
  %v163 = vlaneseq
  %v164 = vshrl.u32 %v163, 7
  %v165 = vsub.s32 0, %v164
  %v166 = vrot.slane %v139, %v165
  %v168 = vmul.f32 %v161, %v166
  %v170 = vlaneseq
  %v171 = vshrl.u32 %v170, 7
  %v172 = vsub.s32 0, %v171
  %v173 = vrot.slane %v140, %v172
  %v175 = vadd.f32 %v168, %v173
  %v176 = vrot.slane %v134, 3
  %v178 = vsel %vm144, %v138, %v176
  %v179 = vadd.f32 %v178, %v137
  %v180 = vsel %vm147, %v179, 0.0
  %181 = vadd.xlane.f32.xlu0 %v180
  %v182 = vpop.xlane.xlu0 %181
  %v183 = vmul.f32 %v182, %v151
  %v184 = vsub.f32 %v179, %v183
  %v185 = vmul.f32 %v184, %v184
  %v186 = vsel %vm147, %v185, 0.0
  %187 = vadd.xlane.f32.xlu0 %v186
  %v188 = vpop.xlane.xlu0 %187
  %v189 = vmul.f32 %v188, %v151
  %v190 = vadd.f32 %v189, 1e-05
  %v191 = vrsqrt.pop %v190
  %v192 = vmul.f32 %v184, %v191
  %v193 = vmul.f32 %v192, %v166
  %v194 = vadd.f32 %v193, %v173
  %vm195 = vcmask 1044480
  %v196 = vsel %vm195, %v175, 0.0
  %v197 = vsel %vm195, %v194, 0.0
  %vm198 = vcmask 261120
  %199 = vst.msk [vmem:[%s7] sm:$0xff] %vm198, %v196
  %200 = vst.msk [vmem:[%s7 + $0x8] sm:$0xff] %vm198, %v197
  // Predicated region
  $region30: #{clip_forward.4} parent=0 // pred_check
    _
  $region31: #{clip_forward.4} parent=0 // pred_check_branch
    %202 = sbr.rel (0) target = $region33
  $region32: #{clip_forward.4} parent=0 // pred_region
    _
  $region33: #{clip_forward.4} parent=0 // pred_fallthru
    _
  // Predicated region
  $region34: #{clip_forward.4} parent=0 // pred_check
    _
  $region35: #{clip_forward.4} parent=0 // pred_check_branch
    %204 = sbr.rel (0) target = $region37
  $region36: #{clip_forward.4} parent=0 // pred_region
    _
  $region37: #{clip_forward.4} parent=0 // pred_fallthru
    _

// kernel: clip_forward.5
$region0: #{clip_forward.5}
  #allocation0 [shape = 'u32[]', space=smem, size = 0x4, offset = 0x4, fixed_abs, tag = 'smem constant byte address 0x4 - core index']
  #allocation1 [shape = 'u32[144,128]{1,0:T(1,128)}', space=vmem, size = 0x12000, scoped, tag = 'internal scratch']
  #allocation2 [shape = 'f32[8,32]{1,0:T(8,128)}', space=vmem, size = 0x1000, scoped, tag = 'scratch operand']
  #allocation3 [shape = 's32[1]{0}', space=sflag, size = 0x4, scoped, tag = 'scoped memory for clip_forward.5']
  #allocation4 [shape = 'u8[512]{0}', space=smem, size = 0x200, scoped, tag = 'prefetched SMEM operand 0']
  %s0 = inlined_call_operand.vmem [shape: s32[2], index: 0, kind: input, shape index: {}]
  %s1 = inlined_call_operand.vmem [shape: f32[16,32], index: 1, kind: input, shape index: {}]
  %s2 = inlined_call_operand.vmem [shape: f32[2,1,32], index: 2, kind: input, shape index: {}]
  %s3 = inlined_call_operand.vmem [shape: f32[2,1,32], index: 3, kind: input, shape index: {}]
  %s4 = inlined_call_operand.vmem [shape: f32[2,32,96], index: 4, kind: input, shape index: {}]
  %s5 = inlined_call_operand.vmem [shape: f32[2,1,96], index: 5, kind: input, shape index: {}]
  %s6 = inlined_call_operand.vmem [shape: f32[2,32,32], index: 6, kind: input, shape index: {}]
  %s7 = inlined_call_operand.vmem [shape: f32[2,1,32], index: 7, kind: input, shape index: {}]
  %s8 = inlined_call_operand.vmem [shape: f32[2,1,32], index: 8, kind: input, shape index: {}]
  %s9 = inlined_call_operand.vmem [shape: f32[2,1,32], index: 9, kind: input, shape index: {}]
  %s10 = inlined_call_operand.vmem [shape: f32[2,32,128], index: 10, kind: input, shape index: {}]
  %s11 = inlined_call_operand.vmem [shape: f32[2,1,128], index: 11, kind: input, shape index: {}]
  %s12 = inlined_call_operand.vmem [shape: f32[2,128,32], index: 12, kind: input, shape index: {}]
  %s13 = inlined_call_operand.vmem [shape: f32[2,1,32], index: 13, kind: input, shape index: {}]
  %s14 = inlined_call_operand.vmem [shape: f32[16,32], index: 14, kind: output, shape index: {}]
  %s15 = sld [smem:[#allocation0]]
  $region93: #{clip_forward.5} parent=0
    _
  %s17 = ssub.s32 1, %s15
  %s18 = scalar_select 0, %s17, %s15
  %s19 = sshll.u32 %s0, 4
  %s20 = int_to_ptr.vmem [resolvable:$true] %s19
  %22 = dma.vmem_to_smem %s20, 16, [#allocation4], [#allocation3]
  %23 = dma.done [#allocation3], 16
  %24 = sfence
  loop: start=0, step=1, limit=6
  $region2: #{clip_forward.5} parent=0 // loop_pre_header
    _
  $region3: #{clip_forward.5} parent=0 // loop_header
    %s26 = sphi 0, %s30
    %p27 = scmp.ge.s32.totalorder %s26, 6
    %s33 = sphi 0, %s45
    %s34 = sphi 0, %s41
    %s35 = sphi 0, %s33
    %s36 = sphi 0, %s34
    %s37 = sphi 0, %s35
    %s38 = sphi 0, %s36
    %s48 = sphi 0, %s50
    %s51 = sphi 0, %s48
    %s52 = sphi 0, %s51
    %s68 = sphi 0, %s52
    %s74 = sphi 0, %s76
    %s77 = sphi 0, %s74
    %s78 = sphi 0, %s77
    %s94 = sphi 0, %s78
    %s100 = sphi 0, %s102
    %s103 = sphi 0, %s100
    %s104 = sphi 0, %s103
    %s120 = sphi 0, %s104
    %s126 = sphi 0, %s128
    %s129 = sphi 0, %s126
    %s130 = sphi 0, %s129
    %s146 = sphi 0, %s130
    %s152 = sphi 0, %s154
    %s155 = sphi 0, %s152
    %s156 = sphi 0, %s155
    %s172 = sphi 0, %s156
    %s178 = sphi 0, %s180
    %s181 = sphi 0, %s178
    %s182 = sphi 0, %s181
    %s198 = sphi 0, %s182
    %s204 = sphi 0, %s206
    %s207 = sphi 0, %s204
    %s208 = sphi 0, %s207
    %s224 = sphi 0, %s208
    %s230 = sphi 0, %s232
    %s233 = sphi 0, %s230
    %s234 = sphi 0, %s233
    %s250 = sphi 0, %s234
    %s256 = sphi 0, %s258
    %s259 = sphi 0, %s256
    %s260 = sphi 0, %s259
    %s276 = sphi 0, %s260
    %s282 = sphi 0, %s284
    %s285 = sphi 0, %s282
    %s286 = sphi 0, %s285
    %s302 = sphi 0, %s286
    %s308 = sphi 0, %s310
    %s311 = sphi 0, %s308
    %s312 = sphi 0, %s311
    %s328 = sphi 0, %s312
    %s334 = sphi 0, %s336
    %s337 = sphi 0, %s334
    %s338 = sphi 0, %s337
    %s354 = sphi 0, %s338
    %s360 = sphi 0, %s362
    %s363 = sphi 0, %s360
    %s364 = sphi 0, %s363
    %s380 = sphi 0, %s364
    %s386 = sphi 0, %s388
    %s389 = sphi 0, %s386
    %s390 = sphi 0, %s389
    %s406 = sphi 0, %s390
  $region4: #{clip_forward.5} parent=0 // loop_header_branch
    %29 = sbr.rel (%p27) target = $region8
  $region5: #{clip_forward.5} parent=0 // loop_body
    %s31 = ssub.s32 %s26, 1
    %s32 = ssub.s32 %s26, 2
    %s39 = sadd.s32 1, %s34
    %p40 = scmp.ge.s32.totalorder %s39, 2
    %s41 = scalar_select %p40, 0, %s39
    %s42 = sadd.s32 1, %s33
    %s43 = scalar_select %p40, %s42, %s33
    %p44 = scmp.ge.s32.totalorder %s43, 2
    %s45 = scalar_select %p44, 0, %s43
    %s46 = ssub.s32 %s33, %s45
    %p47 = scmp.eq.s32.totalorder %s46, 0
    %s49 = sadd.s32 %s48, 1
    %s50 = scalar_select %p47, %s48, %s49
    %p53 = pneg %p47
    %p54 = scmp.eq.s32.totalorder %s26, 3
    %p55 = por %p53, %p54
    %p56 = scmp.ne.s32.totalorder %s48, %s51
    %p57 = scmp.eq.s32.totalorder %s26, 0
    %p58 = por %p56, %p57
    %p59 = scmp.ne.s32.totalorder %s48, %s51
    %p60 = scmp.eq.s32.totalorder %s31, 3
    %p61 = por %p59, %p60
    %p62 = scmp.ne.s32.totalorder %s51, %s52
    %p63 = scmp.eq.s32.totalorder %s31, 0
    %p64 = por %p62, %p63
    %p65 = scmp.ne.s32.totalorder %s51, %s52
    %p66 = scmp.eq.s32.totalorder %s32, 3
    %p67 = por %p65, %p66
    %p69 = scmp.ne.s32.totalorder %s52, %s68
    %p70 = scmp.eq.s32.totalorder %s32, 0
    %p71 = por %p69, %p70
    %s72 = ssub.s32 %s34, %s41
    %p73 = scmp.eq.s32.totalorder %s72, 0
    %s75 = sadd.s32 %s74, 1
    %s76 = scalar_select %p73, %s74, %s75
    %p79 = pneg %p73
    %p80 = scmp.eq.s32.totalorder %s26, 3
    %p81 = por %p79, %p80
    %p82 = scmp.ne.s32.totalorder %s74, %s77
    %p83 = scmp.eq.s32.totalorder %s26, 0
    %p84 = por %p82, %p83
    %p85 = scmp.ne.s32.totalorder %s74, %s77
    %p86 = scmp.eq.s32.totalorder %s31, 3
    %p87 = por %p85, %p86
    %p88 = scmp.ne.s32.totalorder %s77, %s78
    %p89 = scmp.eq.s32.totalorder %s31, 0
    %p90 = por %p88, %p89
    %p91 = scmp.ne.s32.totalorder %s77, %s78
    %p92 = scmp.eq.s32.totalorder %s32, 3
    %p93 = por %p91, %p92
    %p95 = scmp.ne.s32.totalorder %s78, %s94
    %p96 = scmp.eq.s32.totalorder %s32, 0
    %p97 = por %p95, %p96
    %s98 = ssub.s32 %s34, %s41
    %p99 = scmp.eq.s32.totalorder %s98, 0
    %s101 = sadd.s32 %s100, 1
    %s102 = scalar_select %p99, %s100, %s101
    %p105 = pneg %p99
    %p106 = scmp.eq.s32.totalorder %s26, 3
    %p107 = por %p105, %p106
    %p108 = scmp.ne.s32.totalorder %s100, %s103
    %p109 = scmp.eq.s32.totalorder %s26, 0
    %p110 = por %p108, %p109
    %p111 = scmp.ne.s32.totalorder %s100, %s103
    %p112 = scmp.eq.s32.totalorder %s31, 3
    %p113 = por %p111, %p112
    %p114 = scmp.ne.s32.totalorder %s103, %s104
    %p115 = scmp.eq.s32.totalorder %s31, 0
    %p116 = por %p114, %p115
    %p117 = scmp.ne.s32.totalorder %s103, %s104
    %p118 = scmp.eq.s32.totalorder %s32, 3
    %p119 = por %p117, %p118
    %p121 = scmp.ne.s32.totalorder %s104, %s120
    %p122 = scmp.eq.s32.totalorder %s32, 0
    %p123 = por %p121, %p122
    %s124 = ssub.s32 %s34, %s41
    %p125 = scmp.eq.s32.totalorder %s124, 0
    %s127 = sadd.s32 %s126, 1
    %s128 = scalar_select %p125, %s126, %s127
    %p131 = pneg %p125
    %p132 = scmp.eq.s32.totalorder %s26, 3
    %p133 = por %p131, %p132
    %p134 = scmp.ne.s32.totalorder %s126, %s129
    %p135 = scmp.eq.s32.totalorder %s26, 0
    %p136 = por %p134, %p135
    %p137 = scmp.ne.s32.totalorder %s126, %s129
    %p138 = scmp.eq.s32.totalorder %s31, 3
    %p139 = por %p137, %p138
    %p140 = scmp.ne.s32.totalorder %s129, %s130
    %p141 = scmp.eq.s32.totalorder %s31, 0
    %p142 = por %p140, %p141
    %p143 = scmp.ne.s32.totalorder %s129, %s130
    %p144 = scmp.eq.s32.totalorder %s32, 3
    %p145 = por %p143, %p144
    %p147 = scmp.ne.s32.totalorder %s130, %s146
    %p148 = scmp.eq.s32.totalorder %s32, 0
    %p149 = por %p147, %p148
    %s150 = ssub.s32 %s34, %s41
    %p151 = scmp.eq.s32.totalorder %s150, 0
    %s153 = sadd.s32 %s152, 1
    %s154 = scalar_select %p151, %s152, %s153
    %p157 = pneg %p151
    %p158 = scmp.eq.s32.totalorder %s26, 3
    %p159 = por %p157, %p158
    %p160 = scmp.ne.s32.totalorder %s152, %s155
    %p161 = scmp.eq.s32.totalorder %s26, 0
    %p162 = por %p160, %p161
    %p163 = scmp.ne.s32.totalorder %s152, %s155
    %p164 = scmp.eq.s32.totalorder %s31, 3
    %p165 = por %p163, %p164
    %p166 = scmp.ne.s32.totalorder %s155, %s156
    %p167 = scmp.eq.s32.totalorder %s31, 0
    %p168 = por %p166, %p167
    %p169 = scmp.ne.s32.totalorder %s155, %s156
    %p170 = scmp.eq.s32.totalorder %s32, 3
    %p171 = por %p169, %p170
    %p173 = scmp.ne.s32.totalorder %s156, %s172
    %p174 = scmp.eq.s32.totalorder %s32, 0
    %p175 = por %p173, %p174
    %s176 = ssub.s32 %s34, %s41
    %p177 = scmp.eq.s32.totalorder %s176, 0
    %s179 = sadd.s32 %s178, 1
    %s180 = scalar_select %p177, %s178, %s179
    %p183 = pneg %p177
    %p184 = scmp.eq.s32.totalorder %s26, 3
    %p185 = por %p183, %p184
    %p186 = scmp.ne.s32.totalorder %s178, %s181
    %p187 = scmp.eq.s32.totalorder %s26, 0
    %p188 = por %p186, %p187
    %p189 = scmp.ne.s32.totalorder %s178, %s181
    %p190 = scmp.eq.s32.totalorder %s31, 3
    %p191 = por %p189, %p190
    %p192 = scmp.ne.s32.totalorder %s181, %s182
    %p193 = scmp.eq.s32.totalorder %s31, 0
    %p194 = por %p192, %p193
    %p195 = scmp.ne.s32.totalorder %s181, %s182
    %p196 = scmp.eq.s32.totalorder %s32, 3
    %p197 = por %p195, %p196
    %p199 = scmp.ne.s32.totalorder %s182, %s198
    %p200 = scmp.eq.s32.totalorder %s32, 0
    %p201 = por %p199, %p200
    %s202 = ssub.s32 %s34, %s41
    %p203 = scmp.eq.s32.totalorder %s202, 0
    %s205 = sadd.s32 %s204, 1
    %s206 = scalar_select %p203, %s204, %s205
    %p209 = pneg %p203
    %p210 = scmp.eq.s32.totalorder %s26, 3
    %p211 = por %p209, %p210
    %p212 = scmp.ne.s32.totalorder %s204, %s207
    %p213 = scmp.eq.s32.totalorder %s26, 0
    %p214 = por %p212, %p213
    %p215 = scmp.ne.s32.totalorder %s204, %s207
    %p216 = scmp.eq.s32.totalorder %s31, 3
    %p217 = por %p215, %p216
    %p218 = scmp.ne.s32.totalorder %s207, %s208
    %p219 = scmp.eq.s32.totalorder %s31, 0
    %p220 = por %p218, %p219
    %p221 = scmp.ne.s32.totalorder %s207, %s208
    %p222 = scmp.eq.s32.totalorder %s32, 3
    %p223 = por %p221, %p222
    %p225 = scmp.ne.s32.totalorder %s208, %s224
    %p226 = scmp.eq.s32.totalorder %s32, 0
    %p227 = por %p225, %p226
    %s228 = ssub.s32 %s34, %s41
    %p229 = scmp.eq.s32.totalorder %s228, 0
    %s231 = sadd.s32 %s230, 1
    %s232 = scalar_select %p229, %s230, %s231
    %p235 = pneg %p229
    %p236 = scmp.eq.s32.totalorder %s26, 3
    %p237 = por %p235, %p236
    %p238 = scmp.ne.s32.totalorder %s230, %s233
    %p239 = scmp.eq.s32.totalorder %s26, 0
    %p240 = por %p238, %p239
    %p241 = scmp.ne.s32.totalorder %s230, %s233
    %p242 = scmp.eq.s32.totalorder %s31, 3
    %p243 = por %p241, %p242
    %p244 = scmp.ne.s32.totalorder %s233, %s234
    %p245 = scmp.eq.s32.totalorder %s31, 0
    %p246 = por %p244, %p245
    %p247 = scmp.ne.s32.totalorder %s233, %s234
    %p248 = scmp.eq.s32.totalorder %s32, 3
    %p249 = por %p247, %p248
    %p251 = scmp.ne.s32.totalorder %s234, %s250
    %p252 = scmp.eq.s32.totalorder %s32, 0
    %p253 = por %p251, %p252
    %s254 = ssub.s32 %s34, %s41
    %p255 = scmp.eq.s32.totalorder %s254, 0
    %s257 = sadd.s32 %s256, 1
    %s258 = scalar_select %p255, %s256, %s257
    %p261 = pneg %p255
    %p262 = scmp.eq.s32.totalorder %s26, 3
    %p263 = por %p261, %p262
    %p264 = scmp.ne.s32.totalorder %s256, %s259
    %p265 = scmp.eq.s32.totalorder %s26, 0
    %p266 = por %p264, %p265
    %p267 = scmp.ne.s32.totalorder %s256, %s259
    %p268 = scmp.eq.s32.totalorder %s31, 3
    %p269 = por %p267, %p268
    %p270 = scmp.ne.s32.totalorder %s259, %s260
    %p271 = scmp.eq.s32.totalorder %s31, 0
    %p272 = por %p270, %p271
    %p273 = scmp.ne.s32.totalorder %s259, %s260
    %p274 = scmp.eq.s32.totalorder %s32, 3
    %p275 = por %p273, %p274
    %p277 = scmp.ne.s32.totalorder %s260, %s276
    %p278 = scmp.eq.s32.totalorder %s32, 0
    %p279 = por %p277, %p278
    %s280 = ssub.s32 %s34, %s41
    %p281 = scmp.eq.s32.totalorder %s280, 0
    %s283 = sadd.s32 %s282, 1
    %s284 = scalar_select %p281, %s282, %s283
    %p287 = pneg %p281
    %p288 = scmp.eq.s32.totalorder %s26, 3
    %p289 = por %p287, %p288
    %p290 = scmp.ne.s32.totalorder %s282, %s285
    %p291 = scmp.eq.s32.totalorder %s26, 0
    %p292 = por %p290, %p291
    %p293 = scmp.ne.s32.totalorder %s282, %s285
    %p294 = scmp.eq.s32.totalorder %s31, 3
    %p295 = por %p293, %p294
    %p296 = scmp.ne.s32.totalorder %s285, %s286
    %p297 = scmp.eq.s32.totalorder %s31, 0
    %p298 = por %p296, %p297
    %p299 = scmp.ne.s32.totalorder %s285, %s286
    %p300 = scmp.eq.s32.totalorder %s32, 3
    %p301 = por %p299, %p300
    %p303 = scmp.ne.s32.totalorder %s286, %s302
    %p304 = scmp.eq.s32.totalorder %s32, 0
    %p305 = por %p303, %p304
    %s306 = ssub.s32 %s34, %s41
    %p307 = scmp.eq.s32.totalorder %s306, 0
    %s309 = sadd.s32 %s308, 1
    %s310 = scalar_select %p307, %s308, %s309
    %p313 = pneg %p307
    %p314 = scmp.eq.s32.totalorder %s26, 3
    %p315 = por %p313, %p314
    %p316 = scmp.ne.s32.totalorder %s308, %s311
    %p317 = scmp.eq.s32.totalorder %s26, 0
    %p318 = por %p316, %p317
    %p319 = scmp.ne.s32.totalorder %s308, %s311
    %p320 = scmp.eq.s32.totalorder %s31, 3
    %p321 = por %p319, %p320
    %p322 = scmp.ne.s32.totalorder %s311, %s312
    %p323 = scmp.eq.s32.totalorder %s31, 0
    %p324 = por %p322, %p323
    %p325 = scmp.ne.s32.totalorder %s311, %s312
    %p326 = scmp.eq.s32.totalorder %s32, 3
    %p327 = por %p325, %p326
    %p329 = scmp.ne.s32.totalorder %s312, %s328
    %p330 = scmp.eq.s32.totalorder %s32, 0
    %p331 = por %p329, %p330
    %s332 = ssub.s32 %s34, %s41
    %p333 = scmp.eq.s32.totalorder %s332, 0
    %s335 = sadd.s32 %s334, 1
    %s336 = scalar_select %p333, %s334, %s335
    %p339 = pneg %p333
    %p340 = scmp.eq.s32.totalorder %s26, 3
    %p341 = por %p339, %p340
    %p342 = scmp.ne.s32.totalorder %s334, %s337
    %p343 = scmp.eq.s32.totalorder %s26, 0
    %p344 = por %p342, %p343
    %p345 = scmp.ne.s32.totalorder %s334, %s337
    %p346 = scmp.eq.s32.totalorder %s31, 3
    %p347 = por %p345, %p346
    %p348 = scmp.ne.s32.totalorder %s337, %s338
    %p349 = scmp.eq.s32.totalorder %s31, 0
    %p350 = por %p348, %p349
    %p351 = scmp.ne.s32.totalorder %s337, %s338
    %p352 = scmp.eq.s32.totalorder %s32, 3
    %p353 = por %p351, %p352
    %p355 = scmp.ne.s32.totalorder %s338, %s354
    %p356 = scmp.eq.s32.totalorder %s32, 0
    %p357 = por %p355, %p356
    %s358 = ssub.s32 %s34, %s41
    %p359 = scmp.eq.s32.totalorder %s358, 0
    %s361 = sadd.s32 %s360, 1
    %s362 = scalar_select %p359, %s360, %s361
    %p365 = pneg %p359
    %p366 = scmp.eq.s32.totalorder %s26, 3
    %p367 = por %p365, %p366
    %p368 = scmp.ne.s32.totalorder %s360, %s363
    %p369 = scmp.eq.s32.totalorder %s26, 0
    %p370 = por %p368, %p369
    %p371 = scmp.ne.s32.totalorder %s360, %s363
    %p372 = scmp.eq.s32.totalorder %s31, 3
    %p373 = por %p371, %p372
    %p374 = scmp.ne.s32.totalorder %s363, %s364
    %p375 = scmp.eq.s32.totalorder %s31, 0
    %p376 = por %p374, %p375
    %p377 = scmp.ne.s32.totalorder %s363, %s364
    %p378 = scmp.eq.s32.totalorder %s32, 3
    %p379 = por %p377, %p378
    %p381 = scmp.ne.s32.totalorder %s364, %s380
    %p382 = scmp.eq.s32.totalorder %s32, 0
    %p383 = por %p381, %p382
    %s384 = ssub.s32 %s33, %s45
    %p385 = scmp.eq.s32.totalorder %s384, 0
    %s387 = sadd.s32 %s386, 1
    %s388 = scalar_select %p385, %s386, %s387
    %p391 = pneg %p385
    %p392 = scmp.eq.s32.totalorder %s26, 3
    %p393 = por %p391, %p392
    %p394 = scmp.ne.s32.totalorder %s386, %s389
    %p395 = scmp.eq.s32.totalorder %s26, 0
    %p396 = por %p394, %p395
    %p397 = scmp.ne.s32.totalorder %s386, %s389
    %p398 = scmp.eq.s32.totalorder %s31, 3
    %p399 = por %p397, %p398
    %p400 = scmp.ne.s32.totalorder %s389, %s390
    %p401 = scmp.eq.s32.totalorder %s31, 0
    %p402 = por %p400, %p401
    %p403 = scmp.ne.s32.totalorder %s389, %s390
    %p404 = scmp.eq.s32.totalorder %s32, 3
    %p405 = por %p403, %p404
    %p407 = scmp.ne.s32.totalorder %s390, %s406
    %p408 = scmp.eq.s32.totalorder %s32, 0
    %p409 = por %p407, %p408
    %p410 = scmp.le.s32.totalorder 1, %s26
    %p411 = scmp.lt.s32.totalorder %s26, 5
    %p412 = pnand %p410, %p411
    %p413 = pneg %p412
    // Predicated region
    $region9: #{clip_forward.5} parent=5 // pred_check
      _
    $region10: #{clip_forward.5} parent=5 // pred_check_branch
      %415 = sbr.rel (%p412) target = $region12
    $region11: #{clip_forward.5} parent=5 // pred_region
      %s416 = ssub.s32 %s26, 1
    $region12: #{clip_forward.5} parent=5 // pred_fallthru
      _
    %p417 = scmp.lt.s32.totalorder %s26, 4
    // Predicated region
    $region13: #{clip_forward.5} parent=5 // pred_check
      %p418 = pneg %p417
    $region14: #{clip_forward.5} parent=5 // pred_check_branch
      %420 = sbr.rel (%p418) target = $region16
    $region15: #{clip_forward.5} parent=5 // pred_region
      // Predicated region
      $region17: #{clip_forward.5} parent=15 // pred_check
        %p421 = pneg %p58
      $region18: #{clip_forward.5} parent=15 // pred_check_branch
        %423 = sbr.rel (%p421) target = $region20
      $region19: #{clip_forward.5} parent=15 // pred_region
        %p424 = scmp.lt.s32.totalorder %s33, 1
        %s425 = scalar_select %p424, %s33, 1
        %s426 = smul.addr %s425, 8
        %s427 = scalar_lea.vmem %s1, %s426
      $region20: #{clip_forward.5} parent=15 // pred_fallthru
        _
      // Predicated region
      $region21: #{clip_forward.5} parent=15 // pred_check
        %p428 = pneg %p84
      $region22: #{clip_forward.5} parent=15 // pred_check_branch
        %430 = sbr.rel (%p428) target = $region24
      $region23: #{clip_forward.5} parent=15 // pred_region
        %p431 = scmp.lt.s32.totalorder %s34, 1
        %s432 = scalar_select %p431, %s34, 1
        %s433 = scalar_lea.vmem %s2, %s432
      $region24: #{clip_forward.5} parent=15 // pred_fallthru
        _
      // Predicated region
      $region25: #{clip_forward.5} parent=15 // pred_check
        %p434 = pneg %p110
      $region26: #{clip_forward.5} parent=15 // pred_check_branch
        %436 = sbr.rel (%p434) target = $region28
      $region27: #{clip_forward.5} parent=15 // pred_region
        %p437 = scmp.lt.s32.totalorder %s34, 1
        %s438 = scalar_select %p437, %s34, 1
        %s439 = scalar_lea.vmem %s3, %s438
      $region28: #{clip_forward.5} parent=15 // pred_fallthru
        _
      // Predicated region
      $region29: #{clip_forward.5} parent=15 // pred_check
        %p440 = pneg %p136
      $region30: #{clip_forward.5} parent=15 // pred_check_branch
        %442 = sbr.rel (%p440) target = $region32
      $region31: #{clip_forward.5} parent=15 // pred_region
        %p443 = scmp.lt.s32.totalorder %s34, 1
        %s444 = scalar_select %p443, %s34, 1
        %s445 = smul.addr %s444, 4
        %s446 = smul.addr %s445, 8
        %s447 = scalar_lea.vmem %s4, %s446
      $region32: #{clip_forward.5} parent=15 // pred_fallthru
        _
      // Predicated region
      $region33: #{clip_forward.5} parent=15 // pred_check
        %p448 = pneg %p162
      $region34: #{clip_forward.5} parent=15 // pred_check_branch
        %450 = sbr.rel (%p448) target = $region36
      $region35: #{clip_forward.5} parent=15 // pred_region
        %p451 = scmp.lt.s32.totalorder %s34, 1
        %s452 = scalar_select %p451, %s34, 1
        %s453 = scalar_lea.vmem %s5, %s452
      $region36: #{clip_forward.5} parent=15 // pred_fallthru
        _
      // Predicated region
      $region37: #{clip_forward.5} parent=15 // pred_check
        %p454 = pneg %p188
      $region38: #{clip_forward.5} parent=15 // pred_check_branch
        %456 = sbr.rel (%p454) target = $region40
      $region39: #{clip_forward.5} parent=15 // pred_region
        %p457 = scmp.lt.s32.totalorder %s34, 1
        %s458 = scalar_select %p457, %s34, 1
        %s459 = smul.addr %s458, 4
        %s460 = smul.addr %s459, 8
        %s461 = scalar_lea.vmem %s6, %s460
      $region40: #{clip_forward.5} parent=15 // pred_fallthru
        _
      // Predicated region
      $region41: #{clip_forward.5} parent=15 // pred_check
        %p462 = pneg %p214
      $region42: #{clip_forward.5} parent=15 // pred_check_branch
        %464 = sbr.rel (%p462) target = $region44
      $region43: #{clip_forward.5} parent=15 // pred_region
        %p465 = scmp.lt.s32.totalorder %s34, 1
        %s466 = scalar_select %p465, %s34, 1
        %s467 = scalar_lea.vmem %s7, %s466
      $region44: #{clip_forward.5} parent=15 // pred_fallthru
        _
      // Predicated region
      $region45: #{clip_forward.5} parent=15 // pred_check
        %p468 = pneg %p240
      $region46: #{clip_forward.5} parent=15 // pred_check_branch
        %470 = sbr.rel (%p468) target = $region48
      $region47: #{clip_forward.5} parent=15 // pred_region
        %p471 = scmp.lt.s32.totalorder %s34, 1
        %s472 = scalar_select %p471, %s34, 1
        %s473 = scalar_lea.vmem %s8, %s472
      $region48: #{clip_forward.5} parent=15 // pred_fallthru
        _
      // Predicated region
      $region49: #{clip_forward.5} parent=15 // pred_check
        %p474 = pneg %p266
      $region50: #{clip_forward.5} parent=15 // pred_check_branch
        %476 = sbr.rel (%p474) target = $region52
      $region51: #{clip_forward.5} parent=15 // pred_region
        %p477 = scmp.lt.s32.totalorder %s34, 1
        %s478 = scalar_select %p477, %s34, 1
        %s479 = scalar_lea.vmem %s9, %s478
      $region52: #{clip_forward.5} parent=15 // pred_fallthru
        _
      // Predicated region
      $region53: #{clip_forward.5} parent=15 // pred_check
        %p480 = pneg %p292
      $region54: #{clip_forward.5} parent=15 // pred_check_branch
        %482 = sbr.rel (%p480) target = $region56
      $region55: #{clip_forward.5} parent=15 // pred_region
        %p483 = scmp.lt.s32.totalorder %s34, 1
        %s484 = scalar_select %p483, %s34, 1
        %s485 = smul.addr %s484, 4
        %s486 = smul.addr %s485, 8
        %s487 = scalar_lea.vmem %s10, %s486
      $region56: #{clip_forward.5} parent=15 // pred_fallthru
        _
      // Predicated region
      $region57: #{clip_forward.5} parent=15 // pred_check
        %p488 = pneg %p318
      $region58: #{clip_forward.5} parent=15 // pred_check_branch
        %490 = sbr.rel (%p488) target = $region60
      $region59: #{clip_forward.5} parent=15 // pred_region
        %p491 = scmp.lt.s32.totalorder %s34, 1
        %s492 = scalar_select %p491, %s34, 1
        %s493 = scalar_lea.vmem %s11, %s492
      $region60: #{clip_forward.5} parent=15 // pred_fallthru
        _
      // Predicated region
      $region61: #{clip_forward.5} parent=15 // pred_check
        %p494 = pneg %p344
      $region62: #{clip_forward.5} parent=15 // pred_check_branch
        %496 = sbr.rel (%p494) target = $region64
      $region63: #{clip_forward.5} parent=15 // pred_region
        %p497 = scmp.lt.s32.totalorder %s34, 1
        %s498 = scalar_select %p497, %s34, 1
        %s499 = smul.addr %s498, 16
        %s500 = smul.addr %s499, 8
        %s501 = scalar_lea.vmem %s12, %s500
      $region64: #{clip_forward.5} parent=15 // pred_fallthru
        _
      // Predicated region
      $region65: #{clip_forward.5} parent=15 // pred_check
        %p502 = pneg %p370
      $region66: #{clip_forward.5} parent=15 // pred_check_branch
        %504 = sbr.rel (%p502) target = $region68
      $region67: #{clip_forward.5} parent=15 // pred_region
        %p505 = scmp.lt.s32.totalorder %s34, 1
        %s506 = scalar_select %p505, %s34, 1
        %s507 = scalar_lea.vmem %s13, %s506
      $region68: #{clip_forward.5} parent=15 // pred_fallthru
        _
    $region16: #{clip_forward.5} parent=5 // pred_fallthru
      _
    %p508 = scmp.le.s32.totalorder 1, %s26
    %p509 = scmp.lt.s32.totalorder %s26, 5
    %p510 = pnand %p508, %p509
    %p511 = pneg %p510
    // Predicated region
    $region69: #{clip_forward.5} parent=5 // pred_check
      _
    $region70: #{clip_forward.5} parent=5 // pred_check_branch
      %513 = sbr.rel (%p510) target = $region72
    $region71: #{clip_forward.5} parent=5 // pred_region
      %s514 = ssub.s32 %s26, 1
      %p515 = scmp.lt.s32.totalorder %s35, 1
      %s516 = scalar_select %p515, %s35, 1
      %s517 = smul.addr %s516, 8
      %s518 = scalar_lea.vmem %s1, %s517
      %p519 = pneg %p64
      %p520 = pneg %p61
      %p521 = scmp.lt.s32.totalorder %s36, 1
      %s522 = scalar_select %p521, %s36, 1
      %s523 = scalar_lea.vmem %s2, %s522
      %p524 = pneg %p90
      %p525 = pneg %p87
      %p526 = scmp.lt.s32.totalorder %s36, 1
      %s527 = scalar_select %p526, %s36, 1
      %s528 = scalar_lea.vmem %s3, %s527
      %p529 = pneg %p116
      %p530 = pneg %p113
      %p531 = scmp.lt.s32.totalorder %s36, 1
      %s532 = scalar_select %p531, %s36, 1
      %s533 = smul.addr %s532, 4
      %s534 = smul.addr %s533, 8
      %s535 = scalar_lea.vmem %s4, %s534
      %p536 = pneg %p142
      %p537 = pneg %p139
      %p538 = scmp.lt.s32.totalorder %s36, 1
      %s539 = scalar_select %p538, %s36, 1
      %s540 = scalar_lea.vmem %s5, %s539
      %p541 = pneg %p168
      %p542 = pneg %p165
      %p543 = scmp.lt.s32.totalorder %s36, 1
      %s544 = scalar_select %p543, %s36, 1
      %s545 = smul.addr %s544, 4
      %s546 = smul.addr %s545, 8
      %s547 = scalar_lea.vmem %s6, %s546
      %p548 = pneg %p194
      %p549 = pneg %p191
      %p550 = scmp.lt.s32.totalorder %s36, 1
      %s551 = scalar_select %p550, %s36, 1
      %s552 = scalar_lea.vmem %s7, %s551
      %p553 = pneg %p220
      %p554 = pneg %p217
      %p555 = scmp.lt.s32.totalorder %s36, 1
      %s556 = scalar_select %p555, %s36, 1
      %s557 = scalar_lea.vmem %s8, %s556
      %p558 = pneg %p246
      %p559 = pneg %p243
      %p560 = scmp.lt.s32.totalorder %s36, 1
      %s561 = scalar_select %p560, %s36, 1
      %s562 = scalar_lea.vmem %s9, %s561
      %p563 = pneg %p272
      %p564 = pneg %p269
      %p565 = scmp.lt.s32.totalorder %s36, 1
      %s566 = scalar_select %p565, %s36, 1
      %s567 = smul.addr %s566, 4
      %s568 = smul.addr %s567, 8
      %s569 = scalar_lea.vmem %s10, %s568
      %p570 = pneg %p298
      %p571 = pneg %p295
      %p572 = scmp.lt.s32.totalorder %s36, 1
      %s573 = scalar_select %p572, %s36, 1
      %s574 = scalar_lea.vmem %s11, %s573
      %p575 = pneg %p324
      %p576 = pneg %p321
      %p577 = scmp.lt.s32.totalorder %s36, 1
      %s578 = scalar_select %p577, %s36, 1
      %s579 = smul.addr %s578, 16
      %s580 = smul.addr %s579, 8
      %s581 = scalar_lea.vmem %s12, %s580
      %p582 = pneg %p350
      %p583 = pneg %p347
      %p584 = scmp.lt.s32.totalorder %s36, 1
      %s585 = scalar_select %p584, %s36, 1
      %s586 = scalar_lea.vmem %s13, %s585
      %p587 = pneg %p376
      %p588 = pneg %p373
      %p589 = pneg %p402
      %p590 = pneg %p399
      %p591 = scmp.lt.s32.totalorder %s35, 1
      %s592 = scalar_select %p591, %s35, 1
      %s593 = smul.addr %s592, 8
      %s594 = scalar_lea.vmem %s14, %s593
      %p595 = scmp.lt.s32.totalorder %s35, 1
      %s596 = scalar_select %p595, %s35, 1
      %s597 = smul.addr %s596, 8
      %s598 = scalar_lea.vmem %s1, %s597
      %p599 = scmp.lt.s32.totalorder %s36, 1
      %s600 = scalar_select %p599, %s36, 1
      %s601 = scalar_lea.vmem %s2, %s600
      %p602 = scmp.lt.s32.totalorder %s36, 1
      %s603 = scalar_select %p602, %s36, 1
      %s604 = scalar_lea.vmem %s3, %s603
      %p605 = scmp.lt.s32.totalorder %s36, 1
      %s606 = scalar_select %p605, %s36, 1
      %s607 = smul.addr %s606, 4
      %s608 = smul.addr %s607, 8
      %s609 = scalar_lea.vmem %s4, %s608
      %p610 = scmp.lt.s32.totalorder %s36, 1
      %s611 = scalar_select %p610, %s36, 1
      %s612 = scalar_lea.vmem %s5, %s611
      %p613 = scmp.lt.s32.totalorder %s36, 1
      %s614 = scalar_select %p613, %s36, 1
      %s615 = smul.addr %s614, 4
      %s616 = smul.addr %s615, 8
      %s617 = scalar_lea.vmem %s6, %s616
      %p618 = scmp.lt.s32.totalorder %s36, 1
      %s619 = scalar_select %p618, %s36, 1
      %s620 = scalar_lea.vmem %s7, %s619
      %p621 = scmp.lt.s32.totalorder %s36, 1
      %s622 = scalar_select %p621, %s36, 1
      %s623 = scalar_lea.vmem %s8, %s622
      %p624 = scmp.lt.s32.totalorder %s36, 1
      %s625 = scalar_select %p624, %s36, 1
      %s626 = scalar_lea.vmem %s9, %s625
      %p627 = scmp.lt.s32.totalorder %s36, 1
      %s628 = scalar_select %p627, %s36, 1
      %s629 = smul.addr %s628, 4
      %s630 = smul.addr %s629, 8
      %s631 = scalar_lea.vmem %s10, %s630
      %p632 = scmp.lt.s32.totalorder %s36, 1
      %s633 = scalar_select %p632, %s36, 1
      %s634 = scalar_lea.vmem %s11, %s633
      %p635 = scmp.lt.s32.totalorder %s36, 1
      %s636 = scalar_select %p635, %s36, 1
      %s637 = smul.addr %s636, 16
      %s638 = smul.addr %s637, 8
      %s639 = scalar_lea.vmem %s12, %s638
      %p640 = scmp.lt.s32.totalorder %s36, 1
      %s641 = scalar_select %p640, %s36, 1
      %s642 = scalar_lea.vmem %s13, %s641
      %p643 = scmp.lt.s32.totalorder %s35, 1
      %s644 = scalar_select %p643, %s35, 1
      %s645 = smul.addr %s644, 8
      %s646 = scalar_lea.vmem %s14, %s645
      %p647 = scmp.eq.s32.totalorder %s36, 0
      // Predicated region
      $region73: #{clip_forward.5} parent=71 // pred_check
        %p648 = pneg %p647
      $region74: #{clip_forward.5} parent=71 // pred_check_branch
        %650 = sbr.rel (%p648) target = $region76
      $region75: #{clip_forward.5} parent=71 // pred_region
        %v651 = vld [vmem:[%s598] sm:$0xff]
        %vm652 = vcmask 261120
        %653 = vst.msk [vmem:[#allocation2] sm:$0xff] %vm652, %v651
      $region76: #{clip_forward.5} parent=71 // pred_fallthru
        _
      %v654 = vld [vmem:[#allocation2] sm:$0xff]
      %s655 = sld [smem:[#allocation4 + %s35]]
      %v656 = vlaneseq
      %v657 = vand.u32 %v656, 127
      %v658 = vstv %s655
      %vm659 = vcmp.lt.s32.totalorder %v657, %v658
      %v660 = vsel %vm659, 0.0, -1e+09
      %v661 = vld [vmem:[%s601] sm:$0x1]
      %v662 = vld [vmem:[%s604] sm:$0x1]
      %vm663 = vcmask 261120
      %v664 = vsel %vm663, %v654, 0.0
      %665 = vadd.xlane.f32.xlu0 %v664
      %v666 = vpop.xlane.xlu0 %665
      %v667 = vrcp.pop 32.0
      %v668 = vmul.f32 %v666, %v667
      %v669 = vsub.f32 %v654, %v668
      %v670 = vmul.f32 %v669, %v669
      %v671 = vsel %vm663, %v670, 0.0
      %672 = vadd.xlane.f32.xlu0 %v671
      %v673 = vpop.xlane.xlu0 %672
      %v674 = vmul.f32 %v673, %v667
      %v675 = vadd.f32 %v674, 1e-05
      %v676 = vrsqrt.pop %v675
      %v677 = vmul.f32 %v669, %v676
      %v679 = vlaneseq
      %v680 = vshrl.u32 %v679, 7
      %v681 = vsub.s32 0, %v680
      %v682 = vrot.slane %v661, %v681
      %v684 = vmul.f32 %v677, %v682
      %v686 = vlaneseq
      %v687 = vshrl.u32 %v686, 7
      %v688 = vsub.s32 0, %v687
      %v689 = vrot.slane %v662, %v688
      %v691 = vadd.f32 %v684, %v689
      %v692 = vld [vmem:[%s609] sm:$0xff]
      %v693 = vld [vmem:[%s609 + $0x8] sm:$0xff]
      %v694 = vld [vmem:[%s609 + $0x10] sm:$0xff]
      %v695 = vld [vmem:[%s609 + $0x18] sm:$0xff]
      %v696 = vld [vmem:[%s612] sm:$0x1]
      %v698 = vlaneseq
      %v699 = vshrl.u32 %v698, 7
      %v700 = vsub.s32 0, %v699
      %v701 = vrot.slane %v696, %v700
      %v704 = vsel %vm663, %v691, 0
      %706 = vmatprep.subr.mxu0 0.0
      %707 = vmatpush1.msra.mxu0 %v692
      %708 = vmatprep.subr.mxu0 0.0
      %709 = vmatpush1.msra.mxu0 %v693
      %710 = vmatprep.subr.mxu0 0.0
      %711 = vmatpush1.msra.mxu0 %v694
      %712 = vmatprep.subr.mxu0 0.0
      %713 = vmatpush1.msra.mxu0 %v695
      %714 = vmatprep.subr.mxu0 0.0
      %715 = vmatpush1.msra.mxu0 0.0
      %716 = vmatprep.subr.mxu0 0.0
      %717 = vmatpush1.msra.mxu0 0.0
      %718 = vmatprep.subr.mxu0 0.0
      %719 = vmatpush1.msra.mxu0 0.0
      %720 = vmatprep.subr.mxu0 0.0
      %721 = vmatpush1.msra.mxu0 0.0
      %722 = vmatprep.subr.mxu0 0.0
      %723 = vmatpush1.msra.mxu0 0.0
      %724 = vmatprep.subr.mxu0 0.0
      %725 = vmatpush1.msra.mxu0 0.0
      %726 = vmatprep.subr.mxu0 0.0
      %727 = vmatpush1.msra.mxu0 0.0
      %728 = vmatprep.subr.mxu0 0.0
      %729 = vmatpush1.msra.mxu0 0.0
      %730 = vmatprep.subr.mxu0 0.0
      %731 = vmatpush1.msra.mxu0 0.0
      %732 = vmatprep.subr.mxu0 0.0
      %733 = vmatpush1.msra.mxu0 0.0
      %734 = vmatprep.subr.mxu0 0.0
      %735 = vmatpush1.msra.mxu0 0.0
      %736 = vmatprep.subr.mxu0 0.0
      %737 = vmatpush1.msra.mxu0 0.0
      %738 = vmatprep.subr.mxu0 0.0
      %739 = vmatpush1.msra.mxu0 0.0
      %740 = vmatprep.subr.mxu0 0.0
      %741 = vmatpush1.msra.mxu0 0.0
      %742 = vmatprep.subr.mxu0 0.0
      %743 = vmatpush1.msra.mxu0 0.0
      %744 = vmatprep.subr.mxu0 0.0
      %745 = vmatpush1.msra.mxu0 0.0
      %746 = vmatprep.subr.mxu0 0.0
      %747 = vmatpush1.msra.mxu0 0.0
      %748 = vmatprep.subr.mxu0 0.0
      %749 = vmatpush1.msra.mxu0 0.0
      %750 = vmatprep.subr.mxu0 0.0
      %751 = vmatpush1.msra.mxu0 0.0
      %752 = vmatprep.subr.mxu0 0.0
      %753 = vmatpush1.msra.mxu0 0.0
      %754 = vmatprep.subr.mxu0 0.0
      %755 = vmatpush1.msra.mxu0 0.0
      %756 = vmatprep.subr.mxu0 0.0
      %757 = vmatpush1.msra.mxu0 0.0
      %758 = vmatprep.subr.mxu0 0.0
      %759 = vmatpush1.msra.mxu0 0.0
      %760 = vmatprep.subr.mxu0 0.0
      %761 = vmatpush1.msra.mxu0 0.0
      %762 = vmatprep.subr.mxu0 0.0
      %763 = vmatpush1.msra.mxu0 0.0
      %764 = vmatprep.subr.mxu0 0.0
      %765 = vmatpush1.msra.mxu0 0.0
      %766 = vmatprep.subr.mxu0 0.0
      %767 = vmatpush1.msra.mxu0 0.0
      %768 = vmatprep.subr.mxu0 0.0
      %769 = vmatpush1.msra.mxu0 0.0
      %770 = vmatprep.mubr.f32.mxu0 0.0
      %771 = vmatmul.mubr.f32.gmra.mrb[0].mxu0 %v704
      %v772 = vpop.f32.mrb[0].mxu0
      %v773 = vadd.f32 %v701, %v772
      %v774 = vpop.f32.mrb[0].mxu0
      %775 = vdwg.mxu0
      %777 = vrot.lane.b32.xlu0 %v773, 96
      %v778 = vpop.permute.xlu0 %777
      %vm779 = vcmask 64512
      %v780 = vsel %vm779, %v773, 0
      %v782 = vsel %vm779, %v778, 0
      %784 = vmatprep.subr.mxu0 0.0
      %785 = vmatpush1.xpose.msra.mxu0 %v782
      %786 = vmatprep.subr.mxu0 0.0
      %787 = vmatpush1.xpose.msra.mxu0 0.0
      %788 = vmatprep.subr.mxu0 0.0
      %789 = vmatpush1.xpose.msra.mxu0 0.0
      %790 = vmatprep.subr.mxu0 0.0
      %791 = vmatpush1.xpose.msra.mxu0 0.0
      %792 = vmatprep.subr.mxu0 0.0
      %793 = vmatpush1.xpose.msra.mxu0 0.0
      %794 = vmatprep.subr.mxu0 0.0
      %795 = vmatpush1.xpose.msra.mxu0 0.0
      %796 = vmatprep.subr.mxu0 0.0
      %797 = vmatpush1.xpose.msra.mxu0 0.0
      %798 = vmatprep.subr.mxu0 0.0
      %799 = vmatpush1.xpose.msra.mxu0 0.0
      %800 = vmatprep.subr.mxu0 0.0
      %801 = vmatpush1.xpose.msra.mxu0 0.0
      %802 = vmatprep.subr.mxu0 0.0
      %803 = vmatpush1.xpose.msra.mxu0 0.0
      %804 = vmatprep.subr.mxu0 0.0
      %805 = vmatpush1.xpose.msra.mxu0 0.0
      %806 = vmatprep.subr.mxu0 0.0
      %807 = vmatpush1.xpose.msra.mxu0 0.0
      %808 = vmatprep.subr.mxu0 0.0
      %809 = vmatpush1.xpose.msra.mxu0 0.0
      %810 = vmatprep.subr.mxu0 0.0
      %811 = vmatpush1.xpose.msra.mxu0 0.0
      %812 = vmatprep.subr.mxu0 0.0
      %813 = vmatpush1.xpose.msra.mxu0 0.0
      %814 = vmatprep.subr.mxu0 0.0
      %815 = vmatpush1.xpose.msra.mxu0 0.0
      %816 = vmatprep.subr.mxu0 0.0
      %817 = vmatpush1.xpose.msra.mxu0 0.0
      %818 = vmatprep.subr.mxu0 0.0
      %819 = vmatpush1.xpose.msra.mxu0 0.0
      %820 = vmatprep.subr.mxu0 0.0
      %821 = vmatpush1.xpose.msra.mxu0 0.0
      %822 = vmatprep.subr.mxu0 0.0
      %823 = vmatpush1.xpose.msra.mxu0 0.0
      %824 = vmatprep.subr.mxu0 0.0
      %825 = vmatpush1.xpose.msra.mxu0 0.0
      %826 = vmatprep.subr.mxu0 0.0
      %827 = vmatpush1.xpose.msra.mxu0 0.0
      %828 = vmatprep.subr.mxu0 0.0
      %829 = vmatpush1.xpose.msra.mxu0 0.0
      %830 = vmatprep.subr.mxu0 0.0
      %831 = vmatpush1.xpose.msra.mxu0 0.0
      %832 = vmatprep.subr.mxu0 0.0
      %833 = vmatpush1.xpose.msra.mxu0 0.0
      %834 = vmatprep.subr.mxu0 0.0
      %835 = vmatpush1.xpose.msra.mxu0 0.0
      %836 = vmatprep.subr.mxu0 0.0
      %837 = vmatpush1.xpose.msra.mxu0 0.0
      %838 = vmatprep.subr.mxu0 0.0
      %839 = vmatpush1.xpose.msra.mxu0 0.0
      %840 = vmatprep.subr.mxu0 0.0
      %841 = vmatpush1.xpose.msra.mxu0 0.0
      %842 = vmatprep.subr.mxu0 0.0
      %843 = vmatpush1.xpose.msra.mxu0 0.0
      %844 = vmatprep.subr.mxu0 0.0
      %845 = vmatpush1.xpose.msra.mxu0 0.0
      %846 = vmatprep.subr.mxu0 0.0
      %847 = vmatpush1.xpose.msra.mxu0 0.0
      %848 = vmatprep.mubr.f32.mxu0 0.0
      %849 = vmatmul.mubr.f32.gmra.mrb[0].mxu0 %v780
      %v850 = vpop.f32.mrb[0].mxu0
      %v851 = vadd.f32 0.0, %v850
      %v852 = vpop.f32.mrb[0].mxu0
      %853 = vdwg.mxu0
      %v854 = vmul.f32 %v851, 0.35355338
      %v855 = vadd.f32 %v854, %v660
      %v856 = vsel %vm779, %v855, -inf
      %857 = vmax.xlane.f32.xlu0 %v856
      %v858 = vpop.xlane.xlu0 %857
      %v859 = vsub.f32 %v855, %v858
      %v860 = vmul.f32 %v859, 1.442695
      %v861 = vpow.pop %v860
      %v862 = vsel %vm779, %v861, 0.0
      %863 = vadd.xlane.f32.xlu0 %v862
      %v864 = vpop.xlane.xlu0 %863
      %v865 = vrcp.pop %v864
      %v866 = vmul.f32 %v861, %v865
      %867 = vrot.lane.b32.xlu0 %v773, 64
      %v868 = vpop.permute.xlu0 %867
      %v871 = vsel %vm779, %v866, 0
      %873 = vmatprep.subr.mxu0 0.0
      %874 = vmatpush1.msra.mxu0 %v868
      %875 = vmatprep.subr.mxu0 0.0
      %876 = vmatpush1.msra.mxu0 0.0
      %877 = vmatprep.subr.mxu0 0.0
      %878 = vmatpush1.msra.mxu0 0.0
      %879 = vmatprep.subr.mxu0 0.0
      %880 = vmatpush1.msra.mxu0 0.0
      %881 = vmatprep.subr.mxu0 0.0
      %882 = vmatpush1.msra.mxu0 0.0
      %883 = vmatprep.subr.mxu0 0.0
      %884 = vmatpush1.msra.mxu0 0.0
      %885 = vmatprep.subr.mxu0 0.0
      %886 = vmatpush1.msra.mxu0 0.0
      %887 = vmatprep.subr.mxu0 0.0
      %888 = vmatpush1.msra.mxu0 0.0
      %889 = vmatprep.subr.mxu0 0.0
      %890 = vmatpush1.msra.mxu0 0.0
      %891 = vmatprep.subr.mxu0 0.0
      %892 = vmatpush1.msra.mxu0 0.0
      %893 = vmatprep.subr.mxu0 0.0
      %894 = vmatpush1.msra.mxu0 0.0
      %895 = vmatprep.subr.mxu0 0.0
      %896 = vmatpush1.msra.mxu0 0.0
      %897 = vmatprep.subr.mxu0 0.0
      %898 = vmatpush1.msra.mxu0 0.0
      %899 = vmatprep.subr.mxu0 0.0
      %900 = vmatpush1.msra.mxu0 0.0
      %901 = vmatprep.subr.mxu0 0.0
      %902 = vmatpush1.msra.mxu0 0.0
      %903 = vmatprep.subr.mxu0 0.0
      %904 = vmatpush1.msra.mxu0 0.0
      %905 = vmatprep.subr.mxu0 0.0
      %906 = vmatpush1.msra.mxu0 0.0
      %907 = vmatprep.subr.mxu0 0.0
      %908 = vmatpush1.msra.mxu0 0.0
      %909 = vmatprep.subr.mxu0 0.0
      %910 = vmatpush1.msra.mxu0 0.0
      %911 = vmatprep.subr.mxu0 0.0
      %912 = vmatpush1.msra.mxu0 0.0
      %913 = vmatprep.subr.mxu0 0.0
      %914 = vmatpush1.msra.mxu0 0.0
      %915 = vmatprep.subr.mxu0 0.0
      %916 = vmatpush1.msra.mxu0 0.0
      %917 = vmatprep.subr.mxu0 0.0
      %918 = vmatpush1.msra.mxu0 0.0
      %919 = vmatprep.subr.mxu0 0.0
      %920 = vmatpush1.msra.mxu0 0.0
      %921 = vmatprep.subr.mxu0 0.0
      %922 = vmatpush1.msra.mxu0 0.0
      %923 = vmatprep.subr.mxu0 0.0
      %924 = vmatpush1.msra.mxu0 0.0
      %925 = vmatprep.subr.mxu0 0.0
      %926 = vmatpush1.msra.mxu0 0.0
      %927 = vmatprep.subr.mxu0 0.0
      %928 = vmatpush1.msra.mxu0 0.0
      %929 = vmatprep.subr.mxu0 0.0
      %930 = vmatpush1.msra.mxu0 0.0
      %931 = vmatprep.subr.mxu0 0.0
      %932 = vmatpush1.msra.mxu0 0.0
      %933 = vmatprep.subr.mxu0 0.0
      %934 = vmatpush1.msra.mxu0 0.0
      %935 = vmatprep.subr.mxu0 0.0
      %936 = vmatpush1.msra.mxu0 0.0
      %937 = vmatprep.mubr.f32.mxu0 0.0
      %938 = vmatmul.mubr.f32.gmra.mrb[0].mxu0 %v871
      %v939 = vpop.f32.mrb[0].mxu0
      %v940 = vadd.f32 0.0, %v939
      %v941 = vpop.f32.mrb[0].mxu0
      %942 = vdwg.mxu0
      %943 = vrot.lane.b32.xlu0 %v773, 120
      %v944 = vpop.permute.xlu0 %943
      %945 = vrot.lane.b32.xlu0 %v773, 88
      %v946 = vpop.permute.xlu0 %945
      %v947 = vsel %vm779, %v944, 0
      %v949 = vsel %vm779, %v946, 0
      %951 = vmatprep.subr.mxu0 0.0
      %952 = vmatpush1.xpose.msra.mxu0 %v949
      %953 = vmatprep.subr.mxu0 0.0
      %954 = vmatpush1.xpose.msra.mxu0 0.0
      %955 = vmatprep.subr.mxu0 0.0
      %956 = vmatpush1.xpose.msra.mxu0 0.0
      %957 = vmatprep.subr.mxu0 0.0
      %958 = vmatpush1.xpose.msra.mxu0 0.0
      %959 = vmatprep.subr.mxu0 0.0
      %960 = vmatpush1.xpose.msra.mxu0 0.0
      %961 = vmatprep.subr.mxu0 0.0
      %962 = vmatpush1.xpose.msra.mxu0 0.0
      %963 = vmatprep.subr.mxu0 0.0
      %964 = vmatpush1.xpose.msra.mxu0 0.0
      %965 = vmatprep.subr.mxu0 0.0
      %966 = vmatpush1.xpose.msra.mxu0 0.0
      %967 = vmatprep.subr.mxu0 0.0
      %968 = vmatpush1.xpose.msra.mxu0 0.0
      %969 = vmatprep.subr.mxu0 0.0
      %970 = vmatpush1.xpose.msra.mxu0 0.0
      %971 = vmatprep.subr.mxu0 0.0
      %972 = vmatpush1.xpose.msra.mxu0 0.0
      %973 = vmatprep.subr.mxu0 0.0
      %974 = vmatpush1.xpose.msra.mxu0 0.0
      %975 = vmatprep.subr.mxu0 0.0
      %976 = vmatpush1.xpose.msra.mxu0 0.0
      %977 = vmatprep.subr.mxu0 0.0
      %978 = vmatpush1.xpose.msra.mxu0 0.0
      %979 = vmatprep.subr.mxu0 0.0
      %980 = vmatpush1.xpose.msra.mxu0 0.0
      %981 = vmatprep.subr.mxu0 0.0
      %982 = vmatpush1.xpose.msra.mxu0 0.0
      %983 = vmatprep.subr.mxu0 0.0
      %984 = vmatpush1.xpose.msra.mxu0 0.0
      %985 = vmatprep.subr.mxu0 0.0
      %986 = vmatpush1.xpose.msra.mxu0 0.0
      %987 = vmatprep.subr.mxu0 0.0
      %988 = vmatpush1.xpose.msra.mxu0 0.0
      %989 = vmatprep.subr.mxu0 0.0
      %990 = vmatpush1.xpose.msra.mxu0 0.0
      %991 = vmatprep.subr.mxu0 0.0
      %992 = vmatpush1.xpose.msra.mxu0 0.0
      %993 = vmatprep.subr.mxu0 0.0
      %994 = vmatpush1.xpose.msra.mxu0 0.0
      %995 = vmatprep.subr.mxu0 0.0
      %996 = vmatpush1.xpose.msra.mxu0 0.0
      %997 = vmatprep.subr.mxu0 0.0
      %998 = vmatpush1.xpose.msra.mxu0 0.0
      %999 = vmatprep.subr.mxu0 0.0
      %1000 = vmatpush1.xpose.msra.mxu0 0.0
      %1001 = vmatprep.subr.mxu0 0.0
      %1002 = vmatpush1.xpose.msra.mxu0 0.0
      %1003 = vmatprep.subr.mxu0 0.0
      %1004 = vmatpush1.xpose.msra.mxu0 0.0
      %1005 = vmatprep.subr.mxu0 0.0
      %1006 = vmatpush1.xpose.msra.mxu0 0.0
      %1007 = vmatprep.subr.mxu0 0.0
      %1008 = vmatpush1.xpose.msra.mxu0 0.0
      %1009 = vmatprep.subr.mxu0 0.0
      %1010 = vmatpush1.xpose.msra.mxu0 0.0
      %1011 = vmatprep.subr.mxu0 0.0
      %1012 = vmatpush1.xpose.msra.mxu0 0.0
      %1013 = vmatprep.subr.mxu0 0.0
      %1014 = vmatpush1.xpose.msra.mxu0 0.0
      %1015 = vmatprep.mubr.f32.mxu0 0.0
      %1016 = vmatmul.mubr.f32.gmra.mrb[0].mxu0 %v947
      %v1017 = vpop.f32.mrb[0].mxu0
      %v1018 = vadd.f32 0.0, %v1017
      %v1019 = vpop.f32.mrb[0].mxu0
      %1020 = vdwg.mxu0
      %v1021 = vmul.f32 %v1018, 0.35355338
      %v1022 = vadd.f32 %v1021, %v660
      %v1023 = vsel %vm779, %v1022, -inf
      %1024 = vmax.xlane.f32.xlu0 %v1023
      %v1025 = vpop.xlane.xlu0 %1024
      %v1026 = vsub.f32 %v1022, %v1025
      %v1027 = vmul.f32 %v1026, 1.442695
      %v1028 = vpow.pop %v1027
      %v1029 = vsel %vm779, %v1028, 0.0
      %1030 = vadd.xlane.f32.xlu0 %v1029
      %v1031 = vpop.xlane.xlu0 %1030
      %v1032 = vrcp.pop %v1031
      %v1033 = vmul.f32 %v1028, %v1032
      %1034 = vrot.lane.b32.xlu0 %v773, 56
      %v1035 = vpop.permute.xlu0 %1034
      %v1038 = vsel %vm779, %v1033, 0
      %1040 = vmatprep.subr.mxu0 0.0
      %1041 = vmatpush1.msra.mxu0 %v1035
      %1042 = vmatprep.subr.mxu0 0.0
      %1043 = vmatpush1.msra.mxu0 0.0
      %1044 = vmatprep.subr.mxu0 0.0
      %1045 = vmatpush1.msra.mxu0 0.0
      %1046 = vmatprep.subr.mxu0 0.0
      %1047 = vmatpush1.msra.mxu0 0.0
      %1048 = vmatprep.subr.mxu0 0.0
      %1049 = vmatpush1.msra.mxu0 0.0
      %1050 = vmatprep.subr.mxu0 0.0
      %1051 = vmatpush1.msra.mxu0 0.0
      %1052 = vmatprep.subr.mxu0 0.0
      %1053 = vmatpush1.msra.mxu0 0.0
      %1054 = vmatprep.subr.mxu0 0.0
      %1055 = vmatpush1.msra.mxu0 0.0
      %1056 = vmatprep.subr.mxu0 0.0
      %1057 = vmatpush1.msra.mxu0 0.0
      %1058 = vmatprep.subr.mxu0 0.0
      %1059 = vmatpush1.msra.mxu0 0.0
      %1060 = vmatprep.subr.mxu0 0.0
      %1061 = vmatpush1.msra.mxu0 0.0
      %1062 = vmatprep.subr.mxu0 0.0
      %1063 = vmatpush1.msra.mxu0 0.0
      %1064 = vmatprep.subr.mxu0 0.0
      %1065 = vmatpush1.msra.mxu0 0.0
      %1066 = vmatprep.subr.mxu0 0.0
      %1067 = vmatpush1.msra.mxu0 0.0
      %1068 = vmatprep.subr.mxu0 0.0
      %1069 = vmatpush1.msra.mxu0 0.0
      %1070 = vmatprep.subr.mxu0 0.0
      %1071 = vmatpush1.msra.mxu0 0.0
      %1072 = vmatprep.subr.mxu0 0.0
      %1073 = vmatpush1.msra.mxu0 0.0
      %1074 = vmatprep.subr.mxu0 0.0
      %1075 = vmatpush1.msra.mxu0 0.0
      %1076 = vmatprep.subr.mxu0 0.0
      %1077 = vmatpush1.msra.mxu0 0.0
      %1078 = vmatprep.subr.mxu0 0.0
      %1079 = vmatpush1.msra.mxu0 0.0
      %1080 = vmatprep.subr.mxu0 0.0
      %1081 = vmatpush1.msra.mxu0 0.0
      %1082 = vmatprep.subr.mxu0 0.0
      %1083 = vmatpush1.msra.mxu0 0.0
      %1084 = vmatprep.subr.mxu0 0.0
      %1085 = vmatpush1.msra.mxu0 0.0
      %1086 = vmatprep.subr.mxu0 0.0
      %1087 = vmatpush1.msra.mxu0 0.0
      %1088 = vmatprep.subr.mxu0 0.0
      %1089 = vmatpush1.msra.mxu0 0.0
      %1090 = vmatprep.subr.mxu0 0.0
      %1091 = vmatpush1.msra.mxu0 0.0
      %1092 = vmatprep.subr.mxu0 0.0
      %1093 = vmatpush1.msra.mxu0 0.0
      %1094 = vmatprep.subr.mxu0 0.0
      %1095 = vmatpush1.msra.mxu0 0.0
      %1096 = vmatprep.subr.mxu0 0.0
      %1097 = vmatpush1.msra.mxu0 0.0
      %1098 = vmatprep.subr.mxu0 0.0
      %1099 = vmatpush1.msra.mxu0 0.0
      %1100 = vmatprep.subr.mxu0 0.0
      %1101 = vmatpush1.msra.mxu0 0.0
      %1102 = vmatprep.subr.mxu0 0.0
      %1103 = vmatpush1.msra.mxu0 0.0
      %1104 = vmatprep.mubr.f32.mxu0 0.0
      %1105 = vmatmul.mubr.f32.gmra.mrb[0].mxu0 %v1038
      %v1106 = vpop.f32.mrb[0].mxu0
      %v1107 = vadd.f32 0.0, %v1106
      %v1108 = vpop.f32.mrb[0].mxu0
      %1109 = vdwg.mxu0
      %1110 = vrot.lane.b32.xlu0 %v773, 112
      %v1111 = vpop.permute.xlu0 %1110
      %1112 = vrot.lane.b32.xlu0 %v773, 80
      %v1113 = vpop.permute.xlu0 %1112
      %v1114 = vsel %vm779, %v1111, 0
      %v1116 = vsel %vm779, %v1113, 0
      %1118 = vmatprep.subr.mxu0 0.0
      %1119 = vmatpush1.xpose.msra.mxu0 %v1116
      %1120 = vmatprep.subr.mxu0 0.0
      %1121 = vmatpush1.xpose.msra.mxu0 0.0
      %1122 = vmatprep.subr.mxu0 0.0
      %1123 = vmatpush1.xpose.msra.mxu0 0.0
      %1124 = vmatprep.subr.mxu0 0.0
      %1125 = vmatpush1.xpose.msra.mxu0 0.0
      %1126 = vmatprep.subr.mxu0 0.0
      %1127 = vmatpush1.xpose.msra.mxu0 0.0
      %1128 = vmatprep.subr.mxu0 0.0
      %1129 = vmatpush1.xpose.msra.mxu0 0.0
      %1130 = vmatprep.subr.mxu0 0.0
      %1131 = vmatpush1.xpose.msra.mxu0 0.0
      %1132 = vmatprep.subr.mxu0 0.0
      %1133 = vmatpush1.xpose.msra.mxu0 0.0
      %1134 = vmatprep.subr.mxu0 0.0
      %1135 = vmatpush1.xpose.msra.mxu0 0.0
      %1136 = vmatprep.subr.mxu0 0.0
      %1137 = vmatpush1.xpose.msra.mxu0 0.0
      %1138 = vmatprep.subr.mxu0 0.0
      %1139 = vmatpush1.xpose.msra.mxu0 0.0
      %1140 = vmatprep.subr.mxu0 0.0
      %1141 = vmatpush1.xpose.msra.mxu0 0.0
      %1142 = vmatprep.subr.mxu0 0.0
      %1143 = vmatpush1.xpose.msra.mxu0 0.0
      %1144 = vmatprep.subr.mxu0 0.0
      %1145 = vmatpush1.xpose.msra.mxu0 0.0
      %1146 = vmatprep.subr.mxu0 0.0
      %1147 = vmatpush1.xpose.msra.mxu0 0.0
      %1148 = vmatprep.subr.mxu0 0.0
      %1149 = vmatpush1.xpose.msra.mxu0 0.0
      %1150 = vmatprep.subr.mxu0 0.0
      %1151 = vmatpush1.xpose.msra.mxu0 0.0
      %1152 = vmatprep.subr.mxu0 0.0
      %1153 = vmatpush1.xpose.msra.mxu0 0.0
      %1154 = vmatprep.subr.mxu0 0.0
      %1155 = vmatpush1.xpose.msra.mxu0 0.0
      %1156 = vmatprep.subr.mxu0 0.0
      %1157 = vmatpush1.xpose.msra.mxu0 0.0
      %1158 = vmatprep.subr.mxu0 0.0
      %1159 = vmatpush1.xpose.msra.mxu0 0.0
      %1160 = vmatprep.subr.mxu0 0.0
      %1161 = vmatpush1.xpose.msra.mxu0 0.0
      %1162 = vmatprep.subr.mxu0 0.0
      %1163 = vmatpush1.xpose.msra.mxu0 0.0
      %1164 = vmatprep.subr.mxu0 0.0
      %1165 = vmatpush1.xpose.msra.mxu0 0.0
      %1166 = vmatprep.subr.mxu0 0.0
      %1167 = vmatpush1.xpose.msra.mxu0 0.0
      %1168 = vmatprep.subr.mxu0 0.0
      %1169 = vmatpush1.xpose.msra.mxu0 0.0
      %1170 = vmatprep.subr.mxu0 0.0
      %1171 = vmatpush1.xpose.msra.mxu0 0.0
      %1172 = vmatprep.subr.mxu0 0.0
      %1173 = vmatpush1.xpose.msra.mxu0 0.0
      %1174 = vmatprep.subr.mxu0 0.0
      %1175 = vmatpush1.xpose.msra.mxu0 0.0
      %1176 = vmatprep.subr.mxu0 0.0
      %1177 = vmatpush1.xpose.msra.mxu0 0.0
      %1178 = vmatprep.subr.mxu0 0.0
      %1179 = vmatpush1.xpose.msra.mxu0 0.0
      %1180 = vmatprep.subr.mxu0 0.0
      %1181 = vmatpush1.xpose.msra.mxu0 0.0
      %1182 = vmatprep.mubr.f32.mxu0 0.0
      %1183 = vmatmul.mubr.f32.gmra.mrb[0].mxu0 %v1114
      %v1184 = vpop.f32.mrb[0].mxu0
      %v1185 = vadd.f32 0.0, %v1184
      %v1186 = vpop.f32.mrb[0].mxu0
      %1187 = vdwg.mxu0
      %v1188 = vmul.f32 %v1185, 0.35355338
      %v1189 = vadd.f32 %v1188, %v660
      %v1190 = vsel %vm779, %v1189, -inf
      %1191 = vmax.xlane.f32.xlu0 %v1190
      %v1192 = vpop.xlane.xlu0 %1191
      %v1193 = vsub.f32 %v1189, %v1192
      %v1194 = vmul.f32 %v1193, 1.442695
      %v1195 = vpow.pop %v1194
      %v1196 = vsel %vm779, %v1195, 0.0
      %1197 = vadd.xlane.f32.xlu0 %v1196
      %v1198 = vpop.xlane.xlu0 %1197
      %v1199 = vrcp.pop %v1198
      %v1200 = vmul.f32 %v1195, %v1199
      %1201 = vrot.lane.b32.xlu0 %v773, 48
      %v1202 = vpop.permute.xlu0 %1201
      %v1205 = vsel %vm779, %v1200, 0
      %1207 = vmatprep.subr.mxu0 0.0
      %1208 = vmatpush1.msra.mxu0 %v1202
      %1209 = vmatprep.subr.mxu0 0.0
      %1210 = vmatpush1.msra.mxu0 0.0
      %1211 = vmatprep.subr.mxu0 0.0
      %1212 = vmatpush1.msra.mxu0 0.0
      %1213 = vmatprep.subr.mxu0 0.0
      %1214 = vmatpush1.msra.mxu0 0.0
      %1215 = vmatprep.subr.mxu0 0.0
      %1216 = vmatpush1.msra.mxu0 0.0
      %1217 = vmatprep.subr.mxu0 0.0
      %1218 = vmatpush1.msra.mxu0 0.0
      %1219 = vmatprep.subr.mxu0 0.0
      %1220 = vmatpush1.msra.mxu0 0.0
      %1221 = vmatprep.subr.mxu0 0.0
      %1222 = vmatpush1.msra.mxu0 0.0
      %1223 = vmatprep.subr.mxu0 0.0
      %1224 = vmatpush1.msra.mxu0 0.0
      %1225 = vmatprep.subr.mxu0 0.0
      %1226 = vmatpush1.msra.mxu0 0.0
      %1227 = vmatprep.subr.mxu0 0.0
      %1228 = vmatpush1.msra.mxu0 0.0
      %1229 = vmatprep.subr.mxu0 0.0
      %1230 = vmatpush1.msra.mxu0 0.0
      %1231 = vmatprep.subr.mxu0 0.0
      %1232 = vmatpush1.msra.mxu0 0.0
      %1233 = vmatprep.subr.mxu0 0.0
      %1234 = vmatpush1.msra.mxu0 0.0
      %1235 = vmatprep.subr.mxu0 0.0
      %1236 = vmatpush1.msra.mxu0 0.0
      %1237 = vmatprep.subr.mxu0 0.0
      %1238 = vmatpush1.msra.mxu0 0.0
      %1239 = vmatprep.subr.mxu0 0.0
      %1240 = vmatpush1.msra.mxu0 0.0
      %1241 = vmatprep.subr.mxu0 0.0
      %1242 = vmatpush1.msra.mxu0 0.0
      %1243 = vmatprep.subr.mxu0 0.0
      %1244 = vmatpush1.msra.mxu0 0.0
      %1245 = vmatprep.subr.mxu0 0.0
      %1246 = vmatpush1.msra.mxu0 0.0
      %1247 = vmatprep.subr.mxu0 0.0
      %1248 = vmatpush1.msra.mxu0 0.0
      %1249 = vmatprep.subr.mxu0 0.0
      %1250 = vmatpush1.msra.mxu0 0.0
      %1251 = vmatprep.subr.mxu0 0.0
      %1252 = vmatpush1.msra.mxu0 0.0
      %1253 = vmatprep.subr.mxu0 0.0
      %1254 = vmatpush1.msra.mxu0 0.0
      %1255 = vmatprep.subr.mxu0 0.0
      %1256 = vmatpush1.msra.mxu0 0.0
      %1257 = vmatprep.subr.mxu0 0.0
      %1258 = vmatpush1.msra.mxu0 0.0
      %1259 = vmatprep.subr.mxu0 0.0
      %1260 = vmatpush1.msra.mxu0 0.0
      %1261 = vmatprep.subr.mxu0 0.0
      %1262 = vmatpush1.msra.mxu0 0.0
      %1263 = vmatprep.subr.mxu0 0.0
      %1264 = vmatpush1.msra.mxu0 0.0
      %1265 = vmatprep.subr.mxu0 0.0
      %1266 = vmatpush1.msra.mxu0 0.0
      %1267 = vmatprep.subr.mxu0 0.0
      %1268 = vmatpush1.msra.mxu0 0.0
      %1269 = vmatprep.subr.mxu0 0.0
      %1270 = vmatpush1.msra.mxu0 0.0
      %1271 = vmatprep.mubr.f32.mxu0 0.0
      %1272 = vmatmul.mubr.f32.gmra.mrb[0].mxu0 %v1205
      %v1273 = vpop.f32.mrb[0].mxu0
      %v1274 = vadd.f32 0.0, %v1273
      %v1275 = vpop.f32.mrb[0].mxu0
      %1276 = vdwg.mxu0
      %1277 = vrot.lane.b32.xlu0 %v773, 104
      %v1278 = vpop.permute.xlu0 %1277
      %1279 = vrot.lane.b32.xlu0 %v773, 72
      %v1280 = vpop.permute.xlu0 %1279
      %v1281 = vsel %vm779, %v1278, 0
      %v1283 = vsel %vm779, %v1280, 0
      %1285 = vmatprep.subr.mxu0 0.0
      %1286 = vmatpush1.xpose.msra.mxu0 %v1283
      %1287 = vmatprep.subr.mxu0 0.0
      %1288 = vmatpush1.xpose.msra.mxu0 0.0
      %1289 = vmatprep.subr.mxu0 0.0
      %1290 = vmatpush1.xpose.msra.mxu0 0.0
      %1291 = vmatprep.subr.mxu0 0.0
      %1292 = vmatpush1.xpose.msra.mxu0 0.0
      %1293 = vmatprep.subr.mxu0 0.0
      %1294 = vmatpush1.xpose.msra.mxu0 0.0
      %1295 = vmatprep.subr.mxu0 0.0
      %1296 = vmatpush1.xpose.msra.mxu0 0.0
      %1297 = vmatprep.subr.mxu0 0.0
      %1298 = vmatpush1.xpose.msra.mxu0 0.0
      %1299 = vmatprep.subr.mxu0 0.0
      %1300 = vmatpush1.xpose.msra.mxu0 0.0
      %1301 = vmatprep.subr.mxu0 0.0
      %1302 = vmatpush1.xpose.msra.mxu0 0.0
      %1303 = vmatprep.subr.mxu0 0.0
      %1304 = vmatpush1.xpose.msra.mxu0 0.0
      %1305 = vmatprep.subr.mxu0 0.0
      %1306 = vmatpush1.xpose.msra.mxu0 0.0
      %1307 = vmatprep.subr.mxu0 0.0
      %1308 = vmatpush1.xpose.msra.mxu0 0.0
      %1309 = vmatprep.subr.mxu0 0.0
      %1310 = vmatpush1.xpose.msra.mxu0 0.0
      %1311 = vmatprep.subr.mxu0 0.0
      %1312 = vmatpush1.xpose.msra.mxu0 0.0
      %1313 = vmatprep.subr.mxu0 0.0
      %1314 = vmatpush1.xpose.msra.mxu0 0.0
      %1315 = vmatprep.subr.mxu0 0.0
      %1316 = vmatpush1.xpose.msra.mxu0 0.0
      %1317 = vmatprep.subr.mxu0 0.0
      %1318 = vmatpush1.xpose.msra.mxu0 0.0
      %1319 = vmatprep.subr.mxu0 0.0
      %1320 = vmatpush1.xpose.msra.mxu0 0.0
      %1321 = vmatprep.subr.mxu0 0.0
      %1322 = vmatpush1.xpose.msra.mxu0 0.0
      %1323 = vmatprep.subr.mxu0 0.0
      %1324 = vmatpush1.xpose.msra.mxu0 0.0
      %1325 = vmatprep.subr.mxu0 0.0
      %1326 = vmatpush1.xpose.msra.mxu0 0.0
      %1327 = vmatprep.subr.mxu0 0.0
      %1328 = vmatpush1.xpose.msra.mxu0 0.0
      %1329 = vmatprep.subr.mxu0 0.0
      %1330 = vmatpush1.xpose.msra.mxu0 0.0
      %1331 = vmatprep.subr.mxu0 0.0
      %1332 = vmatpush1.xpose.msra.mxu0 0.0
      %1333 = vmatprep.subr.mxu0 0.0
      %1334 = vmatpush1.xpose.msra.mxu0 0.0
      %1335 = vmatprep.subr.mxu0 0.0
      %1336 = vmatpush1.xpose.msra.mxu0 0.0
      %1337 = vmatprep.subr.mxu0 0.0
      %1338 = vmatpush1.xpose.msra.mxu0 0.0
      %1339 = vmatprep.subr.mxu0 0.0
      %1340 = vmatpush1.xpose.msra.mxu0 0.0
      %1341 = vmatprep.subr.mxu0 0.0
      %1342 = vmatpush1.xpose.msra.mxu0 0.0
      %1343 = vmatprep.subr.mxu0 0.0
      %1344 = vmatpush1.xpose.msra.mxu0 0.0
      %1345 = vmatprep.subr.mxu0 0.0
      %1346 = vmatpush1.xpose.msra.mxu0 0.0
      %1347 = vmatprep.subr.mxu0 0.0
      %1348 = vmatpush1.xpose.msra.mxu0 0.0
      %1349 = vmatprep.mubr.f32.mxu0 0.0
      %1350 = vmatmul.mubr.f32.gmra.mrb[0].mxu0 %v1281
      %v1351 = vpop.f32.mrb[0].mxu0
      %v1352 = vadd.f32 0.0, %v1351
      %v1353 = vpop.f32.mrb[0].mxu0
      %1354 = vdwg.mxu0
      %v1355 = vmul.f32 %v1352, 0.35355338
      %v1356 = vadd.f32 %v1355, %v660
      %v1357 = vsel %vm779, %v1356, -inf
      %1358 = vmax.xlane.f32.xlu0 %v1357
      %v1359 = vpop.xlane.xlu0 %1358
      %v1360 = vsub.f32 %v1356, %v1359
      %v1361 = vmul.f32 %v1360, 1.442695
      %v1362 = vpow.pop %v1361
      %v1363 = vsel %vm779, %v1362, 0.0
      %1364 = vadd.xlane.f32.xlu0 %v1363
      %v1365 = vpop.xlane.xlu0 %1364
      %v1366 = vrcp.pop %v1365
      %v1367 = vmul.f32 %v1362, %v1366
      %1368 = vrot.lane.b32.xlu0 %v773, 40
      %v1369 = vpop.permute.xlu0 %1368
      %v1372 = vsel %vm779, %v1367, 0
      %1374 = vmatprep.subr.mxu0 0.0
      %1375 = vmatpush1.msra.mxu0 %v1369
      %1376 = vmatprep.subr.mxu0 0.0
      %1377 = vmatpush1.msra.mxu0 0.0
      %1378 = vmatprep.subr.mxu0 0.0
      %1379 = vmatpush1.msra.mxu0 0.0
      %1380 = vmatprep.subr.mxu0 0.0
      %1381 = vmatpush1.msra.mxu0 0.0
      %1382 = vmatprep.subr.mxu0 0.0
      %1383 = vmatpush1.msra.mxu0 0.0
      %1384 = vmatprep.subr.mxu0 0.0
      %1385 = vmatpush1.msra.mxu0 0.0
      %1386 = vmatprep.subr.mxu0 0.0
      %1387 = vmatpush1.msra.mxu0 0.0
      %1388 = vmatprep.subr.mxu0 0.0
      %1389 = vmatpush1.msra.mxu0 0.0
      %1390 = vmatprep.subr.mxu0 0.0
      %1391 = vmatpush1.msra.mxu0 0.0
      %1392 = vmatprep.subr.mxu0 0.0
      %1393 = vmatpush1.msra.mxu0 0.0
      %1394 = vmatprep.subr.mxu0 0.0
      %1395 = vmatpush1.msra.mxu0 0.0
      %1396 = vmatprep.subr.mxu0 0.0
      %1397 = vmatpush1.msra.mxu0 0.0
      %1398 = vmatprep.subr.mxu0 0.0
      %1399 = vmatpush1.msra.mxu0 0.0
      %1400 = vmatprep.subr.mxu0 0.0
      %1401 = vmatpush1.msra.mxu0 0.0
      %1402 = vmatprep.subr.mxu0 0.0
      %1403 = vmatpush1.msra.mxu0 0.0
      %1404 = vmatprep.subr.mxu0 0.0
      %1405 = vmatpush1.msra.mxu0 0.0
      %1406 = vmatprep.subr.mxu0 0.0
      %1407 = vmatpush1.msra.mxu0 0.0
      %1408 = vmatprep.subr.mxu0 0.0
      %1409 = vmatpush1.msra.mxu0 0.0
      %1410 = vmatprep.subr.mxu0 0.0
      %1411 = vmatpush1.msra.mxu0 0.0
      %1412 = vmatprep.subr.mxu0 0.0
      %1413 = vmatpush1.msra.mxu0 0.0
      %1414 = vmatprep.subr.mxu0 0.0
      %1415 = vmatpush1.msra.mxu0 0.0
      %1416 = vmatprep.subr.mxu0 0.0
      %1417 = vmatpush1.msra.mxu0 0.0
      %1418 = vmatprep.subr.mxu0 0.0
      %1419 = vmatpush1.msra.mxu0 0.0
      %1420 = vmatprep.subr.mxu0 0.0
      %1421 = vmatpush1.msra.mxu0 0.0
      %1422 = vmatprep.subr.mxu0 0.0
      %1423 = vmatpush1.msra.mxu0 0.0
      %1424 = vmatprep.subr.mxu0 0.0
      %1425 = vmatpush1.msra.mxu0 0.0
      %1426 = vmatprep.subr.mxu0 0.0
      %1427 = vmatpush1.msra.mxu0 0.0
      %1428 = vmatprep.subr.mxu0 0.0
      %1429 = vmatpush1.msra.mxu0 0.0
      %1430 = vmatprep.subr.mxu0 0.0
      %1431 = vmatpush1.msra.mxu0 0.0
      %1432 = vmatprep.subr.mxu0 0.0
      %1433 = vmatpush1.msra.mxu0 0.0
      %1434 = vmatprep.subr.mxu0 0.0
      %1435 = vmatpush1.msra.mxu0 0.0
      %1436 = vmatprep.subr.mxu0 0.0
      %1437 = vmatpush1.msra.mxu0 0.0
      %1438 = vmatprep.mubr.f32.mxu0 0.0
      %1439 = vmatmul.mubr.f32.gmra.mrb[0].mxu0 %v1372
      %v1440 = vpop.f32.mrb[0].mxu0
      %v1441 = vadd.f32 0.0, %v1440
      %v1442 = vpop.f32.mrb[0].mxu0
      %1443 = vdwg.mxu0
      %1445 = vrot.lane.b32.xlu0 %v1107, 8
      %v1446 = vpop.permute.xlu0 %1445
      %1449 = vrot.lane.b32.xlu0 %v1274, 16
      %v1450 = vpop.permute.xlu0 %1449
      %1453 = vrot.lane.b32.xlu0 %v1441, 24
      %v1454 = vpop.permute.xlu0 %1453
      %v1456 = vsel %vm779, %v940, %v1446
      %vm1457 = vcmask 130048
      %v1458 = vsel %vm1457, %v1456, %v1450
      %vm1459 = vcmask 195584
      %v1460 = vsel %vm1459, %v1458, %v1454
      %v1461 = vld [vmem:[%s617] sm:$0xff]
      %v1462 = vld [vmem:[%s617 + $0x8] sm:$0xff]
      %v1463 = vld [vmem:[%s617 + $0x10] sm:$0xff]
      %v1464 = vld [vmem:[%s617 + $0x18] sm:$0xff]
      %v1466 = vsel %vm663, %v1460, 0
      %1468 = vmatprep.subr.mxu0 0.0
      %1469 = vmatpush1.msra.mxu0 %v1461
      %1470 = vmatprep.subr.mxu0 0.0
      %1471 = vmatpush1.msra.mxu0 %v1462
      %1472 = vmatprep.subr.mxu0 0.0
      %1473 = vmatpush1.msra.mxu0 %v1463
      %1474 = vmatprep.subr.mxu0 0.0
      %1475 = vmatpush1.msra.mxu0 %v1464
      %1476 = vmatprep.subr.mxu0 0.0
      %1477 = vmatpush1.msra.mxu0 0.0
      %1478 = vmatprep.subr.mxu0 0.0
      %1479 = vmatpush1.msra.mxu0 0.0
      %1480 = vmatprep.subr.mxu0 0.0
      %1481 = vmatpush1.msra.mxu0 0.0
      %1482 = vmatprep.subr.mxu0 0.0
      %1483 = vmatpush1.msra.mxu0 0.0
      %1484 = vmatprep.subr.mxu0 0.0
      %1485 = vmatpush1.msra.mxu0 0.0
      %1486 = vmatprep.subr.mxu0 0.0
      %1487 = vmatpush1.msra.mxu0 0.0
      %1488 = vmatprep.subr.mxu0 0.0
      %1489 = vmatpush1.msra.mxu0 0.0
      %1490 = vmatprep.subr.mxu0 0.0
      %1491 = vmatpush1.msra.mxu0 0.0
      %1492 = vmatprep.subr.mxu0 0.0
      %1493 = vmatpush1.msra.mxu0 0.0
      %1494 = vmatprep.subr.mxu0 0.0
      %1495 = vmatpush1.msra.mxu0 0.0
      %1496 = vmatprep.subr.mxu0 0.0
      %1497 = vmatpush1.msra.mxu0 0.0
      %1498 = vmatprep.subr.mxu0 0.0
      %1499 = vmatpush1.msra.mxu0 0.0
      %1500 = vmatprep.subr.mxu0 0.0
      %1501 = vmatpush1.msra.mxu0 0.0
      %1502 = vmatprep.subr.mxu0 0.0
      %1503 = vmatpush1.msra.mxu0 0.0
      %1504 = vmatprep.subr.mxu0 0.0
      %1505 = vmatpush1.msra.mxu0 0.0
      %1506 = vmatprep.subr.mxu0 0.0
      %1507 = vmatpush1.msra.mxu0 0.0
      %1508 = vmatprep.subr.mxu0 0.0
      %1509 = vmatpush1.msra.mxu0 0.0
      %1510 = vmatprep.subr.mxu0 0.0
      %1511 = vmatpush1.msra.mxu0 0.0
      %1512 = vmatprep.subr.mxu0 0.0
      %1513 = vmatpush1.msra.mxu0 0.0
      %1514 = vmatprep.subr.mxu0 0.0
      %1515 = vmatpush1.msra.mxu0 0.0
      %1516 = vmatprep.subr.mxu0 0.0
      %1517 = vmatpush1.msra.mxu0 0.0
      %1518 = vmatprep.subr.mxu0 0.0
      %1519 = vmatpush1.msra.mxu0 0.0
      %1520 = vmatprep.subr.mxu0 0.0
      %1521 = vmatpush1.msra.mxu0 0.0
      %1522 = vmatprep.subr.mxu0 0.0
      %1523 = vmatpush1.msra.mxu0 0.0
      %1524 = vmatprep.subr.mxu0 0.0
      %1525 = vmatpush1.msra.mxu0 0.0
      %1526 = vmatprep.subr.mxu0 0.0
      %1527 = vmatpush1.msra.mxu0 0.0
      %1528 = vmatprep.subr.mxu0 0.0
      %1529 = vmatpush1.msra.mxu0 0.0
      %1530 = vmatprep.subr.mxu0 0.0
      %1531 = vmatpush1.msra.mxu0 0.0
      %1532 = vmatprep.mubr.f32.mxu0 0.0
      %1533 = vmatmul.mubr.f32.gmra.mrb[0].mxu0 %v1466
      %v1534 = vpop.f32.mrb[0].mxu0
      %v1535 = vadd.f32 0.0, %v1534
      %v1536 = vpop.f32.mrb[0].mxu0
      %1537 = vdwg.mxu0
      %v1538 = vadd.f32 %v654, %v1535
      %v1539 = vld [vmem:[%s620] sm:$0x1]
      %v1541 = vlaneseq
      %v1542 = vshrl.u32 %v1541, 7
      %v1543 = vsub.s32 0, %v1542
      %v1544 = vrot.slane %v1539, %v1543
      %v1546 = vadd.f32 %v1538, %v1544
      %v1547 = vld [vmem:[%s623] sm:$0x1]
      %v1548 = vld [vmem:[%s626] sm:$0x1]
      %v1549 = vsel %vm663, %v1546, 0.0
      %1550 = vadd.xlane.f32.xlu0 %v1549
      %v1551 = vpop.xlane.xlu0 %1550
      %v1552 = vmul.f32 %v1551, %v667
      %v1553 = vsub.f32 %v1546, %v1552
      %v1554 = vmul.f32 %v1553, %v1553
      %v1555 = vsel %vm663, %v1554, 0.0
      %1556 = vadd.xlane.f32.xlu0 %v1555
      %v1557 = vpop.xlane.xlu0 %1556
      %v1558 = vmul.f32 %v1557, %v667
      %v1559 = vadd.f32 %v1558, 1e-05
      %v1560 = vrsqrt.pop %v1559
      %v1561 = vmul.f32 %v1553, %v1560
      %v1563 = vlaneseq
      %v1564 = vshrl.u32 %v1563, 7
      %v1565 = vsub.s32 0, %v1564
      %v1566 = vrot.slane %v1547, %v1565
      %v1568 = vmul.f32 %v1561, %v1566
      %v1570 = vlaneseq
      %v1571 = vshrl.u32 %v1570, 7
      %v1572 = vsub.s32 0, %v1571
      %v1573 = vrot.slane %v1548, %v1572
      %v1575 = vadd.f32 %v1568, %v1573
      %v1576 = vld [vmem:[%s631] sm:$0xff]
      %v1577 = vld [vmem:[%s631 + $0x8] sm:$0xff]
      %v1578 = vld [vmem:[%s631 + $0x10] sm:$0xff]
      %v1579 = vld [vmem:[%s631 + $0x18] sm:$0xff]
      %v1580 = vld [vmem:[%s634] sm:$0x1]
      %v1582 = vlaneseq
      %v1583 = vshrl.u32 %v1582, 7
      %v1584 = vsub.s32 0, %v1583
      %v1585 = vrot.slane %v1580, %v1584
      %v1588 = vsel %vm663, %v1575, 0
      %1590 = vmatprep.subr.mxu0 0.0
      %1591 = vmatpush1.msra.mxu0 %v1576
      %1592 = vmatprep.subr.mxu0 0.0
      %1593 = vmatpush1.msra.mxu0 %v1577
      %1594 = vmatprep.subr.mxu0 0.0
      %1595 = vmatpush1.msra.mxu0 %v1578
      %1596 = vmatprep.subr.mxu0 0.0
      %1597 = vmatpush1.msra.mxu0 %v1579
      %1598 = vmatprep.subr.mxu0 0.0
      %1599 = vmatpush1.msra.mxu0 0.0
      %1600 = vmatprep.subr.mxu0 0.0
      %1601 = vmatpush1.msra.mxu0 0.0
      %1602 = vmatprep.subr.mxu0 0.0
      %1603 = vmatpush1.msra.mxu0 0.0
      %1604 = vmatprep.subr.mxu0 0.0
      %1605 = vmatpush1.msra.mxu0 0.0
      %1606 = vmatprep.subr.mxu0 0.0
      %1607 = vmatpush1.msra.mxu0 0.0
      %1608 = vmatprep.subr.mxu0 0.0
      %1609 = vmatpush1.msra.mxu0 0.0
      %1610 = vmatprep.subr.mxu0 0.0
      %1611 = vmatpush1.msra.mxu0 0.0
      %1612 = vmatprep.subr.mxu0 0.0
      %1613 = vmatpush1.msra.mxu0 0.0
      %1614 = vmatprep.subr.mxu0 0.0
      %1615 = vmatpush1.msra.mxu0 0.0
      %1616 = vmatprep.subr.mxu0 0.0
      %1617 = vmatpush1.msra.mxu0 0.0
      %1618 = vmatprep.subr.mxu0 0.0
      %1619 = vmatpush1.msra.mxu0 0.0
      %1620 = vmatprep.subr.mxu0 0.0
      %1621 = vmatpush1.msra.mxu0 0.0
      %1622 = vmatprep.subr.mxu0 0.0
      %1623 = vmatpush1.msra.mxu0 0.0
      %1624 = vmatprep.subr.mxu0 0.0
      %1625 = vmatpush1.msra.mxu0 0.0
      %1626 = vmatprep.subr.mxu0 0.0
      %1627 = vmatpush1.msra.mxu0 0.0
      %1628 = vmatprep.subr.mxu0 0.0
      %1629 = vmatpush1.msra.mxu0 0.0
      %1630 = vmatprep.subr.mxu0 0.0
      %1631 = vmatpush1.msra.mxu0 0.0
      %1632 = vmatprep.subr.mxu0 0.0
      %1633 = vmatpush1.msra.mxu0 0.0
      %1634 = vmatprep.subr.mxu0 0.0
      %1635 = vmatpush1.msra.mxu0 0.0
      %1636 = vmatprep.subr.mxu0 0.0
      %1637 = vmatpush1.msra.mxu0 0.0
      %1638 = vmatprep.subr.mxu0 0.0
      %1639 = vmatpush1.msra.mxu0 0.0
      %1640 = vmatprep.subr.mxu0 0.0
      %1641 = vmatpush1.msra.mxu0 0.0
      %1642 = vmatprep.subr.mxu0 0.0
      %1643 = vmatpush1.msra.mxu0 0.0
      %1644 = vmatprep.subr.mxu0 0.0
      %1645 = vmatpush1.msra.mxu0 0.0
      %1646 = vmatprep.subr.mxu0 0.0
      %1647 = vmatpush1.msra.mxu0 0.0
      %1648 = vmatprep.subr.mxu0 0.0
      %1649 = vmatpush1.msra.mxu0 0.0
      %1650 = vmatprep.subr.mxu0 0.0
      %1651 = vmatpush1.msra.mxu0 0.0
      %1652 = vmatprep.subr.mxu0 0.0
      %1653 = vmatpush1.msra.mxu0 0.0
      %1654 = vmatprep.mubr.f32.mxu0 0.0
      %1655 = vmatmul.mubr.f32.gmra.mrb[0].mxu0 %v1588
      %v1656 = vpop.f32.mrb[0].mxu0
      %v1657 = vadd.f32 %v1585, %v1656
      %v1658 = vpop.f32.mrb[0].mxu0
      %1659 = vdwg.mxu0
      %v1660 = vmul.f32 %v1657, %v1657
      %v1661 = vmul.f32 %v1657, %v1660
      %v1662 = vmul.f32 %v1661, 0.044715
      %v1663 = vadd.f32 %v1657, %v1662
      %v1664 = vmul.f32 %v1663, 0.7978846
      %v1665 = vtanh.pop %v1664
      %v1666 = vadd.f32 %v1665, 1.0
      %v1667 = vmul.f32 %v1666, 0.5
      %v1668 = vmul.f32 %v1657, %v1667
      %v1669 = vld [vmem:[%s639] sm:$0xff]
      %v1670 = vld [vmem:[%s639 + $0x8] sm:$0xff]
      %v1671 = vld [vmem:[%s639 + $0x10] sm:$0xff]
      %v1672 = vld [vmem:[%s639 + $0x18] sm:$0xff]
      %v1673 = vld [vmem:[%s639 + $0x20] sm:$0xff]
      %v1674 = vld [vmem:[%s639 + $0x28] sm:$0xff]
      %v1675 = vld [vmem:[%s639 + $0x30] sm:$0xff]
      %v1676 = vld [vmem:[%s639 + $0x38] sm:$0xff]
      %v1677 = vld [vmem:[%s639 + $0x40] sm:$0xff]
      %v1678 = vld [vmem:[%s639 + $0x48] sm:$0xff]
      %v1679 = vld [vmem:[%s639 + $0x50] sm:$0xff]
      %v1680 = vld [vmem:[%s639 + $0x58] sm:$0xff]
      %v1681 = vld [vmem:[%s639 + $0x60] sm:$0xff]
      %v1682 = vld [vmem:[%s639 + $0x68] sm:$0xff]
      %v1683 = vld [vmem:[%s639 + $0x70] sm:$0xff]
      %v1684 = vld [vmem:[%s639 + $0x78] sm:$0xff]
      %v1685 = vld [vmem:[%s642] sm:$0x1]
      %v1687 = vlaneseq
      %v1688 = vshrl.u32 %v1687, 7
      %v1689 = vsub.s32 0, %v1688
      %v1690 = vrot.slane %v1685, %v1689
      %1692 = vmatprep.subr.mxu0 0.0
      %1693 = vmatpush1.msra.mxu0 %v1669
      %1694 = vmatprep.subr.mxu0 0.0
      %1695 = vmatpush1.msra.mxu0 %v1670
      %1696 = vmatprep.subr.mxu0 0.0
      %1697 = vmatpush1.msra.mxu0 %v1671
      %1698 = vmatprep.subr.mxu0 0.0
      %1699 = vmatpush1.msra.mxu0 %v1672
      %1700 = vmatprep.subr.mxu0 0.0
      %1701 = vmatpush1.msra.mxu0 %v1673
      %1702 = vmatprep.subr.mxu0 0.0
      %1703 = vmatpush1.msra.mxu0 %v1674
      %1704 = vmatprep.subr.mxu0 0.0
      %1705 = vmatpush1.msra.mxu0 %v1675
      %1706 = vmatprep.subr.mxu0 0.0
      %1707 = vmatpush1.msra.mxu0 %v1676
      %1708 = vmatprep.subr.mxu0 0.0
      %1709 = vmatpush1.msra.mxu0 %v1677
      %1710 = vmatprep.subr.mxu0 0.0
      %1711 = vmatpush1.msra.mxu0 %v1678
      %1712 = vmatprep.subr.mxu0 0.0
      %1713 = vmatpush1.msra.mxu0 %v1679
      %1714 = vmatprep.subr.mxu0 0.0
      %1715 = vmatpush1.msra.mxu0 %v1680
      %1716 = vmatprep.subr.mxu0 0.0
      %1717 = vmatpush1.msra.mxu0 %v1681
      %1718 = vmatprep.subr.mxu0 0.0
      %1719 = vmatpush1.msra.mxu0 %v1682
      %1720 = vmatprep.subr.mxu0 0.0
      %1721 = vmatpush1.msra.mxu0 %v1683
      %1722 = vmatprep.subr.mxu0 0.0
      %1723 = vmatpush1.msra.mxu0 %v1684
      %1724 = vmatprep.subr.mxu0 0.0
      %1725 = vmatpush1.msra.mxu0 0.0
      %1726 = vmatprep.subr.mxu0 0.0
      %1727 = vmatpush1.msra.mxu0 0.0
      %1728 = vmatprep.subr.mxu0 0.0
      %1729 = vmatpush1.msra.mxu0 0.0
      %1730 = vmatprep.subr.mxu0 0.0
      %1731 = vmatpush1.msra.mxu0 0.0
      %1732 = vmatprep.subr.mxu0 0.0
      %1733 = vmatpush1.msra.mxu0 0.0
      %1734 = vmatprep.subr.mxu0 0.0
      %1735 = vmatpush1.msra.mxu0 0.0
      %1736 = vmatprep.subr.mxu0 0.0
      %1737 = vmatpush1.msra.mxu0 0.0
      %1738 = vmatprep.subr.mxu0 0.0
      %1739 = vmatpush1.msra.mxu0 0.0
      %1740 = vmatprep.subr.mxu0 0.0
      %1741 = vmatpush1.msra.mxu0 0.0
      %1742 = vmatprep.subr.mxu0 0.0
      %1743 = vmatpush1.msra.mxu0 0.0
      %1744 = vmatprep.subr.mxu0 0.0
      %1745 = vmatpush1.msra.mxu0 0.0
      %1746 = vmatprep.subr.mxu0 0.0
      %1747 = vmatpush1.msra.mxu0 0.0
      %1748 = vmatprep.subr.mxu0 0.0
      %1749 = vmatpush1.msra.mxu0 0.0
      %1750 = vmatprep.subr.mxu0 0.0
      %1751 = vmatpush1.msra.mxu0 0.0
      %1752 = vmatprep.subr.mxu0 0.0
      %1753 = vmatpush1.msra.mxu0 0.0
      %1754 = vmatprep.subr.mxu0 0.0
      %1755 = vmatpush1.msra.mxu0 0.0
      %1756 = vmatprep.mubr.f32.mxu0 0.0
      %1757 = vmatmul.mubr.f32.gmra.mrb[0].mxu0 %v1668
      %v1758 = vpop.f32.mrb[0].mxu0
      %v1759 = vadd.f32 %v1690, %v1758
      %v1760 = vpop.f32.mrb[0].mxu0
      %1761 = vdwg.mxu0
      %v1762 = vadd.f32 %v1546, %v1759
      %1763 = vst.msk [vmem:[#allocation2] sm:$0xff] %vm663, %v1762
      %p1764 = scmp.eq.s32.totalorder %s36, 1
      // Predicated region
      $region77: #{clip_forward.5} parent=71 // pred_check
        %p1765 = pneg %p1764
      $region78: #{clip_forward.5} parent=71 // pred_check_branch
        %1767 = sbr.rel (%p1765) target = $region80
      $region79: #{clip_forward.5} parent=71 // pred_region
        %1768 = vst.msk [vmem:[%s646] sm:$0xff] %vm663, %v1762
      $region80: #{clip_forward.5} parent=71 // pred_fallthru
        _
      %p1769 = scmp.lt.s32.totalorder %s35, 1
      %s1770 = scalar_select %p1769, %s35, 1
      %s1771 = smul.addr %s1770, 8
      %s1772 = scalar_lea.vmem %s14, %s1771
      // Predicated region
      $region81: #{clip_forward.5} parent=71 // pred_check
        %p1773 = pneg %p399
      $region82: #{clip_forward.5} parent=71 // pred_check_branch
        %1775 = sbr.rel (%p1773) target = $region84
      $region83: #{clip_forward.5} parent=71 // pred_region
        _
      $region84: #{clip_forward.5} parent=71 // pred_fallthru
        _
    $region72: #{clip_forward.5} parent=5 // pred_fallthru
      _
    %p1776 = scmp.le.s32.totalorder 2, %s26
    // Predicated region
    $region85: #{clip_forward.5} parent=5 // pred_check
      %p1777 = pneg %p1776
    $region86: #{clip_forward.5} parent=5 // pred_check_branch
      %1779 = sbr.rel (%p1777) target = $region88
    $region87: #{clip_forward.5} parent=5 // pred_region
      %s1780 = ssub.s32 %s26, 2
      // Predicated region
      $region89: #{clip_forward.5} parent=87 // pred_check
        %p1781 = pneg %p405
      $region90: #{clip_forward.5} parent=87 // pred_check_branch
        %1783 = sbr.rel (%p1781) target = $region92
      $region91: #{clip_forward.5} parent=87 // pred_region
        %p1784 = scmp.lt.s32.totalorder %s37, 1
        %s1785 = scalar_select %p1784, %s37, 1
        %s1786 = smul.addr %s1785, 8
        %s1787 = scalar_lea.vmem %s14, %s1786
      $region92: #{clip_forward.5} parent=87 // pred_fallthru
        _
    $region88: #{clip_forward.5} parent=5 // pred_fallthru
      _
  $region6: #{clip_forward.5} parent=0 // loop_footer
    %s30 = sadd.s32 1, %s26
  $region7: #{clip_forward.5} parent=0 // loop_footer_branch
    %25 = sbr.rel target = $region3
  $region8: #{clip_forward.5} parent=0 // loop_exit
    _

// kernel: clip_forward.7
$region0: #{clip_forward.7}
  #allocation0 [shape = 'u32[]', space=smem, size = 0x4, offset = 0x4, fixed_abs, tag = 'smem constant byte address 0x4 - core index']
  #allocation1 [shape = 'u32[144,128]{1,0:T(1,128)}', space=vmem, size = 0x12000, scoped, tag = 'internal scratch']
  #allocation2 [shape = 'f32[1]{0:T(128)S(6)}', space=smem, size = 0x200, scoped, tag = 'scoped memory for clip_forward.7']
  %s0 = inlined_call_operand.vmem [shape: s32[2], index: 0, kind: input, shape index: {}]
  %s1 = inlined_call_operand.<no memory space> [shape: f32[1], index: 1, kind: input, shape index: {}]
  %s2 = inlined_call_operand.vmem [shape: f32[16,32], index: 2, kind: input, shape index: {}]
  %s3 = inlined_call_operand.vmem [shape: f32[16,32], index: 3, kind: input, shape index: {}]
  %s4 = inlined_call_operand.vmem [shape: f32[1,32], index: 4, kind: input, shape index: {}]
  %s5 = inlined_call_operand.vmem [shape: f32[1,32], index: 5, kind: input, shape index: {}]
  %s6 = inlined_call_operand.vmem [shape: f32[32,16], index: 6, kind: input, shape index: {}]
  %s7 = inlined_call_operand.vmem [shape: f32[1,32], index: 7, kind: input, shape index: {}]
  %s8 = inlined_call_operand.vmem [shape: f32[1,32], index: 8, kind: input, shape index: {}]
  %s9 = inlined_call_operand.vmem [shape: f32[32,16], index: 9, kind: input, shape index: {}]
  %s10 = inlined_call_operand.hbm [shape: f32[1,1], index: 10, kind: output, shape index: {}]
  %s11 = sld [smem:[#allocation0]]
  $region54: #{clip_forward.7} parent=0
    _
  %s13 = ssub.s32 1, %s11
  %s14 = scalar_select 0, %s13, %s11
  %15 = sst [smem:[#allocation2]] %s1
  $region1: #{clip_forward.7} parent=0
    #allocation3 [shape = 'u8[512]{0}', space=smem, size = 0x200, scoped, tag = 'input window, operand 0, single buffered']
    #allocation4 [shape = 's32[1]{0}', space=sflag, size = 0x4, scoped, tag = 'scoped memory for clip_forward.7']
    #allocation5 [shape = 's32[1]{0}', space=sflag, size = 0x4, scoped, tag = 'scoped memory for clip_forward.7']
    #allocation6 [shape = 'u8[512]{0}', space=vmem, size = 0x400, scoped, tag = 'output window, operand 0, single buffered']
    %16 = vsyncpa [#allocation5], 0
    %17 = vsyncpa [#allocation4], 0
    // Predicated region
    $region2: #{clip_forward.7} parent=1 // pred_check
      _
    $region3: #{clip_forward.7} parent=1 // pred_check_branch
      %19 = sbr.rel (0) target = $region5
    $region4: #{clip_forward.7} parent=1 // pred_region
      %s21 = ssub.s32 16, 16
      %22 = vsyncadd [#allocation5], %s21
      %s24 = sshll.u32 %s0, 4
      %s25 = int_to_ptr.vmem [resolvable:$true] %s24
      %27 = dma.vmem_to_smem %s25, 16, [#allocation3], [#allocation5]
    $region5: #{clip_forward.7} parent=1 // pred_fallthru
      _
    // Predicated region
    $region6: #{clip_forward.7} parent=1 // pred_check
      _
    $region7: #{clip_forward.7} parent=1 // pred_check_branch
      %29 = sbr.rel (0) target = $region9
    $region8: #{clip_forward.7} parent=1 // pred_region
      _
    $region9: #{clip_forward.7} parent=1 // pred_fallthru
      _
    // Predicated region
    $region10: #{clip_forward.7} parent=1 // pred_check
      _
    $region11: #{clip_forward.7} parent=1 // pred_check_branch
      %31 = sbr.rel (0) target = $region13
    $region12: #{clip_forward.7} parent=1 // pred_region
      _
    $region13: #{clip_forward.7} parent=1 // pred_fallthru
      _
    // Predicated region
    $region14: #{clip_forward.7} parent=1 // pred_check
      _
    $region15: #{clip_forward.7} parent=1 // pred_check_branch
      %33 = sbr.rel (0) target = $region17
    $region16: #{clip_forward.7} parent=1 // pred_region
      _
    $region17: #{clip_forward.7} parent=1 // pred_fallthru
      _
    // Predicated region
    $region18: #{clip_forward.7} parent=1 // pred_check
      _
    $region19: #{clip_forward.7} parent=1 // pred_check_branch
      %35 = sbr.rel (0) target = $region21
    $region20: #{clip_forward.7} parent=1 // pred_region
      _
    $region21: #{clip_forward.7} parent=1 // pred_fallthru
      _
    // Predicated region
    $region22: #{clip_forward.7} parent=1 // pred_check
      _
    $region23: #{clip_forward.7} parent=1 // pred_check_branch
      %37 = sbr.rel (0) target = $region25
    $region24: #{clip_forward.7} parent=1 // pred_region
      _
    $region25: #{clip_forward.7} parent=1 // pred_fallthru
      _
    // Predicated region
    $region26: #{clip_forward.7} parent=1 // pred_check
      _
    $region27: #{clip_forward.7} parent=1 // pred_check_branch
      %39 = sbr.rel (0) target = $region29
    $region28: #{clip_forward.7} parent=1 // pred_region
      _
    $region29: #{clip_forward.7} parent=1 // pred_fallthru
      _
    // Predicated region
    $region30: #{clip_forward.7} parent=1 // pred_check
      _
    $region31: #{clip_forward.7} parent=1 // pred_check_branch
      %41 = sbr.rel (0) target = $region33
    $region32: #{clip_forward.7} parent=1 // pred_region
      _
    $region33: #{clip_forward.7} parent=1 // pred_fallthru
      _
    // Predicated region
    $region34: #{clip_forward.7} parent=1 // pred_check
      _
    $region35: #{clip_forward.7} parent=1 // pred_check_branch
      %43 = sbr.rel (0) target = $region37
    $region36: #{clip_forward.7} parent=1 // pred_region
      _
    $region37: #{clip_forward.7} parent=1 // pred_fallthru
      _
    // Predicated region
    $region38: #{clip_forward.7} parent=1 // pred_check
      _
    $region39: #{clip_forward.7} parent=1 // pred_check_branch
      %45 = sbr.rel (0) target = $region41
    $region40: #{clip_forward.7} parent=1 // pred_region
      _
    $region41: #{clip_forward.7} parent=1 // pred_fallthru
      _
    // Predicated region
    $region42: #{clip_forward.7} parent=1 // pred_check
      _
    $region43: #{clip_forward.7} parent=1 // pred_check_branch
      %47 = sbr.rel (0) target = $region45
    $region44: #{clip_forward.7} parent=1 // pred_region
      %48 = dma.done [#allocation5], 16
    $region45: #{clip_forward.7} parent=1 // pred_fallthru
      _
    %49 = sfence
    %v50 = vld [vmem:[%s2] sm:$0x1]
    %v51 = vld [vmem:[%s2 + $0x8] sm:$0x1]
    %v53 = vrot.slane %v51, 7
    %vm55 = vcmask 1040384
    %v56 = vsel %vm55, %v50, %v53
    %s57 = sld [smem:[#allocation3]]
    %s58 = scalar_lea.vmem %s3, %s57
    %v59 = vld [vmem:[%s58] sm:$0x1]
    %s60 = sld [smem:[#allocation3 + $0x1]]
    %s61 = scalar_lea.vmem %s3, %s60
    %v62 = vld [vmem:[%s61] sm:$0x1]
    %v64 = vrot.slane %v62, 7
    %v66 = vsel %vm55, %v59, %v64
    %v67 = vld [vmem:[%s4] sm:$0x1]
    %v68 = vld [vmem:[%s5] sm:$0x1]
    %vm69 = vcmask 254976
    %v70 = vsel %vm69, %v56, 0.0
    %71 = vadd.xlane.f32.xlu0 %v70
    %v72 = vpop.xlane.xlu0 %71
    %v73 = vrcp.pop 32.0
    %v74 = vmul.f32 %v72, %v73
    %v75 = vsub.f32 %v56, %v74
    %v76 = vmul.f32 %v75, %v75
    %v77 = vsel %vm69, %v76, 0.0
    %78 = vadd.xlane.f32.xlu0 %v77
    %v79 = vpop.xlane.xlu0 %78
    %v80 = vmul.f32 %v79, %v73
    %v81 = vadd.f32 %v80, 1e-05
    %v82 = vrsqrt.pop %v81
    %v83 = vmul.f32 %v75, %v82
    %v85 = vlaneseq
    %v86 = vshrl.u32 %v85, 7
    %v87 = vsub.s32 0, %v86
    %v88 = vrot.slane %v67, %v87
    %v90 = vmul.f32 %v83, %v88
    %v92 = vlaneseq
    %v93 = vshrl.u32 %v92, 7
    %v94 = vsub.s32 0, %v93
    %v95 = vrot.slane %v68, %v94
    %v97 = vadd.f32 %v90, %v95
    %v98 = vld [vmem:[%s6] sm:$0xff]
    %v99 = vld [vmem:[%s6 + $0x8] sm:$0xff]
    %v100 = vld [vmem:[%s6 + $0x10] sm:$0xff]
    %v101 = vld [vmem:[%s6 + $0x18] sm:$0xff]
    %vm102 = vcmask 261120
    %v104 = vsel %vm102, %v97, 0
    %106 = vmatprep.subr.mxu0 0.0
    %107 = vmatpush1.msra.mxu0 %v98
    %108 = vmatprep.subr.mxu0 0.0
    %109 = vmatpush1.msra.mxu0 %v99
    %110 = vmatprep.subr.mxu0 0.0
    %111 = vmatpush1.msra.mxu0 %v100
    %112 = vmatprep.subr.mxu0 0.0
    %113 = vmatpush1.msra.mxu0 %v101
    %114 = vmatprep.subr.mxu0 0.0
    %115 = vmatpush1.msra.mxu0 0.0
    %116 = vmatprep.subr.mxu0 0.0
    %117 = vmatpush1.msra.mxu0 0.0
    %118 = vmatprep.subr.mxu0 0.0
    %119 = vmatpush1.msra.mxu0 0.0
    %120 = vmatprep.subr.mxu0 0.0
    %121 = vmatpush1.msra.mxu0 0.0
    %122 = vmatprep.subr.mxu0 0.0
    %123 = vmatpush1.msra.mxu0 0.0
    %124 = vmatprep.subr.mxu0 0.0
    %125 = vmatpush1.msra.mxu0 0.0
    %126 = vmatprep.subr.mxu0 0.0
    %127 = vmatpush1.msra.mxu0 0.0
    %128 = vmatprep.subr.mxu0 0.0
    %129 = vmatpush1.msra.mxu0 0.0
    %130 = vmatprep.subr.mxu0 0.0
    %131 = vmatpush1.msra.mxu0 0.0
    %132 = vmatprep.subr.mxu0 0.0
    %133 = vmatpush1.msra.mxu0 0.0
    %134 = vmatprep.subr.mxu0 0.0
    %135 = vmatpush1.msra.mxu0 0.0
    %136 = vmatprep.subr.mxu0 0.0
    %137 = vmatpush1.msra.mxu0 0.0
    %138 = vmatprep.subr.mxu0 0.0
    %139 = vmatpush1.msra.mxu0 0.0
    %140 = vmatprep.subr.mxu0 0.0
    %141 = vmatpush1.msra.mxu0 0.0
    %142 = vmatprep.subr.mxu0 0.0
    %143 = vmatpush1.msra.mxu0 0.0
    %144 = vmatprep.subr.mxu0 0.0
    %145 = vmatpush1.msra.mxu0 0.0
    %146 = vmatprep.subr.mxu0 0.0
    %147 = vmatpush1.msra.mxu0 0.0
    %148 = vmatprep.subr.mxu0 0.0
    %149 = vmatpush1.msra.mxu0 0.0
    %150 = vmatprep.subr.mxu0 0.0
    %151 = vmatpush1.msra.mxu0 0.0
    %152 = vmatprep.subr.mxu0 0.0
    %153 = vmatpush1.msra.mxu0 0.0
    %154 = vmatprep.subr.mxu0 0.0
    %155 = vmatpush1.msra.mxu0 0.0
    %156 = vmatprep.subr.mxu0 0.0
    %157 = vmatpush1.msra.mxu0 0.0
    %158 = vmatprep.subr.mxu0 0.0
    %159 = vmatpush1.msra.mxu0 0.0
    %160 = vmatprep.subr.mxu0 0.0
    %161 = vmatpush1.msra.mxu0 0.0
    %162 = vmatprep.subr.mxu0 0.0
    %163 = vmatpush1.msra.mxu0 0.0
    %164 = vmatprep.subr.mxu0 0.0
    %165 = vmatpush1.msra.mxu0 0.0
    %166 = vmatprep.subr.mxu0 0.0
    %167 = vmatpush1.msra.mxu0 0.0
    %168 = vmatprep.subr.mxu0 0.0
    %169 = vmatpush1.msra.mxu0 0.0
    %170 = vmatprep.mubr.f32.mxu0 0.0
    %171 = vmatmul.mubr.f32.gmra.mrb[0].mxu0 %v104
    %v172 = vpop.f32.mrb[0].mxu0
    %v173 = vadd.f32 0.0, %v172
    %v174 = vpop.f32.mrb[0].mxu0
    %175 = vdwg.mxu0
    %v176 = vld [vmem:[%s7] sm:$0x1]
    %v177 = vld [vmem:[%s8] sm:$0x1]
    %v178 = vsel %vm69, %v66, 0.0
    %179 = vadd.xlane.f32.xlu0 %v178
    %v180 = vpop.xlane.xlu0 %179
    %v181 = vmul.f32 %v180, %v73
    %v182 = vsub.f32 %v66, %v181
    %v183 = vmul.f32 %v182, %v182
    %v184 = vsel %vm69, %v183, 0.0
    %185 = vadd.xlane.f32.xlu0 %v184
    %v186 = vpop.xlane.xlu0 %185
    %v187 = vmul.f32 %v186, %v73
    %v188 = vadd.f32 %v187, 1e-05
    %v189 = vrsqrt.pop %v188
    %v190 = vmul.f32 %v182, %v189
    %v192 = vlaneseq
    %v193 = vshrl.u32 %v192, 7
    %v194 = vsub.s32 0, %v193
    %v195 = vrot.slane %v176, %v194
    %v197 = vmul.f32 %v190, %v195
    %v199 = vlaneseq
    %v200 = vshrl.u32 %v199, 7
    %v201 = vsub.s32 0, %v200
    %v202 = vrot.slane %v177, %v201
    %v204 = vadd.f32 %v197, %v202
    %v205 = vld [vmem:[%s9] sm:$0xff]
    %v206 = vld [vmem:[%s9 + $0x8] sm:$0xff]
    %v207 = vld [vmem:[%s9 + $0x10] sm:$0xff]
    %v208 = vld [vmem:[%s9 + $0x18] sm:$0xff]
    %v210 = vsel %vm102, %v204, 0
    %212 = vmatprep.subr.mxu0 0.0
    %213 = vmatpush1.msra.mxu0 %v205
    %214 = vmatprep.subr.mxu0 0.0
    %215 = vmatpush1.msra.mxu0 %v206
    %216 = vmatprep.subr.mxu0 0.0
    %217 = vmatpush1.msra.mxu0 %v207
    %218 = vmatprep.subr.mxu0 0.0
    %219 = vmatpush1.msra.mxu0 %v208
    %220 = vmatprep.subr.mxu0 0.0
    %221 = vmatpush1.msra.mxu0 0.0
    %222 = vmatprep.subr.mxu0 0.0
    %223 = vmatpush1.msra.mxu0 0.0
    %224 = vmatprep.subr.mxu0 0.0
    %225 = vmatpush1.msra.mxu0 0.0
    %226 = vmatprep.subr.mxu0 0.0
    %227 = vmatpush1.msra.mxu0 0.0
    %228 = vmatprep.subr.mxu0 0.0
    %229 = vmatpush1.msra.mxu0 0.0
    %230 = vmatprep.subr.mxu0 0.0
    %231 = vmatpush1.msra.mxu0 0.0
    %232 = vmatprep.subr.mxu0 0.0
    %233 = vmatpush1.msra.mxu0 0.0
    %234 = vmatprep.subr.mxu0 0.0
    %235 = vmatpush1.msra.mxu0 0.0
    %236 = vmatprep.subr.mxu0 0.0
    %237 = vmatpush1.msra.mxu0 0.0
    %238 = vmatprep.subr.mxu0 0.0
    %239 = vmatpush1.msra.mxu0 0.0
    %240 = vmatprep.subr.mxu0 0.0
    %241 = vmatpush1.msra.mxu0 0.0
    %242 = vmatprep.subr.mxu0 0.0
    %243 = vmatpush1.msra.mxu0 0.0
    %244 = vmatprep.subr.mxu0 0.0
    %245 = vmatpush1.msra.mxu0 0.0
    %246 = vmatprep.subr.mxu0 0.0
    %247 = vmatpush1.msra.mxu0 0.0
    %248 = vmatprep.subr.mxu0 0.0
    %249 = vmatpush1.msra.mxu0 0.0
    %250 = vmatprep.subr.mxu0 0.0
    %251 = vmatpush1.msra.mxu0 0.0
    %252 = vmatprep.subr.mxu0 0.0
    %253 = vmatpush1.msra.mxu0 0.0
    %254 = vmatprep.subr.mxu0 0.0
    %255 = vmatpush1.msra.mxu0 0.0
    %256 = vmatprep.subr.mxu0 0.0
    %257 = vmatpush1.msra.mxu0 0.0
    %258 = vmatprep.subr.mxu0 0.0
    %259 = vmatpush1.msra.mxu0 0.0
    %260 = vmatprep.subr.mxu0 0.0
    %261 = vmatpush1.msra.mxu0 0.0
    %262 = vmatprep.subr.mxu0 0.0
    %263 = vmatpush1.msra.mxu0 0.0
    %264 = vmatprep.subr.mxu0 0.0
    %265 = vmatpush1.msra.mxu0 0.0
    %266 = vmatprep.subr.mxu0 0.0
    %267 = vmatpush1.msra.mxu0 0.0
    %268 = vmatprep.subr.mxu0 0.0
    %269 = vmatpush1.msra.mxu0 0.0
    %270 = vmatprep.subr.mxu0 0.0
    %271 = vmatpush1.msra.mxu0 0.0
    %272 = vmatprep.subr.mxu0 0.0
    %273 = vmatpush1.msra.mxu0 0.0
    %274 = vmatprep.subr.mxu0 0.0
    %275 = vmatpush1.msra.mxu0 0.0
    %276 = vmatprep.mubr.f32.mxu0 0.0
    %277 = vmatmul.mubr.f32.gmra.mrb[0].mxu0 %v210
    %v278 = vpop.f32.mrb[0].mxu0
    %v279 = vadd.f32 0.0, %v278
    %v280 = vpop.f32.mrb[0].mxu0
    %281 = vdwg.mxu0
    %v282 = vmul.f32 %v173, %v173
    %vm283 = vcmask 123904
    %v284 = vsel %vm283, %v282, 0.0
    %285 = vadd.xlane.f32.xlu0 %v284
    %v286 = vpop.xlane.xlu0 %285
    %v287 = vadd.f32 %v286, 1e-24
    %v288 = vrsqrt.pop %v287
    %v289 = vmul.f32 %v173, %v288
    %v290 = vmul.f32 %v279, %v279
    %v291 = vsel %vm283, %v290, 0.0
    %292 = vadd.xlane.f32.xlu0 %v291
    %v293 = vpop.xlane.xlu0 %292
    %v294 = vadd.f32 %v293, 1e-24
    %v295 = vrsqrt.pop %v294
    %v296 = vmul.f32 %v279, %v295
    %vm297 = vcmask 130048
    %v299 = vsel %vm297, %v289, 0
    %v302 = vsel %vm297, %v296, 0
    %304 = vmatprep.subr.mxu0 0.0
    %305 = vmatpush1.xpose.msra.mxu0 %v302
    %306 = vmatprep.subr.mxu0 0.0
    %307 = vmatpush1.xpose.msra.mxu0 0.0
    %308 = vmatprep.subr.mxu0 0.0
    %309 = vmatpush1.xpose.msra.mxu0 0.0
    %310 = vmatprep.subr.mxu0 0.0
    %311 = vmatpush1.xpose.msra.mxu0 0.0
    %312 = vmatprep.subr.mxu0 0.0
    %313 = vmatpush1.xpose.msra.mxu0 0.0
    %314 = vmatprep.subr.mxu0 0.0
    %315 = vmatpush1.xpose.msra.mxu0 0.0
    %316 = vmatprep.subr.mxu0 0.0
    %317 = vmatpush1.xpose.msra.mxu0 0.0
    %318 = vmatprep.subr.mxu0 0.0
    %319 = vmatpush1.xpose.msra.mxu0 0.0
    %320 = vmatprep.subr.mxu0 0.0
    %321 = vmatpush1.xpose.msra.mxu0 0.0
    %322 = vmatprep.subr.mxu0 0.0
    %323 = vmatpush1.xpose.msra.mxu0 0.0
    %324 = vmatprep.subr.mxu0 0.0
    %325 = vmatpush1.xpose.msra.mxu0 0.0
    %326 = vmatprep.subr.mxu0 0.0
    %327 = vmatpush1.xpose.msra.mxu0 0.0
    %328 = vmatprep.subr.mxu0 0.0
    %329 = vmatpush1.xpose.msra.mxu0 0.0
    %330 = vmatprep.subr.mxu0 0.0
    %331 = vmatpush1.xpose.msra.mxu0 0.0
    %332 = vmatprep.subr.mxu0 0.0
    %333 = vmatpush1.xpose.msra.mxu0 0.0
    %334 = vmatprep.subr.mxu0 0.0
    %335 = vmatpush1.xpose.msra.mxu0 0.0
    %336 = vmatprep.subr.mxu0 0.0
    %337 = vmatpush1.xpose.msra.mxu0 0.0
    %338 = vmatprep.subr.mxu0 0.0
    %339 = vmatpush1.xpose.msra.mxu0 0.0
    %340 = vmatprep.subr.mxu0 0.0
    %341 = vmatpush1.xpose.msra.mxu0 0.0
    %342 = vmatprep.subr.mxu0 0.0
    %343 = vmatpush1.xpose.msra.mxu0 0.0
    %344 = vmatprep.subr.mxu0 0.0
    %345 = vmatpush1.xpose.msra.mxu0 0.0
    %346 = vmatprep.subr.mxu0 0.0
    %347 = vmatpush1.xpose.msra.mxu0 0.0
    %348 = vmatprep.subr.mxu0 0.0
    %349 = vmatpush1.xpose.msra.mxu0 0.0
    %350 = vmatprep.subr.mxu0 0.0
    %351 = vmatpush1.xpose.msra.mxu0 0.0
    %352 = vmatprep.subr.mxu0 0.0
    %353 = vmatpush1.xpose.msra.mxu0 0.0
    %354 = vmatprep.subr.mxu0 0.0
    %355 = vmatpush1.xpose.msra.mxu0 0.0
    %356 = vmatprep.subr.mxu0 0.0
    %357 = vmatpush1.xpose.msra.mxu0 0.0
    %358 = vmatprep.subr.mxu0 0.0
    %359 = vmatpush1.xpose.msra.mxu0 0.0
    %360 = vmatprep.subr.mxu0 0.0
    %361 = vmatpush1.xpose.msra.mxu0 0.0
    %362 = vmatprep.subr.mxu0 0.0
    %363 = vmatpush1.xpose.msra.mxu0 0.0
    %364 = vmatprep.subr.mxu0 0.0
    %365 = vmatpush1.xpose.msra.mxu0 0.0
    %366 = vmatprep.subr.mxu0 0.0
    %367 = vmatpush1.xpose.msra.mxu0 0.0
    %368 = vmatprep.mubr.f32.mxu0 0.0
    %369 = vmatmul.mubr.f32.gmra.mrb[0].mxu0 %v299
    %v370 = vpop.f32.mrb[0].mxu0
    %v371 = vadd.f32 0.0, %v370
    %v372 = vpop.f32.mrb[0].mxu0
    %373 = vdwg.mxu0
    %s374 = sld [smem:[#allocation2]]
    %v375 = vstv %s374
    %v376 = vmul.f32 %v375, 1.442695
    %v377 = vpow.pop %v376
    %v378 = vmul.f32 %v371, %v377
    %v379 = vlaneseq
    %v380 = vshrl.u32 %v379, 7
    %v381 = vlaneseq
    %v382 = vand.u32 %v381, 127
    %vm383 = vcmp.eq.s32.totalorder %v380, %v382
    %v384 = vsel %vm383, %v378, 0.0
    %vm385 = vcmask 9216
    %v386 = vsel %vm385, %v384, 0.0
    %387 = vadd.xlane.f32.xlu0 %v386
    %v388 = vpop.xlane.xlu0 %387
    %v389 = vrot.slane %v386, 4
    %v390 = vadd.f32 %v386, %v389
    %v391 = vrot.slane %v390, 2
    %v392 = vadd.f32 %v390, %v391
    %v393 = vrot.slane %v392, 1
    %v394 = vadd.f32 %v392, %v393
    %v395 = vsel %vm385, %v378, -inf
    %396 = vmax.xlane.f32.xlu0 %v395
    %v397 = vpop.xlane.xlu0 %396
    %v398 = vsub.f32 %v378, %v397
    %v399 = vmul.f32 %v398, 1.442695
    %v400 = vpow.pop %v399
    %v401 = vsel %vm385, %v400, 0.0
    %402 = vadd.xlane.f32.xlu0 %v401
    %v403 = vpop.xlane.xlu0 %402
    %v404 = vlog2.pop %v403
    %v405 = vmul.f32 %v404, 0.6931472
    %v406 = vadd.f32 %v397, %v405
    %v407 = vrot.slane %v395, 4
    %v408 = vmax.f32 %v395, %v407
    %v409 = vrot.slane %v408, 2
    %v410 = vmax.f32 %v408, %v409
    %v411 = vrot.slane %v410, 1
    %v412 = vmax.f32 %v410, %v411
    %v413 = vsub.f32 %v378, %v412
    %v414 = vmul.f32 %v413, 1.442695
    %v415 = vpow.pop %v414
    %v416 = vsel %vm385, %v415, 0.0
    %v417 = vrot.slane %v416, 4
    %v418 = vadd.f32 %v416, %v417
    %v419 = vrot.slane %v418, 2
    %v420 = vadd.f32 %v418, %v419
    %v421 = vrot.slane %v420, 1
    %v422 = vadd.f32 %v420, %v421
    %v423 = vlog2.pop %v422
    %v424 = vmul.f32 %v423, 0.6931472
    %v425 = vadd.f32 %v412, %v424
    %v426 = vsub.f32 %v406, %v388
    %vm427 = vcmask 1041408
    %v428 = vsel %vm427, %v426, 0.0
    %v429 = vrot.slane %v428, 4
    %v430 = vadd.f32 %v428, %v429
    %v431 = vrot.slane %v430, 2
    %v432 = vadd.f32 %v430, %v431
    %v433 = vrot.slane %v432, 1
    %v434 = vadd.f32 %v432, %v433
    %v435 = vrcp.pop 2.0
    %v436 = vmul.f32 %v434, %v435
    %v437 = vsub.f32 %v425, %v394
    %vm438 = vcmask 15360
    %v439 = vsel %vm438, %v437, 0.0
    %440 = vadd.xlane.f32.xlu0 %v439
    %v441 = vpop.xlane.xlu0 %440
    %v442 = vmul.f32 %v441, %v435
    %v443 = vadd.f32 %v442, %v436
    %v444 = vmul.f32 %v443, 0.5
    %vm445 = vcmask 0
    %446 = vst.msk [vmem:[#allocation6] sm:$0x1] %vm445, %v444
    // Predicated region
    $region46: #{clip_forward.7} parent=1 // pred_check
      _
    $region47: #{clip_forward.7} parent=1 // pred_check_branch
      %448 = sbr.rel (0) target = $region49
    $region48: #{clip_forward.7} parent=1 // pred_region
      %s450 = ssub.s32 16, 16
      %451 = vsyncadd [#allocation4], %s450
      %s453 = sshll.u32 [#allocation6], 4
      %s454 = int_to_ptr.vmem [resolvable:$true] %s453
      %456 = dma.vmem_to_hbm [thread:$0]  %s454, 16, %s10, [#allocation4]
    $region49: #{clip_forward.7} parent=1 // pred_fallthru
      _
    // Predicated region
    $region50: #{clip_forward.7} parent=1 // pred_check
      _
    $region51: #{clip_forward.7} parent=1 // pred_check_branch
      %458 = sbr.rel (0) target = $region53
    $region52: #{clip_forward.7} parent=1 // pred_region
      %459 = dma.done [#allocation4], 16
    $region53: #{clip_forward.7} parent=1 // pred_fallthru
      _
    %460 = vsyncpa [#allocation4], 1
    %461 = vsyncpa [#allocation5], 1

</llo_original>
